<compile_context>
chip_gen: v7x
topology: tpu7x:2x2x1
jax: 0.10.0
libtpu: 0.0.40
codegen_flags: <defaults>
</compile_context>

<pallas_src>
import functools

import jax
import jax.numpy as jnp
from jax.experimental import pallas as pl
from jax.experimental.pallas import tpu as pltpu


def _round_up(x, m):
    return (x + m - 1) // m * m


# ---------------------------------------------------------------------------
# Pallas kernel 1: tiled matmul + (folded-BN) bias + ReLU epilogue
# ---------------------------------------------------------------------------
def _matmul_bias_act_kernel(x_ref, w_ref, b_ref, o_ref, *, relu):
    # y = act( x @ w + bias ) ; bias broadcast over rows, f32 accumulation.
    y = jnp.dot(x_ref[...], w_ref[...], preferred_element_type=jnp.float32)
    y = y + b_ref[...]
    if relu:
        y = jnp.maximum(y, 0.0)
    o_ref[...] = y


def fused_matmul_bias_act(x, w, bias, *, relu, tm=512):
    """act((x @ w) + bias).  x:(M,K) (bf16), w:(K,N) (bf16), bias:(N,) (f32)."""
    M, K = x.shape
    Kw, N = w.shape
    assert K == Kw

    # Tile M (K and N stay whole).  Small M -> single full block.
    if M <= tm:
        tm_eff, Mp = M, M
    else:
        tm_eff = tm
        Mp = _round_up(M, tm_eff)
        x = jnp.pad(x, ((0, Mp - M), (0, 0)))

    bias2 = bias.reshape(1, N).astype(jnp.float32)
    kernel = functools.partial(_matmul_bias_act_kernel, relu=relu)
    cost = pl.CostEstimate(
        flops=2 * Mp * K * N,
        transcendentals=0,
        bytes_accessed=(Mp * K * x.dtype.itemsize + K * N * w.dtype.itemsize
                        + Mp * N * 4 + N * 4),
    )
    out = pl.pallas_call(
        kernel,
        out_shape=jax.ShapeDtypeStruct((Mp, N), jnp.float32),
        grid=(Mp // tm_eff,),
        in_specs=[
            pl.BlockSpec((tm_eff, K), lambda i: (i, 0)),
            pl.BlockSpec((K, N), lambda i: (0, 0)),
            pl.BlockSpec((1, N), lambda i: (0, 0)),
        ],
        out_specs=pl.BlockSpec((tm_eff, N), lambda i: (i, 0)),
        compiler_params=pltpu.CompilerParams(
            dimension_semantics=("parallel",),
            vmem_limit_bytes=32 * 1024 * 1024,
        ),
        cost_estimate=cost,
    )(x, w, bias2)
    return out[:M] if Mp != M else out


# ---------------------------------------------------------------------------
# Pallas kernel 2: fused classifier  (fc1+ReLU, fc2+ReLU, fc3, log_softmax)
# ---------------------------------------------------------------------------
def _classifier_kernel(x_ref, w1_ref, b1_ref, w2_ref, b2_ref, w3_ref, b3_ref,
                       o_ref):
    h = jnp.dot(x_ref[...], w1_ref[...], preferred_element_type=jnp.float32)
    h = jnp.maximum(h + b1_ref[...], 0.0)
    h = jnp.dot(h, w2_ref[...], preferred_element_type=jnp.float32)
    h = jnp.maximum(h + b2_ref[...], 0.0)
    logits = jnp.dot(h, w3_ref[...], preferred_element_type=jnp.float32)
    logits = logits + b3_ref[...]
    # log-softmax (f32, EUP for exp/log)
    m = jnp.max(logits, axis=-1, keepdims=True)
    s = logits - m
    lse = jnp.log(jnp.sum(jnp.exp(s), axis=-1, keepdims=True))
    o_ref[...] = s - lse


def classifier_logsoftmax(x, w1, b1, w2, b2, w3, b3, *, tm=512):
    M, K1 = x.shape
    N1, N2, N3 = w1.shape[1], w2.shape[1], w3.shape[1]
    if M <= tm:
        tm_eff, Mp = M, M
    else:
        tm_eff = tm
        Mp = _round_up(M, tm_eff)
        x = jnp.pad(x, ((0, Mp - M), (0, 0)))

    rep = lambda i: (0, 0)
    cost = pl.CostEstimate(
        flops=2 * Mp * (K1 * N1 + N1 * N2 + N2 * N3),
        transcendentals=Mp * (N3 + 1),
        bytes_accessed=(Mp * K1 * 4 + (K1 * N1 + N1 * N2 + N2 * N3) * 4
                        + (N1 + N2 + N3) * 4 + Mp * N3 * 4),
    )
    out = pl.pallas_call(
        _classifier_kernel,
        out_shape=jax.ShapeDtypeStruct((Mp, N3), jnp.float32),
        grid=(Mp // tm_eff,),
        in_specs=[
            pl.BlockSpec((tm_eff, K1), lambda i: (i, 0)),
            pl.BlockSpec((K1, N1), rep), pl.BlockSpec((1, N1), rep),
            pl.BlockSpec((N1, N2), rep), pl.BlockSpec((1, N2), rep),
            pl.BlockSpec((N2, N3), rep), pl.BlockSpec((1, N3), rep),
        ],
        out_specs=pl.BlockSpec((tm_eff, N3), lambda i: (i, 0)),
        compiler_params=pltpu.CompilerParams(
            dimension_semantics=("parallel",),
            vmem_limit_bytes=32 * 1024 * 1024,
        ),
        cost_estimate=cost,
    )(x, w1, b1.reshape(1, N1), w2, b2.reshape(1, N2), w3, b3.reshape(1, N3))
    return out[:M] if Mp != M else out


# ---------------------------------------------------------------------------
# Plain-JAX glue: NHWC im2col for strided conv
# ---------------------------------------------------------------------------
def im2col_nhwc(x, kh, kw, stride, pad):
    """x: (N, H, W, C) -> patches (N*oh*ow, kh*kw*C), flat col = (i*kw+j)*C + c."""
    N, H, W, C = x.shape
    xp = jnp.pad(x, ((0, 0), (pad, pad), (pad, pad), (0, 0)))
    Hp, Wp = H + 2 * pad, W + 2 * pad
    oh = (Hp - kh) // stride + 1
    ow = (Wp - kw) // stride + 1
    cols = []
    for i in range(kh):
        for j in range(kw):
            cols.append(xp[:, i:i + stride * oh:stride,
                           j:j + stride * ow:stride, :])       # (N, oh, ow, C)
    p = jnp.stack(cols, axis=3)                                  # (N, oh, ow, kh*kw, C)
    return p.reshape(N * oh * ow, kh * kw * C), oh, ow


# ---------------------------------------------------------------------------
# Parameters (deterministic synthetic init; shapes match the PyTorch module)
# ---------------------------------------------------------------------------
def init_params(key):
    ks = jax.random.split(key, 16)

    def nrm(k, shape, std=0.05):
        return (std * jax.random.normal(k, shape)).astype(jnp.float32)

    p = {}
    # block_1: Conv2d(1->32, 12x12, stride 4, pad 4) + BatchNorm2d(32)
    p["w1"] = nrm(ks[0], (32, 1, 12, 12))
    p["b1"] = nrm(ks[1], (32,))
    p["g1"] = 1.0 + nrm(ks[2], (32,))
    p["be1"] = nrm(ks[3], (32,))
    p["rm1"] = jnp.zeros((32,), jnp.float32)
    p["rv1"] = jnp.ones((32,), jnp.float32)
    # block_2: Conv2d(32->64, 12x12, stride 4, pad 4) + BatchNorm2d(64)
    p["w2"] = nrm(ks[4], (64, 32, 12, 12))
    p["b2"] = nrm(ks[5], (64,))
    p["g2"] = 1.0 + nrm(ks[6], (64,))
    p["be2"] = nrm(ks[7], (64,))
    p["rm2"] = jnp.zeros((64,), jnp.float32)
    p["rv2"] = jnp.ones((64,), jnp.float32)
    # classifier: 576 -> 128 -> 64 -> 10  (weights stored (in, out))
    p["fc1_w"] = nrm(ks[8], (576, 128))
    p["fc1_b"] = nrm(ks[9], (128,))
    p["fc2_w"] = nrm(ks[10], (128, 64))
    p["fc2_b"] = nrm(ks[11], (64,))
    p["fc3_w"] = nrm(ks[12], (64, 10))
    p["fc3_b"] = nrm(ks[13], (10,))
    return p


# ---------------------------------------------------------------------------
# Forward pass (eval mode: dropout = identity, DNI synthetic-grad path skipped)
# ---------------------------------------------------------------------------
def forward(x, p):
    eps = 1e-5
    N = x.shape[0]
    x = jnp.transpose(x, (0, 2, 3, 1))            # NCHW -> NHWC (channel-last)

    # ---- block_1: conv(1->32, 12x12, s4, p4) + BN + ReLU ----
    s1 = p["g1"] / jnp.sqrt(p["rv1"] + eps)
    w1 = jnp.transpose(p["w1"], (2, 3, 1, 0)).reshape(1 * 144, 32) * s1[None, :]
    bias1 = (p["b1"] - p["rm1"]) * s1 + p["be1"]
    patches1, oh1, ow1 = im2col_nhwc(x, 12, 12, 4, 4)
    y1 = fused_matmul_bias_act(patches1.astype(jnp.bfloat16),
                               w1.astype(jnp.bfloat16), bias1, relu=True)
    y1 = y1.reshape(N, oh1, ow1, 32)              # already NHWC, no transpose

    # TODO(synk): dni.BackwardInterface only injects synthetic gradients during
    # training; the inference forward pass is identity, so it is skipped here.

    # ---- block_2: conv(32->64, 12x12, s4, p4) + BN + ReLU ----
    s2 = p["g2"] / jnp.sqrt(p["rv2"] + eps)
    w2 = jnp.transpose(p["w2"], (2, 3, 1, 0)).reshape(32 * 144, 64) * s2[None, :]
    bias2 = (p["b2"] - p["rm2"]) * s2 + p["be2"]
    # TODO(synk): im2col duplicates y1 ~9x in HBM; an in-kernel patch-forming
    # direct-conv kernel would remove that traffic at large batch sizes.
    patches2, oh2, ow2 = im2col_nhwc(y1, 12, 12, 4, 4)
    y2 = fused_matmul_bias_act(patches2.astype(jnp.bfloat16),
                               w2.astype(jnp.bfloat16), bias2, relu=True)
    # PyTorch x.view(N, -1) flattens NCHW channel-major:
    y2 = y2.reshape(N, oh2, ow2, 64).transpose(0, 3, 1, 2).reshape(N, -1)  # (N,576)

    # ---- classifier: fc1+ReLU, fc2+ReLU, fc3, log_softmax in ONE kernel ----
    return classifier_logsoftmax(y2, p["fc1_w"], p["fc1_b"],
                                 p["fc2_w"], p["fc2_b"],
                                 p["fc3_w"], p["fc3_b"])


# ---------------------------------------------------------------------------
# Pure-JAX reference (sanity check of the Pallas path)
# ---------------------------------------------------------------------------
def reference_forward(x, p):
    eps = 1e-5

    def conv_bn_relu(x, w, b, g, be, rm, rv):
        y = jax.lax.conv_general_dilated(
            x, w, (4, 4), [(4, 4), (4, 4)],
            dimension_numbers=("NCHW", "OIHW", "NCHW"))
        y = y + b[None, :, None, None]
        s = g / jnp.sqrt(rv + eps)
        y = (y - rm[None, :, None, None]) * s[None, :, None, None] + be[None, :, None, None]
        return jnp.maximum(y, 0.0)

    y = conv_bn_relu(x, p["w1"], p["b1"], p["g1"], p["be1"], p["rm1"], p["rv1"])
    y = conv_bn_relu(y, p["w2"], p["b2"], p["g2"], p["be2"], p["rm2"], p["rv2"])
    y = y.reshape(y.shape[0], -1)
    y = jnp.maximum(y @ p["fc1_w"] + p["fc1_b"], 0.0)
    y = jnp.maximum(y @ p["fc2_w"] + p["fc2_b"], 0.0)
    y = y @ p["fc3_w"] + p["fc3_b"]
    return jax.nn.log_softmax(y, axis=1)


if __name__ == "__main__":
    key = jax.random.PRNGKey(0)
    k_params, k_x = jax.random.split(key)
    params = init_params(k_params)

    # Input spatial size must be 48x48 so the classifier sees 64*3*3 = 576 features.
    x = jax.random.normal(k_x, (2, 1, 48, 48), dtype=jnp.float32)

    out = jax.block_until_ready(jax.jit(forward)(x, params))
    assert out.shape == (2, 10)

    ref = jax.block_until_ready(reference_forward(x, params))
    # bf16 matmul operands (f32 accumulation) vs the XLA f32 reference: loose tol.
    assert jnp.allclose(out, ref, atol=1e-1, rtol=1e-1), (
        f"max abs diff {jnp.max(jnp.abs(out - ref))}")

    print("KERNEL_OK")
</pallas_src>

<mosaic_0001>
module attributes {stable_mosaic.version = 11 : i64} {
  func.func @_matmul_bias_act_kernel(%arg0: i32, %arg1: memref<288x144xbf16, #tpu.memory_space<vmem>>, %arg2: memref<144x32xbf16, #tpu.memory_space<vmem>>, %arg3: memref<1x32xf32, #tpu.memory_space<vmem>>, %arg4: memref<288x32xf32, #tpu.memory_space<vmem>>) attributes {dimension_semantics = [#tpu.dimension_semantics<parallel>], iteration_bounds = array<i64: 1>, scalar_prefetch = 0 : i64, scratch_operands = 0 : i64, tpu.core_type = #tpu.core_type<tc>, window_params = [{transform_indices = @transform_0, window_bounds = array<i64: 288, 144>}, {pipeline_mode = #tpu.pipeline_mode<synchronous>, transform_indices = @transform_1, window_bounds = array<i64: 144, 32>}, {pipeline_mode = #tpu.pipeline_mode<synchronous>, transform_indices = @transform_2, window_bounds = array<i64: 1, 32>}, {transform_indices = @transform_3, window_bounds = array<i64: 288, 32>}]} {
    %c0 = arith.constant 0 : index
    %c0_0 = arith.constant 0 : index
    %0 = vector.load %arg1[%c0, %c0_0] : memref<288x144xbf16, #tpu.memory_space<vmem>>, vector<288x144xbf16>
    %c0_1 = arith.constant 0 : index
    %c0_2 = arith.constant 0 : index
    %1 = vector.load %arg2[%c0_1, %c0_2] : memref<144x32xbf16, #tpu.memory_space<vmem>>, vector<144x32xbf16>
    %cst = arith.constant dense<0.000000e+00> : vector<288x32xf32>
    %2 = tpu.matmul %0, %1, %cst {dimension_numbers = #tpu.dot_dimension_numbers<[1], [0], [0], [1], [0, 0, 1, 1], [], []>} : vector<288x144xbf16>, vector<144x32xbf16>, vector<288x32xf32> -> vector<288x32xf32>
    %c0_3 = arith.constant 0 : index
    %c0_4 = arith.constant 0 : index
    %3 = vector.load %arg3[%c0_3, %c0_4] : memref<1x32xf32, #tpu.memory_space<vmem>>, vector<1x32xf32>
    %4 = vector.broadcast %3 : vector<1x32xf32> to vector<288x32xf32>
    %5 = arith.addf %2, %4 : vector<288x32xf32>
    %cst_5 = arith.constant 0.000000e+00 : f32
    %6 = vector.broadcast %cst_5 : f32 to vector<288x32xf32>
    %7 = arith.maximumf %5, %6 : vector<288x32xf32>
    %c0_6 = arith.constant 0 : index
    %c0_7 = arith.constant 0 : index
    %8 = vector.load %arg4[%c0_6, %c0_7] : memref<288x32xf32, #tpu.memory_space<vmem>>, vector<288x32xf32>
    tpu.vector_store %arg4[%c0_6, %c0_7], %7 {strides = array<i32>} : memref<288x32xf32, #tpu.memory_space<vmem>>, vector<288x32xf32>,
    return
  }
  func.func @transform_0(%arg0: i32) -> (i32, i32) {
    %c0_i32 = arith.constant 0 : i32
    %c0_i32_0 = arith.constant 0 : i32
    return %arg0, %c0_i32 : i32, i32
  }
  func.func @transform_1(%arg0: i32) -> (i32, i32) {
    %c0_i32 = arith.constant 0 : i32
    %c0_i32_0 = arith.constant 0 : i32
    %c0_i32_1 = arith.constant 0 : i32
    return %c0_i32, %c0_i32_0 : i32, i32
  }
  func.func @transform_2(%arg0: i32) -> (i32, i32) {
    %c0_i32 = arith.constant 0 : i32
    %c0_i32_0 = arith.constant 0 : i32
    %c0_i32_1 = arith.constant 0 : i32
    return %c0_i32, %c0_i32_0 : i32, i32
  }
  func.func @transform_3(%arg0: i32) -> (i32, i32) {
    %c0_i32 = arith.constant 0 : i32
    %c0_i32_0 = arith.constant 0 : i32
    return %arg0, %c0_i32 : i32, i32
  }
}

module attributes {stable_mosaic.version = 11 : i64} {
  func.func @_matmul_bias_act_kernel(%arg0: i32, %arg1: memref<18x4608xbf16, #tpu.memory_space<vmem>>, %arg2: memref<4608x64xbf16, #tpu.memory_space<vmem>>, %arg3: memref<1x64xf32, #tpu.memory_space<vmem>>, %arg4: memref<18x64xf32, #tpu.memory_space<vmem>>) attributes {dimension_semantics = [#tpu.dimension_semantics<parallel>], iteration_bounds = array<i64: 1>, scalar_prefetch = 0 : i64, scratch_operands = 0 : i64, tpu.core_type = #tpu.core_type<tc>, window_params = [{transform_indices = @transform_0, window_bounds = array<i64: 18, 4608>}, {pipeline_mode = #tpu.pipeline_mode<synchronous>, transform_indices = @transform_1, window_bounds = array<i64: 4608, 64>}, {pipeline_mode = #tpu.pipeline_mode<synchronous>, transform_indices = @transform_2, window_bounds = array<i64: 1, 64>}, {transform_indices = @transform_3, window_bounds = array<i64: 18, 64>}]} {
    %c0 = arith.constant 0 : index
    %c0_0 = arith.constant 0 : index
    %0 = vector.load %arg1[%c0, %c0_0] : memref<18x4608xbf16, #tpu.memory_space<vmem>>, vector<18x4608xbf16>
    %c0_1 = arith.constant 0 : index
    %c0_2 = arith.constant 0 : index
    %1 = vector.load %arg2[%c0_1, %c0_2] : memref<4608x64xbf16, #tpu.memory_space<vmem>>, vector<4608x64xbf16>
    %cst = arith.constant dense<0.000000e+00> : vector<18x64xf32>
    %2 = tpu.matmul %0, %1, %cst {dimension_numbers = #tpu.dot_dimension_numbers<[1], [0], [0], [1], [0, 0, 1, 1], [], []>} : vector<18x4608xbf16>, vector<4608x64xbf16>, vector<18x64xf32> -> vector<18x64xf32>
    %c0_3 = arith.constant 0 : index
    %c0_4 = arith.constant 0 : index
    %3 = vector.load %arg3[%c0_3, %c0_4] : memref<1x64xf32, #tpu.memory_space<vmem>>, vector<1x64xf32>
    %4 = vector.broadcast %3 : vector<1x64xf32> to vector<18x64xf32>
    %5 = arith.addf %2, %4 : vector<18x64xf32>
    %cst_5 = arith.constant 0.000000e+00 : f32
    %6 = vector.broadcast %cst_5 : f32 to vector<18x64xf32>
    %7 = arith.maximumf %5, %6 : vector<18x64xf32>
    %c0_6 = arith.constant 0 : index
    %c0_7 = arith.constant 0 : index
    %8 = vector.load %arg4[%c0_6, %c0_7] : memref<18x64xf32, #tpu.memory_space<vmem>>, vector<18x64xf32>
    tpu.vector_store %arg4[%c0_6, %c0_7], %7 {strides = array<i32>} : memref<18x64xf32, #tpu.memory_space<vmem>>, vector<18x64xf32>,
    return
  }
  func.func @transform_0(%arg0: i32) -> (i32, i32) {
    %c0_i32 = arith.constant 0 : i32
    %c0_i32_0 = arith.constant 0 : i32
    return %arg0, %c0_i32 : i32, i32
  }
  func.func @transform_1(%arg0: i32) -> (i32, i32) {
    %c0_i32 = arith.constant 0 : i32
    %c0_i32_0 = arith.constant 0 : i32
    %c0_i32_1 = arith.constant 0 : i32
    return %c0_i32, %c0_i32_0 : i32, i32
  }
  func.func @transform_2(%arg0: i32) -> (i32, i32) {
    %c0_i32 = arith.constant 0 : i32
    %c0_i32_0 = arith.constant 0 : i32
    %c0_i32_1 = arith.constant 0 : i32
    return %c0_i32, %c0_i32_0 : i32, i32
  }
  func.func @transform_3(%arg0: i32) -> (i32, i32) {
    %c0_i32 = arith.constant 0 : i32
    %c0_i32_0 = arith.constant 0 : i32
    return %arg0, %c0_i32 : i32, i32
  }
}

module attributes {stable_mosaic.version = 11 : i64} {
  func.func @_classifier_kernel(%arg0: i32, %arg1: memref<2x576xf32, #tpu.memory_space<vmem>>, %arg2: memref<576x128xf32, #tpu.memory_space<vmem>>, %arg3: memref<1x128xf32, #tpu.memory_space<vmem>>, %arg4: memref<128x64xf32, #tpu.memory_space<vmem>>, %arg5: memref<1x64xf32, #tpu.memory_space<vmem>>, %arg6: memref<64x10xf32, #tpu.memory_space<vmem>>, %arg7: memref<1x10xf32, #tpu.memory_space<vmem>>, %arg8: memref<2x10xf32, #tpu.memory_space<vmem>>) attributes {dimension_semantics = [#tpu.dimension_semantics<parallel>], iteration_bounds = array<i64: 1>, scalar_prefetch = 0 : i64, scratch_operands = 0 : i64, tpu.core_type = #tpu.core_type<tc>, window_params = [{transform_indices = @transform_0, window_bounds = array<i64: 2, 576>}, {pipeline_mode = #tpu.pipeline_mode<synchronous>, transform_indices = @transform_1, window_bounds = array<i64: 576, 128>}, {pipeline_mode = #tpu.pipeline_mode<synchronous>, transform_indices = @transform_2, window_bounds = array<i64: 1, 128>}, {pipeline_mode = #tpu.pipeline_mode<synchronous>, transform_indices = @transform_3, window_bounds = array<i64: 128, 64>}, {pipeline_mode = #tpu.pipeline_mode<synchronous>, transform_indices = @transform_4, window_bounds = array<i64: 1, 64>}, {pipeline_mode = #tpu.pipeline_mode<synchronous>, transform_indices = @transform_5, window_bounds = array<i64: 64, 10>}, {pipeline_mode = #tpu.pipeline_mode<synchronous>, transform_indices = @transform_6, window_bounds = array<i64: 1, 10>}, {transform_indices = @transform_7, window_bounds = array<i64: 2, 10>}]} {
    %c0 = arith.constant 0 : index
    %c0_0 = arith.constant 0 : index
    %0 = vector.load %arg1[%c0, %c0_0] : memref<2x576xf32, #tpu.memory_space<vmem>>, vector<2x576xf32>
    %c0_1 = arith.constant 0 : index
    %c0_2 = arith.constant 0 : index
    %1 = vector.load %arg2[%c0_1, %c0_2] : memref<576x128xf32, #tpu.memory_space<vmem>>, vector<576x128xf32>
    %cst = arith.constant dense<0.000000e+00> : vector<2x128xf32>
    %2 = tpu.matmul %0, %1, %cst {dimension_numbers = #tpu.dot_dimension_numbers<[1], [0], [0], [1], [0, 0, 1, 1], [], []>} : vector<2x576xf32>, vector<576x128xf32>, vector<2x128xf32> -> vector<2x128xf32>
    %c0_3 = arith.constant 0 : index
    %c0_4 = arith.constant 0 : index
    %3 = vector.load %arg3[%c0_3, %c0_4] : memref<1x128xf32, #tpu.memory_space<vmem>>, vector<1x128xf32>
    %4 = vector.broadcast %3 : vector<1x128xf32> to vector<2x128xf32>
    %5 = arith.addf %2, %4 : vector<2x128xf32>
    %cst_5 = arith.constant 0.000000e+00 : f32
    %6 = vector.broadcast %cst_5 : f32 to vector<2x128xf32>
    %7 = arith.maximumf %5, %6 : vector<2x128xf32>
    %c0_6 = arith.constant 0 : index
    %c0_7 = arith.constant 0 : index
    %8 = vector.load %arg4[%c0_6, %c0_7] : memref<128x64xf32, #tpu.memory_space<vmem>>, vector<128x64xf32>
    %cst_8 = arith.constant dense<0.000000e+00> : vector<2x64xf32>
    %9 = tpu.matmul %7, %8, %cst_8 {dimension_numbers = #tpu.dot_dimension_numbers<[1], [0], [0], [1], [0, 0, 1, 1], [], []>} : vector<2x128xf32>, vector<128x64xf32>, vector<2x64xf32> -> vector<2x64xf32>
    %c0_9 = arith.constant 0 : index
    %c0_10 = arith.constant 0 : index
    %10 = vector.load %arg5[%c0_9, %c0_10] : memref<1x64xf32, #tpu.memory_space<vmem>>, vector<1x64xf32>
    %11 = vector.broadcast %10 : vector<1x64xf32> to vector<2x64xf32>
    %12 = arith.addf %9, %11 : vector<2x64xf32>
    %cst_11 = arith.constant 0.000000e+00 : f32
    %13 = vector.broadcast %cst_11 : f32 to vector<2x64xf32>
    %14 = arith.maximumf %12, %13 : vector<2x64xf32>
    %c0_12 = arith.constant 0 : index
    %c0_13 = arith.constant 0 : index
    %15 = vector.load %arg6[%c0_12, %c0_13] : memref<64x10xf32, #tpu.memory_space<vmem>>, vector<64x10xf32>
    %cst_14 = arith.constant dense<0.000000e+00> : vector<2x10xf32>
    %16 = tpu.matmul %14, %15, %cst_14 {dimension_numbers = #tpu.dot_dimension_numbers<[1], [0], [0], [1], [0, 0, 1, 1], [], []>} : vector<2x64xf32>, vector<64x10xf32>, vector<2x10xf32> -> vector<2x10xf32>
    %c0_15 = arith.constant 0 : index
    %c0_16 = arith.constant 0 : index
    %17 = vector.load %arg7[%c0_15, %c0_16] : memref<1x10xf32, #tpu.memory_space<vmem>>, vector<1x10xf32>
    %18 = vector.broadcast %17 : vector<1x10xf32> to vector<2x10xf32>
    %19 = arith.addf %16, %18 : vector<2x10xf32>
    %cst_17 = arith.constant dense<0xFF800000> : vector<2xf32>
    %20 = vector.multi_reduction <maximumf>, %19, %cst_17 [1] : vector<2x10xf32> to vector<2xf32>
    %21 = vector.shape_cast %20 : vector<2xf32> to vector<2x1xf32>
    %22 = vector.broadcast %21 : vector<2x1xf32> to vector<2x10xf32>
    %23 = arith.subf %19, %22 : vector<2x10xf32>
    %24 = math.exp %23 : vector<2x10xf32>
    %cst_18 = arith.constant dense<0.000000e+00> : vector<2xf32>
    %25 = vector.multi_reduction <add>, %24, %cst_18 [1] : vector<2x10xf32> to vector<2xf32>
    %26 = vector.shape_cast %25 : vector<2xf32> to vector<2x1xf32>
    %27 = math.log %26 : vector<2x1xf32>
    %28 = vector.broadcast %27 : vector<2x1xf32> to vector<2x10xf32>
    %29 = arith.subf %23, %28 : vector<2x10xf32>
    %c0_19 = arith.constant 0 : index
    %c0_20 = arith.constant 0 : index
    %30 = vector.load %arg8[%c0_19, %c0_20] : memref<2x10xf32, #tpu.memory_space<vmem>>, vector<2x10xf32>
    tpu.vector_store %arg8[%c0_19, %c0_20], %29 {strides = array<i32>} : memref<2x10xf32, #tpu.memory_space<vmem>>, vector<2x10xf32>,
    return
  }
  func.func @transform_0(%arg0: i32) -> (i32, i32) {
    %c0_i32 = arith.constant 0 : i32
    %c0_i32_0 = arith.constant 0 : i32
    return %arg0, %c0_i32 : i32, i32
  }
  func.func @transform_1(%arg0: i32) -> (i32, i32) {
    %c0_i32 = arith.constant 0 : i32
    %c0_i32_0 = arith.constant 0 : i32
    %c0_i32_1 = arith.constant 0 : i32
    return %c0_i32, %c0_i32_0 : i32, i32
  }
  func.func @transform_2(%arg0: i32) -> (i32, i32) {
    %c0_i32 = arith.constant 0 : i32
    %c0_i32_0 = arith.constant 0 : i32
    %c0_i32_1 = arith.constant 0 : i32
    return %c0_i32, %c0_i32_0 : i32, i32
  }
  func.func @transform_3(%arg0: i32) -> (i32, i32) {
    %c0_i32 = arith.constant 0 : i32
    %c0_i32_0 = arith.constant 0 : i32
    %c0_i32_1 = arith.constant 0 : i32
    return %c0_i32, %c0_i32_0 : i32, i32
  }
  func.func @transform_4(%arg0: i32) -> (i32, i32) {
    %c0_i32 = arith.constant 0 : i32
    %c0_i32_0 = arith.constant 0 : i32
    %c0_i32_1 = arith.constant 0 : i32
    return %c0_i32, %c0_i32_0 : i32, i32
  }
  func.func @transform_5(%arg0: i32) -> (i32, i32) {
    %c0_i32 = arith.constant 0 : i32
    %c0_i32_0 = arith.constant 0 : i32
    %c0_i32_1 = arith.constant 0 : i32
    return %c0_i32, %c0_i32_0 : i32, i32
  }
  func.func @transform_6(%arg0: i32) -> (i32, i32) {
    %c0_i32 = arith.constant 0 : i32
    %c0_i32_0 = arith.constant 0 : i32
    %c0_i32_1 = arith.constant 0 : i32
    return %c0_i32, %c0_i32_0 : i32, i32
  }
  func.func @transform_7(%arg0: i32) -> (i32, i32) {
    %c0_i32 = arith.constant 0 : i32
    %c0_i32_0 = arith.constant 0 : i32
    return %arg0, %c0_i32 : i32, i32
  }
}

</mosaic_0001>

<llo_original>
// kernel: forward.3
$region0: #{forward.3}
  #allocation0 [shape = 'u32[]', space=smem, size = 0x4, offset = 0x4, fixed_abs, tag = 'smem constant byte address 0x4 - core index']
  #allocation1 [shape = 'u32[144,128]{1,0:T(1,128)}', space=vmem, size = 0x12000, scoped, tag = 'internal scratch']
  %s0 = inlined_call_operand.vmem [shape: bf16[288,144], index: 0, kind: input, shape index: {}]
  %s1 = inlined_call_operand.vmem [shape: bf16[144,32], index: 1, kind: input, shape index: {}]
  %s2 = inlined_call_operand.vmem [shape: f32[1,32], index: 2, kind: input, shape index: {}]
  %s3 = inlined_call_operand.vmem [shape: f32[288,32], index: 3, kind: output, shape index: {}]
  %s4 = sld [smem:[#allocation0]]
  $region22: #{forward.3} parent=0
    _
  %s6 = ssub.s32 1, %s4
  %s7 = scalar_select 0, %s6, %s4
  // Predicated region
  $region2: #{forward.3} parent=0 // pred_check
    _
  $region3: #{forward.3} parent=0 // pred_check_branch
    %9 = sbr.rel (0) target = $region5
  $region4: #{forward.3} parent=0 // pred_region
    _
  $region5: #{forward.3} parent=0 // pred_fallthru
    _
  // Predicated region
  $region6: #{forward.3} parent=0 // pred_check
    _
  $region7: #{forward.3} parent=0 // pred_check_branch
    %11 = sbr.rel (0) target = $region9
  $region8: #{forward.3} parent=0 // pred_region
    _
  $region9: #{forward.3} parent=0 // pred_fallthru
    _
  // Predicated region
  $region10: #{forward.3} parent=0 // pred_check
    _
  $region11: #{forward.3} parent=0 // pred_check_branch
    %13 = sbr.rel (0) target = $region13
  $region12: #{forward.3} parent=0 // pred_region
    _
  $region13: #{forward.3} parent=0 // pred_fallthru
    _
  %v15 = vld [vmem:[%s0] sm:$0xff]
  %v16 = vld [vmem:[%s0 + $0x8] sm:$0xff]
  %v17 = vld [vmem:[%s0 + $0x10] sm:$0xff]
  %v18 = vld [vmem:[%s0 + $0x18] sm:$0xff]
  %v19 = vld [vmem:[%s0 + $0x20] sm:$0xff]
  %v20 = vld [vmem:[%s0 + $0x28] sm:$0xff]
  %v21 = vld [vmem:[%s0 + $0x30] sm:$0xff]
  %v22 = vld [vmem:[%s0 + $0x38] sm:$0xff]
  %v23 = vld [vmem:[%s0 + $0x40] sm:$0xff]
  %v24 = vld [vmem:[%s0 + $0x48] sm:$0xff]
  %v25 = vld [vmem:[%s0 + $0x50] sm:$0xff]
  %v26 = vld [vmem:[%s0 + $0x58] sm:$0xff]
  %v27 = vld [vmem:[%s0 + $0x60] sm:$0xff]
  %v28 = vld [vmem:[%s0 + $0x68] sm:$0xff]
  %v29 = vld [vmem:[%s0 + $0x70] sm:$0xff]
  %v30 = vld [vmem:[%s0 + $0x78] sm:$0xff]
  %v31 = vld [vmem:[%s0 + $0x80] sm:$0xff]
  %v32 = vld [vmem:[%s0 + $0x88] sm:$0xff]
  %v33 = vld [vmem:[%s0 + $0x90] sm:$0xff]
  %v34 = vld [vmem:[%s0 + $0x98] sm:$0xff]
  %v35 = vld [vmem:[%s0 + $0xa0] sm:$0xff]
  %v36 = vld [vmem:[%s0 + $0xa8] sm:$0xff]
  %v37 = vld [vmem:[%s0 + $0xb0] sm:$0xff]
  %v38 = vld [vmem:[%s0 + $0xb8] sm:$0xff]
  %v39 = vld [vmem:[%s0 + $0xc0] sm:$0xff]
  %v40 = vld [vmem:[%s0 + $0xc8] sm:$0xff]
  %v41 = vld [vmem:[%s0 + $0xd0] sm:$0xff]
  %v42 = vld [vmem:[%s0 + $0xd8] sm:$0xff]
  %v43 = vld [vmem:[%s0 + $0xe0] sm:$0xff]
  %v44 = vld [vmem:[%s0 + $0xe8] sm:$0xff]
  %v45 = vld [vmem:[%s0 + $0xf0] sm:$0xff]
  %v46 = vld [vmem:[%s0 + $0xf8] sm:$0xff]
  %v47 = vld [vmem:[%s0 + $0x100] sm:$0xff]
  %v48 = vld [vmem:[%s0 + $0x108] sm:$0xff]
  %v49 = vld [vmem:[%s0 + $0x110] sm:$0xff]
  %v50 = vld [vmem:[%s0 + $0x118] sm:$0xff]
  %v51 = vld [vmem:[%s1] sm:$0xf]
  %v52 = vld [vmem:[%s1 + $0x4] sm:$0xf]
  %v53 = vld [vmem:[%s1 + $0x8] sm:$0xf]
  %v54 = vld [vmem:[%s1 + $0xc] sm:$0xf]
  %v55 = vld [vmem:[%s1 + $0x10] sm:$0xf]
  %v56 = vld [vmem:[%s1 + $0x14] sm:$0xf]
  %v57 = vld [vmem:[%s1 + $0x18] sm:$0xf]
  %v58 = vld [vmem:[%s1 + $0x1c] sm:$0xf]
  %v59 = vld [vmem:[%s1 + $0x20] sm:$0xf]
  %v60 = vld [vmem:[%s1 + $0x24] sm:$0xf]
  %v61 = vld [vmem:[%s1 + $0x28] sm:$0xf]
  %v62 = vld [vmem:[%s1 + $0x2c] sm:$0xf]
  %v63 = vld [vmem:[%s1 + $0x30] sm:$0xf]
  %v64 = vld [vmem:[%s1 + $0x34] sm:$0xf]
  %v65 = vld [vmem:[%s1 + $0x38] sm:$0xf]
  %v66 = vld [vmem:[%s1 + $0x3c] sm:$0xf]
  %v67 = vld [vmem:[%s1 + $0x40] sm:$0xf]
  %v68 = vld [vmem:[%s1 + $0x44] sm:$0xf]
  %v69 = vld [vmem:[%s2] sm:$0x1]
  %v71 = vlaneseq
  %v72 = vshrl.u32 %v71, 7
  %v73 = vsub.s32 0, %v72
  %v74 = vrot.slane %v69, %v73
  %v112 = vunpack.c.l.b16 %v15
  %v113 = vunpack.c.h.b16 %v15
  %v114 = vunpack.c.l.b16 %v16
  %v115 = vunpack.c.h.b16 %v16
  %v116 = vunpack.c.l.b16 %v17
  %v117 = vunpack.c.h.b16 %v17
  %v118 = vunpack.c.l.b16 %v18
  %v119 = vunpack.c.h.b16 %v18
  %v120 = vunpack.c.l.b16 %v19
  %v121 = vunpack.c.h.b16 %v19
  %v122 = vunpack.c.l.b16 %v20
  %v123 = vunpack.c.h.b16 %v20
  %v124 = vunpack.c.l.b16 %v21
  %v125 = vunpack.c.h.b16 %v21
  %v126 = vunpack.c.l.b16 %v22
  %v127 = vunpack.c.h.b16 %v22
  %v128 = vunpack.c.l.b16 %v23
  %v129 = vunpack.c.h.b16 %v23
  %v130 = vunpack.c.l.b16 %v24
  %v131 = vunpack.c.h.b16 %v24
  %v132 = vunpack.c.l.b16 %v25
  %v133 = vunpack.c.h.b16 %v25
  %v134 = vunpack.c.l.b16 %v26
  %v135 = vunpack.c.h.b16 %v26
  %v136 = vunpack.c.l.b16 %v27
  %v137 = vunpack.c.h.b16 %v27
  %v138 = vunpack.c.l.b16 %v28
  %v139 = vunpack.c.h.b16 %v28
  %v140 = vunpack.c.l.b16 %v29
  %v141 = vunpack.c.h.b16 %v29
  %v142 = vunpack.c.l.b16 %v30
  %v143 = vunpack.c.h.b16 %v30
  %v144 = vunpack.c.l.b16 %v31
  %v145 = vunpack.c.h.b16 %v31
  %v146 = vunpack.c.l.b16 %v32
  %v147 = vunpack.c.h.b16 %v32
  %v148 = vunpack.c.l.b16 %v33
  %v149 = vunpack.c.h.b16 %v33
  %v150 = vunpack.c.l.b16 %v34
  %v151 = vunpack.c.h.b16 %v34
  %v152 = vunpack.c.l.b16 %v35
  %v153 = vunpack.c.h.b16 %v35
  %v154 = vunpack.c.l.b16 %v36
  %v155 = vunpack.c.h.b16 %v36
  %v156 = vunpack.c.l.b16 %v37
  %v157 = vunpack.c.h.b16 %v37
  %v158 = vunpack.c.l.b16 %v38
  %v159 = vunpack.c.h.b16 %v38
  %v160 = vunpack.c.l.b16 %v39
  %v161 = vunpack.c.h.b16 %v39
  %v162 = vunpack.c.l.b16 %v40
  %v163 = vunpack.c.h.b16 %v40
  %v164 = vunpack.c.l.b16 %v41
  %v165 = vunpack.c.h.b16 %v41
  %v166 = vunpack.c.l.b16 %v42
  %v167 = vunpack.c.h.b16 %v42
  %v168 = vunpack.c.l.b16 %v43
  %v169 = vunpack.c.h.b16 %v43
  %v170 = vunpack.c.l.b16 %v44
  %v171 = vunpack.c.h.b16 %v44
  %v172 = vunpack.c.l.b16 %v45
  %v173 = vunpack.c.h.b16 %v45
  %v174 = vunpack.c.l.b16 %v46
  %v175 = vunpack.c.h.b16 %v46
  %v176 = vunpack.c.l.b16 %v47
  %v177 = vunpack.c.h.b16 %v47
  %v178 = vunpack.c.l.b16 %v48
  %v179 = vunpack.c.h.b16 %v48
  %v180 = vunpack.c.l.b16 %v49
  %v181 = vunpack.c.h.b16 %v49
  %v182 = vunpack.c.l.b16 %v50
  %v183 = vunpack.c.h.b16 %v50
  %v184 = vpack.c.b16 %v114, %v112
  %v185 = vpack.c.b16 %v115, %v113
  %v186 = vpack.c.b16 %v118, %v116
  %v187 = vpack.c.b16 %v119, %v117
  %v188 = vpack.c.b16 %v122, %v120
  %v189 = vpack.c.b16 %v123, %v121
  %v190 = vpack.c.b16 %v126, %v124
  %v191 = vpack.c.b16 %v127, %v125
  %v192 = vpack.c.b16 %v130, %v128
  %v193 = vpack.c.b16 %v131, %v129
  %v194 = vpack.c.b16 %v134, %v132
  %v195 = vpack.c.b16 %v135, %v133
  %v196 = vpack.c.b16 %v138, %v136
  %v197 = vpack.c.b16 %v139, %v137
  %v198 = vpack.c.b16 %v142, %v140
  %v199 = vpack.c.b16 %v143, %v141
  %v200 = vpack.c.b16 %v146, %v144
  %v201 = vpack.c.b16 %v147, %v145
  %v202 = vpack.c.b16 %v150, %v148
  %v203 = vpack.c.b16 %v151, %v149
  %v204 = vpack.c.b16 %v154, %v152
  %v205 = vpack.c.b16 %v155, %v153
  %v206 = vpack.c.b16 %v158, %v156
  %v207 = vpack.c.b16 %v159, %v157
  %v208 = vpack.c.b16 %v162, %v160
  %v209 = vpack.c.b16 %v163, %v161
  %v210 = vpack.c.b16 %v166, %v164
  %v211 = vpack.c.b16 %v167, %v165
  %v212 = vpack.c.b16 %v170, %v168
  %v213 = vpack.c.b16 %v171, %v169
  %v214 = vpack.c.b16 %v174, %v172
  %v215 = vpack.c.b16 %v175, %v173
  %v216 = vpack.c.b16 %v178, %v176
  %v217 = vpack.c.b16 %v179, %v177
  %v218 = vpack.c.b16 %v182, %v180
  %v219 = vpack.c.b16 %v183, %v181
  %v256 = vunpack.c.l.b16 %v51
  %v257 = vunpack.c.l.b16 %v52
  %v258 = vunpack.c.l.b16 %v53
  %v259 = vunpack.c.l.b16 %v54
  %v260 = vunpack.c.l.b16 %v55
  %v261 = vunpack.c.l.b16 %v56
  %v262 = vunpack.c.l.b16 %v57
  %v263 = vunpack.c.l.b16 %v58
  %v264 = vunpack.c.l.b16 %v59
  %v265 = vunpack.c.l.b16 %v60
  %v266 = vunpack.c.l.b16 %v61
  %v267 = vunpack.c.l.b16 %v62
  %v268 = vunpack.c.l.b16 %v63
  %v269 = vunpack.c.l.b16 %v64
  %v270 = vunpack.c.l.b16 %v65
  %v271 = vunpack.c.l.b16 %v66
  %v272 = vunpack.c.l.b16 %v67
  %v273 = vunpack.c.l.b16 %v68
  %v274 = vpack.c.b16 %v257, %v256
  %v275 = vpack.c.b16 %v259, %v258
  %v276 = vpack.c.b16 %v261, %v260
  %v277 = vpack.c.b16 %v263, %v262
  %v278 = vpack.c.b16 %v265, %v264
  %v279 = vpack.c.b16 %v267, %v266
  %v280 = vpack.c.b16 %v269, %v268
  %v281 = vpack.c.b16 %v271, %v270
  %v282 = vpack.c.b16 %v273, %v272
  %vm292 = vcmask 130048
  %v294 = vsel %vm292, %v185, 0
  %v297 = vsel %vm292, %v187, 0
  %v300 = vsel %vm292, %v189, 0
  %v303 = vsel %vm292, %v191, 0
  %v306 = vsel %vm292, %v193, 0
  %v309 = vsel %vm292, %v195, 0
  %v312 = vsel %vm292, %v197, 0
  %v315 = vsel %vm292, %v199, 0
  %v318 = vsel %vm292, %v201, 0
  %v321 = vsel %vm292, %v203, 0
  %v324 = vsel %vm292, %v205, 0
  %v327 = vsel %vm292, %v207, 0
  %v330 = vsel %vm292, %v209, 0
  %v333 = vsel %vm292, %v211, 0
  %v336 = vsel %vm292, %v213, 0
  %v339 = vsel %vm292, %v215, 0
  %v342 = vsel %vm292, %v217, 0
  %v345 = vsel %vm292, %v219, 0
  %347 = vmatprep.subr.bf16.mxu0 0
  %348 = vmatpush1.bf16.msra.mxu0 %v274
  %349 = vmatprep.subr.bf16.mxu0 0
  %350 = vmatpush1.bf16.msra.mxu0 %v275
  %351 = vmatprep.subr.bf16.mxu0 0
  %352 = vmatpush1.bf16.msra.mxu0 %v276
  %353 = vmatprep.subr.bf16.mxu0 0
  %354 = vmatpush1.bf16.msra.mxu0 %v277
  %355 = vmatprep.subr.bf16.mxu0 0
  %356 = vmatpush1.bf16.msra.mxu0 %v278
  %357 = vmatprep.subr.bf16.mxu0 0
  %358 = vmatpush1.bf16.msra.mxu0 %v279
  %359 = vmatprep.subr.bf16.mxu0 0
  %360 = vmatpush1.bf16.msra.mxu0 %v280
  %361 = vmatprep.subr.bf16.mxu0 0
  %362 = vmatpush1.bf16.msra.mxu0 %v281
  %363 = vmatprep.subr.bf16.mxu0 0
  %364 = vmatpush1.bf16.msra.mxu0 %v282
  %365 = vmatprep.subr.bf16.mxu0 0
  %366 = vmatpush1.bf16.msra.mxu0 0
  %367 = vmatprep.subr.bf16.mxu0 0
  %368 = vmatpush1.bf16.msra.mxu0 0
  %369 = vmatprep.subr.bf16.mxu0 0
  %370 = vmatpush1.bf16.msra.mxu0 0
  %371 = vmatprep.subr.bf16.mxu0 0
  %372 = vmatpush1.bf16.msra.mxu0 0
  %373 = vmatprep.subr.bf16.mxu0 0
  %374 = vmatpush1.bf16.msra.mxu0 0
  %375 = vmatprep.subr.bf16.mxu0 0
  %376 = vmatpush1.bf16.msra.mxu0 0
  %377 = vmatprep.subr.bf16.mxu0 0
  %378 = vmatpush1.bf16.msra.mxu0 0
  %379 = vmatprep.mubr.bf16.mxu0 %v294
  %380 = vmatmul.mubr.bf16.gmra.mrb[0].mxu0 %v184
  %v381 = vpop.f32.mrb[0].mxu0
  %v382 = vadd.f32 %v74, %v381
  %v383 = vpop.f32.mrb[0].mxu0
  %v384 = vpop.f32.mrb[0].mxu0
  %v385 = vadd.f32 %v74, %v384
  %v386 = vpop.f32.mrb[0].mxu0
  %387 = vmatprep.mubr.bf16.mxu0 %v297
  %388 = vmatmul.mubr.bf16.gmra.mrb[0].mxu0 %v186
  %v389 = vpop.f32.mrb[0].mxu0
  %v390 = vadd.f32 %v74, %v389
  %v391 = vpop.f32.mrb[0].mxu0
  %v392 = vpop.f32.mrb[0].mxu0
  %v393 = vadd.f32 %v74, %v392
  %v394 = vpop.f32.mrb[0].mxu0
  %395 = vmatprep.mubr.bf16.mxu0 %v300
  %396 = vmatmul.mubr.bf16.gmra.mrb[0].mxu0 %v188
  %v397 = vpop.f32.mrb[0].mxu0
  %v398 = vadd.f32 %v74, %v397
  %v399 = vpop.f32.mrb[0].mxu0
  %v400 = vpop.f32.mrb[0].mxu0
  %v401 = vadd.f32 %v74, %v400
  %v402 = vpop.f32.mrb[0].mxu0
  %403 = vmatprep.mubr.bf16.mxu0 %v303
  %404 = vmatmul.mubr.bf16.gmra.mrb[0].mxu0 %v190
  %v405 = vpop.f32.mrb[0].mxu0
  %v406 = vadd.f32 %v74, %v405
  %v407 = vpop.f32.mrb[0].mxu0
  %v408 = vpop.f32.mrb[0].mxu0
  %v409 = vadd.f32 %v74, %v408
  %v410 = vpop.f32.mrb[0].mxu0
  %411 = vmatprep.mubr.bf16.mxu0 %v306
  %412 = vmatmul.mubr.bf16.gmra.mrb[0].mxu0 %v192
  %v413 = vpop.f32.mrb[0].mxu0
  %v414 = vadd.f32 %v74, %v413
  %v415 = vpop.f32.mrb[0].mxu0
  %v416 = vpop.f32.mrb[0].mxu0
  %v417 = vadd.f32 %v74, %v416
  %v418 = vpop.f32.mrb[0].mxu0
  %419 = vmatprep.mubr.bf16.mxu0 %v309
  %420 = vmatmul.mubr.bf16.gmra.mrb[0].mxu0 %v194
  %v421 = vpop.f32.mrb[0].mxu0
  %v422 = vadd.f32 %v74, %v421
  %v423 = vpop.f32.mrb[0].mxu0
  %v424 = vpop.f32.mrb[0].mxu0
  %v425 = vadd.f32 %v74, %v424
  %v426 = vpop.f32.mrb[0].mxu0
  %427 = vmatprep.mubr.bf16.mxu0 %v312
  %428 = vmatmul.mubr.bf16.gmra.mrb[0].mxu0 %v196
  %v429 = vpop.f32.mrb[0].mxu0
  %v430 = vadd.f32 %v74, %v429
  %v431 = vpop.f32.mrb[0].mxu0
  %v432 = vpop.f32.mrb[0].mxu0
  %v433 = vadd.f32 %v74, %v432
  %v434 = vpop.f32.mrb[0].mxu0
  %435 = vmatprep.mubr.bf16.mxu0 %v315
  %436 = vmatmul.mubr.bf16.gmra.mrb[0].mxu0 %v198
  %v437 = vpop.f32.mrb[0].mxu0
  %v438 = vadd.f32 %v74, %v437
  %v439 = vpop.f32.mrb[0].mxu0
  %v440 = vpop.f32.mrb[0].mxu0
  %v441 = vadd.f32 %v74, %v440
  %v442 = vpop.f32.mrb[0].mxu0
  %443 = vmatprep.mubr.bf16.mxu0 %v318
  %444 = vmatmul.mubr.bf16.gmra.mrb[0].mxu0 %v200
  %v445 = vpop.f32.mrb[0].mxu0
  %v446 = vadd.f32 %v74, %v445
  %v447 = vpop.f32.mrb[0].mxu0
  %v448 = vpop.f32.mrb[0].mxu0
  %v449 = vadd.f32 %v74, %v448
  %v450 = vpop.f32.mrb[0].mxu0
  %451 = vmatprep.mubr.bf16.mxu0 %v321
  %452 = vmatmul.mubr.bf16.gmra.mrb[0].mxu0 %v202
  %v453 = vpop.f32.mrb[0].mxu0
  %v454 = vadd.f32 %v74, %v453
  %v455 = vpop.f32.mrb[0].mxu0
  %v456 = vpop.f32.mrb[0].mxu0
  %v457 = vadd.f32 %v74, %v456
  %v458 = vpop.f32.mrb[0].mxu0
  %459 = vmatprep.mubr.bf16.mxu0 %v324
  %460 = vmatmul.mubr.bf16.gmra.mrb[0].mxu0 %v204
  %v461 = vpop.f32.mrb[0].mxu0
  %v462 = vadd.f32 %v74, %v461
  %v463 = vpop.f32.mrb[0].mxu0
  %v464 = vpop.f32.mrb[0].mxu0
  %v465 = vadd.f32 %v74, %v464
  %v466 = vpop.f32.mrb[0].mxu0
  %467 = vmatprep.mubr.bf16.mxu0 %v327
  %468 = vmatmul.mubr.bf16.gmra.mrb[0].mxu0 %v206
  %v469 = vpop.f32.mrb[0].mxu0
  %v470 = vadd.f32 %v74, %v469
  %v471 = vpop.f32.mrb[0].mxu0
  %v472 = vpop.f32.mrb[0].mxu0
  %v473 = vadd.f32 %v74, %v472
  %v474 = vpop.f32.mrb[0].mxu0
  %475 = vmatprep.mubr.bf16.mxu0 %v330
  %476 = vmatmul.mubr.bf16.gmra.mrb[0].mxu0 %v208
  %v477 = vpop.f32.mrb[0].mxu0
  %v478 = vadd.f32 %v74, %v477
  %v479 = vpop.f32.mrb[0].mxu0
  %v480 = vpop.f32.mrb[0].mxu0
  %v481 = vadd.f32 %v74, %v480
  %v482 = vpop.f32.mrb[0].mxu0
  %483 = vmatprep.mubr.bf16.mxu0 %v333
  %484 = vmatmul.mubr.bf16.gmra.mrb[0].mxu0 %v210
  %v485 = vpop.f32.mrb[0].mxu0
  %v486 = vadd.f32 %v74, %v485
  %v487 = vpop.f32.mrb[0].mxu0
  %v488 = vpop.f32.mrb[0].mxu0
  %v489 = vadd.f32 %v74, %v488
  %v490 = vpop.f32.mrb[0].mxu0
  %491 = vmatprep.mubr.bf16.mxu0 %v336
  %492 = vmatmul.mubr.bf16.gmra.mrb[0].mxu0 %v212
  %v493 = vpop.f32.mrb[0].mxu0
  %v494 = vadd.f32 %v74, %v493
  %v495 = vpop.f32.mrb[0].mxu0
  %v496 = vpop.f32.mrb[0].mxu0
  %v497 = vadd.f32 %v74, %v496
  %v498 = vpop.f32.mrb[0].mxu0
  %499 = vmatprep.mubr.bf16.mxu0 %v339
  %500 = vmatmul.mubr.bf16.gmra.mrb[0].mxu0 %v214
  %v501 = vpop.f32.mrb[0].mxu0
  %v502 = vadd.f32 %v74, %v501
  %v503 = vpop.f32.mrb[0].mxu0
  %v504 = vpop.f32.mrb[0].mxu0
  %v505 = vadd.f32 %v74, %v504
  %v506 = vpop.f32.mrb[0].mxu0
  %507 = vmatprep.mubr.bf16.mxu0 %v342
  %508 = vmatmul.mubr.bf16.gmra.mrb[0].mxu0 %v216
  %v509 = vpop.f32.mrb[0].mxu0
  %v510 = vadd.f32 %v74, %v509
  %v511 = vpop.f32.mrb[0].mxu0
  %v512 = vpop.f32.mrb[0].mxu0
  %v513 = vadd.f32 %v74, %v512
  %v514 = vpop.f32.mrb[0].mxu0
  %515 = vmatprep.mubr.bf16.mxu0 %v345
  %516 = vmatmul.mubr.bf16.gmra.mrb[0].mxu0 %v218
  %v517 = vpop.f32.mrb[0].mxu0
  %v518 = vadd.f32 %v74, %v517
  %v519 = vpop.f32.mrb[0].mxu0
  %v520 = vpop.f32.mrb[0].mxu0
  %v521 = vadd.f32 %v74, %v520
  %v522 = vpop.f32.mrb[0].mxu0
  %523 = vdwg.mxu0
  %v524 = vmax.f32 %v382, 0.0
  %v525 = vmax.f32 %v385, 0.0
  %v526 = vmax.f32 %v390, 0.0
  %v527 = vmax.f32 %v393, 0.0
  %v528 = vmax.f32 %v398, 0.0
  %v529 = vmax.f32 %v401, 0.0
  %v530 = vmax.f32 %v406, 0.0
  %v531 = vmax.f32 %v409, 0.0
  %v532 = vmax.f32 %v414, 0.0
  %v533 = vmax.f32 %v417, 0.0
  %v534 = vmax.f32 %v422, 0.0
  %v535 = vmax.f32 %v425, 0.0
  %v536 = vmax.f32 %v430, 0.0
  %v537 = vmax.f32 %v433, 0.0
  %v538 = vmax.f32 %v438, 0.0
  %v539 = vmax.f32 %v441, 0.0
  %v540 = vmax.f32 %v446, 0.0
  %v541 = vmax.f32 %v449, 0.0
  %v542 = vmax.f32 %v454, 0.0
  %v543 = vmax.f32 %v457, 0.0
  %v544 = vmax.f32 %v462, 0.0
  %v545 = vmax.f32 %v465, 0.0
  %v546 = vmax.f32 %v470, 0.0
  %v547 = vmax.f32 %v473, 0.0
  %v548 = vmax.f32 %v478, 0.0
  %v549 = vmax.f32 %v481, 0.0
  %v550 = vmax.f32 %v486, 0.0
  %v551 = vmax.f32 %v489, 0.0
  %v552 = vmax.f32 %v494, 0.0
  %v553 = vmax.f32 %v497, 0.0
  %v554 = vmax.f32 %v502, 0.0
  %v555 = vmax.f32 %v505, 0.0
  %v556 = vmax.f32 %v510, 0.0
  %v557 = vmax.f32 %v513, 0.0
  %v558 = vmax.f32 %v518, 0.0
  %v559 = vmax.f32 %v521, 0.0
  %vm560 = vcmask 261120
  %561 = vst.msk [vmem:[%s3] sm:$0xff] %vm560, %v524
  %562 = vst.msk [vmem:[%s3 + $0x8] sm:$0xff] %vm560, %v525
  %563 = vst.msk [vmem:[%s3 + $0x10] sm:$0xff] %vm560, %v526
  %564 = vst.msk [vmem:[%s3 + $0x18] sm:$0xff] %vm560, %v527
  %565 = vst.msk [vmem:[%s3 + $0x20] sm:$0xff] %vm560, %v528
  %566 = vst.msk [vmem:[%s3 + $0x28] sm:$0xff] %vm560, %v529
  %567 = vst.msk [vmem:[%s3 + $0x30] sm:$0xff] %vm560, %v530
  %568 = vst.msk [vmem:[%s3 + $0x38] sm:$0xff] %vm560, %v531
  %569 = vst.msk [vmem:[%s3 + $0x40] sm:$0xff] %vm560, %v532
  %570 = vst.msk [vmem:[%s3 + $0x48] sm:$0xff] %vm560, %v533
  %571 = vst.msk [vmem:[%s3 + $0x50] sm:$0xff] %vm560, %v534
  %572 = vst.msk [vmem:[%s3 + $0x58] sm:$0xff] %vm560, %v535
  %573 = vst.msk [vmem:[%s3 + $0x60] sm:$0xff] %vm560, %v536
  %574 = vst.msk [vmem:[%s3 + $0x68] sm:$0xff] %vm560, %v537
  %575 = vst.msk [vmem:[%s3 + $0x70] sm:$0xff] %vm560, %v538
  %576 = vst.msk [vmem:[%s3 + $0x78] sm:$0xff] %vm560, %v539
  %577 = vst.msk [vmem:[%s3 + $0x80] sm:$0xff] %vm560, %v540
  %578 = vst.msk [vmem:[%s3 + $0x88] sm:$0xff] %vm560, %v541
  %579 = vst.msk [vmem:[%s3 + $0x90] sm:$0xff] %vm560, %v542
  %580 = vst.msk [vmem:[%s3 + $0x98] sm:$0xff] %vm560, %v543
  %581 = vst.msk [vmem:[%s3 + $0xa0] sm:$0xff] %vm560, %v544
  %582 = vst.msk [vmem:[%s3 + $0xa8] sm:$0xff] %vm560, %v545
  %583 = vst.msk [vmem:[%s3 + $0xb0] sm:$0xff] %vm560, %v546
  %584 = vst.msk [vmem:[%s3 + $0xb8] sm:$0xff] %vm560, %v547
  %585 = vst.msk [vmem:[%s3 + $0xc0] sm:$0xff] %vm560, %v548
  %586 = vst.msk [vmem:[%s3 + $0xc8] sm:$0xff] %vm560, %v549
  %587 = vst.msk [vmem:[%s3 + $0xd0] sm:$0xff] %vm560, %v550
  %588 = vst.msk [vmem:[%s3 + $0xd8] sm:$0xff] %vm560, %v551
  %589 = vst.msk [vmem:[%s3 + $0xe0] sm:$0xff] %vm560, %v552
  %590 = vst.msk [vmem:[%s3 + $0xe8] sm:$0xff] %vm560, %v553
  %591 = vst.msk [vmem:[%s3 + $0xf0] sm:$0xff] %vm560, %v554
  %592 = vst.msk [vmem:[%s3 + $0xf8] sm:$0xff] %vm560, %v555
  %593 = vst.msk [vmem:[%s3 + $0x100] sm:$0xff] %vm560, %v556
  %594 = vst.msk [vmem:[%s3 + $0x108] sm:$0xff] %vm560, %v557
  %595 = vst.msk [vmem:[%s3 + $0x110] sm:$0xff] %vm560, %v558
  %596 = vst.msk [vmem:[%s3 + $0x118] sm:$0xff] %vm560, %v559
  // Predicated region
  $region14: #{forward.3} parent=0 // pred_check
    _
  $region15: #{forward.3} parent=0 // pred_check_branch
    %598 = sbr.rel (0) target = $region17
  $region16: #{forward.3} parent=0 // pred_region
    _
  $region17: #{forward.3} parent=0 // pred_fallthru
    _
  // Predicated region
  $region18: #{forward.3} parent=0 // pred_check
    _
  $region19: #{forward.3} parent=0 // pred_check_branch
    %600 = sbr.rel (0) target = $region21
  $region20: #{forward.3} parent=0 // pred_region
    _
  $region21: #{forward.3} parent=0 // pred_fallthru
    _

// kernel: forward.5
$region0: #{forward.5}
  #allocation0 [shape = 'u32[]', space=smem, size = 0x4, offset = 0x4, fixed_abs, tag = 'smem constant byte address 0x4 - core index']
  #allocation1 [shape = 'u32[144,128]{1,0:T(1,128)}', space=vmem, size = 0x12000, scoped, tag = 'internal scratch']
  %s0 = inlined_call_operand.vmem [shape: f32[2,576], index: 0, kind: input, shape index: {}]
  %s1 = inlined_call_operand.vmem [shape: f32[576,128], index: 1, kind: input, shape index: {}]
  %s2 = inlined_call_operand.vmem [shape: f32[1,128], index: 2, kind: input, shape index: {}]
  %s3 = inlined_call_operand.vmem [shape: f32[128,64], index: 3, kind: input, shape index: {}]
  %s4 = inlined_call_operand.vmem [shape: f32[1,64], index: 4, kind: input, shape index: {}]
  %s5 = inlined_call_operand.vmem [shape: f32[64,10], index: 5, kind: input, shape index: {}]
  %s6 = inlined_call_operand.vmem [shape: f32[1,10], index: 6, kind: input, shape index: {}]
  %s7 = inlined_call_operand.hbm [shape: f32[2,10], index: 7, kind: output, shape index: {}]
  %s8 = sld [smem:[#allocation0]]
  $region38: #{forward.5} parent=0
    _
  %s10 = ssub.s32 1, %s8
  %s11 = scalar_select 0, %s10, %s8
  $region1: #{forward.5} parent=0
    #allocation2 [shape = 'u8[1024]{0}', space=vmem, size = 0x400, scoped, tag = 'output window, operand 0, single buffered']
    #allocation3 [shape = 's32[1]{0}', space=sflag, size = 0x4, scoped, tag = 'scoped memory for forward.5']
    %12 = vsyncpa [#allocation3], 0
    // Predicated region
    $region2: #{forward.5} parent=1 // pred_check
      _
    $region3: #{forward.5} parent=1 // pred_check_branch
      %14 = sbr.rel (0) target = $region5
    $region4: #{forward.5} parent=1 // pred_region
      _
    $region5: #{forward.5} parent=1 // pred_fallthru
      _
    // Predicated region
    $region6: #{forward.5} parent=1 // pred_check
      _
    $region7: #{forward.5} parent=1 // pred_check_branch
      %16 = sbr.rel (0) target = $region9
    $region8: #{forward.5} parent=1 // pred_region
      _
    $region9: #{forward.5} parent=1 // pred_fallthru
      _
    // Predicated region
    $region10: #{forward.5} parent=1 // pred_check
      _
    $region11: #{forward.5} parent=1 // pred_check_branch
      %18 = sbr.rel (0) target = $region13
    $region12: #{forward.5} parent=1 // pred_region
      _
    $region13: #{forward.5} parent=1 // pred_fallthru
      _
    // Predicated region
    $region14: #{forward.5} parent=1 // pred_check
      _
    $region15: #{forward.5} parent=1 // pred_check_branch
      %20 = sbr.rel (0) target = $region17
    $region16: #{forward.5} parent=1 // pred_region
      _
    $region17: #{forward.5} parent=1 // pred_fallthru
      _
    // Predicated region
    $region18: #{forward.5} parent=1 // pred_check
      _
    $region19: #{forward.5} parent=1 // pred_check_branch
      %22 = sbr.rel (0) target = $region21
    $region20: #{forward.5} parent=1 // pred_region
      _
    $region21: #{forward.5} parent=1 // pred_fallthru
      _
    // Predicated region
    $region22: #{forward.5} parent=1 // pred_check
      _
    $region23: #{forward.5} parent=1 // pred_check_branch
      %24 = sbr.rel (0) target = $region25
    $region24: #{forward.5} parent=1 // pred_region
      _
    $region25: #{forward.5} parent=1 // pred_fallthru
      _
    // Predicated region
    $region26: #{forward.5} parent=1 // pred_check
      _
    $region27: #{forward.5} parent=1 // pred_check_branch
      %26 = sbr.rel (0) target = $region29
    $region28: #{forward.5} parent=1 // pred_region
      _
    $region29: #{forward.5} parent=1 // pred_fallthru
      _
    %v27 = vld [vmem:[%s0] sm:$0xff]
    %v28 = vld [vmem:[%s0 + $0x8] sm:$0x3]
    %v29 = vld [vmem:[%s1] sm:$0xff]
    %v30 = vld [vmem:[%s1 + $0x8] sm:$0xff]
    %v31 = vld [vmem:[%s1 + $0x10] sm:$0xff]
    %v32 = vld [vmem:[%s1 + $0x18] sm:$0xff]
    %v33 = vld [vmem:[%s1 + $0x20] sm:$0xff]
    %v34 = vld [vmem:[%s1 + $0x28] sm:$0xff]
    %v35 = vld [vmem:[%s1 + $0x30] sm:$0xff]
    %v36 = vld [vmem:[%s1 + $0x38] sm:$0xff]
    %v37 = vld [vmem:[%s1 + $0x40] sm:$0xff]
    %v38 = vld [vmem:[%s1 + $0x48] sm:$0xff]
    %v39 = vld [vmem:[%s1 + $0x50] sm:$0xff]
    %v40 = vld [vmem:[%s1 + $0x58] sm:$0xff]
    %v41 = vld [vmem:[%s1 + $0x60] sm:$0xff]
    %v42 = vld [vmem:[%s1 + $0x68] sm:$0xff]
    %v43 = vld [vmem:[%s1 + $0x70] sm:$0xff]
    %v44 = vld [vmem:[%s1 + $0x78] sm:$0xff]
    %v45 = vld [vmem:[%s1 + $0x80] sm:$0xff]
    %v46 = vld [vmem:[%s1 + $0x88] sm:$0xff]
    %v47 = vld [vmem:[%s1 + $0x90] sm:$0xff]
    %v48 = vld [vmem:[%s1 + $0x98] sm:$0xff]
    %v49 = vld [vmem:[%s1 + $0xa0] sm:$0xff]
    %v50 = vld [vmem:[%s1 + $0xa8] sm:$0xff]
    %v51 = vld [vmem:[%s1 + $0xb0] sm:$0xff]
    %v52 = vld [vmem:[%s1 + $0xb8] sm:$0xff]
    %v53 = vld [vmem:[%s1 + $0xc0] sm:$0xff]
    %v54 = vld [vmem:[%s1 + $0xc8] sm:$0xff]
    %v55 = vld [vmem:[%s1 + $0xd0] sm:$0xff]
    %v56 = vld [vmem:[%s1 + $0xd8] sm:$0xff]
    %v57 = vld [vmem:[%s1 + $0xe0] sm:$0xff]
    %v58 = vld [vmem:[%s1 + $0xe8] sm:$0xff]
    %v59 = vld [vmem:[%s1 + $0xf0] sm:$0xff]
    %v60 = vld [vmem:[%s1 + $0xf8] sm:$0xff]
    %v61 = vld [vmem:[%s1 + $0x100] sm:$0xff]
    %v62 = vld [vmem:[%s1 + $0x108] sm:$0xff]
    %v63 = vld [vmem:[%s1 + $0x110] sm:$0xff]
    %v64 = vld [vmem:[%s1 + $0x118] sm:$0xff]
    %v65 = vld [vmem:[%s1 + $0x120] sm:$0xff]
    %v66 = vld [vmem:[%s1 + $0x128] sm:$0xff]
    %v67 = vld [vmem:[%s1 + $0x130] sm:$0xff]
    %v68 = vld [vmem:[%s1 + $0x138] sm:$0xff]
    %v69 = vld [vmem:[%s1 + $0x140] sm:$0xff]
    %v70 = vld [vmem:[%s1 + $0x148] sm:$0xff]
    %v71 = vld [vmem:[%s1 + $0x150] sm:$0xff]
    %v72 = vld [vmem:[%s1 + $0x158] sm:$0xff]
    %v73 = vld [vmem:[%s1 + $0x160] sm:$0xff]
    %v74 = vld [vmem:[%s1 + $0x168] sm:$0xff]
    %v75 = vld [vmem:[%s1 + $0x170] sm:$0xff]
    %v76 = vld [vmem:[%s1 + $0x178] sm:$0xff]
    %v77 = vld [vmem:[%s1 + $0x180] sm:$0xff]
    %v78 = vld [vmem:[%s1 + $0x188] sm:$0xff]
    %v79 = vld [vmem:[%s1 + $0x190] sm:$0xff]
    %v80 = vld [vmem:[%s1 + $0x198] sm:$0xff]
    %v81 = vld [vmem:[%s1 + $0x1a0] sm:$0xff]
    %v82 = vld [vmem:[%s1 + $0x1a8] sm:$0xff]
    %v83 = vld [vmem:[%s1 + $0x1b0] sm:$0xff]
    %v84 = vld [vmem:[%s1 + $0x1b8] sm:$0xff]
    %v85 = vld [vmem:[%s1 + $0x1c0] sm:$0xff]
    %v86 = vld [vmem:[%s1 + $0x1c8] sm:$0xff]
    %v87 = vld [vmem:[%s1 + $0x1d0] sm:$0xff]
    %v88 = vld [vmem:[%s1 + $0x1d8] sm:$0xff]
    %v89 = vld [vmem:[%s1 + $0x1e0] sm:$0xff]
    %v90 = vld [vmem:[%s1 + $0x1e8] sm:$0xff]
    %v91 = vld [vmem:[%s1 + $0x1f0] sm:$0xff]
    %v92 = vld [vmem:[%s1 + $0x1f8] sm:$0xff]
    %v93 = vld [vmem:[%s1 + $0x200] sm:$0xff]
    %v94 = vld [vmem:[%s1 + $0x208] sm:$0xff]
    %v95 = vld [vmem:[%s1 + $0x210] sm:$0xff]
    %v96 = vld [vmem:[%s1 + $0x218] sm:$0xff]
    %v97 = vld [vmem:[%s1 + $0x220] sm:$0xff]
    %v98 = vld [vmem:[%s1 + $0x228] sm:$0xff]
    %v99 = vld [vmem:[%s1 + $0x230] sm:$0xff]
    %v100 = vld [vmem:[%s1 + $0x238] sm:$0xff]
    %v101 = vld [vmem:[%s2] sm:$0x1]
    %v103 = vlaneseq
    %v104 = vshrl.u32 %v103, 7
    %v105 = vsub.s32 0, %v104
    %v106 = vrot.slane %v101, %v105
    %v110 = vcombine.high %v27, %v27
    %v112 = vunpack.c.l.s4 1983009808
    %v113 = vunpack.c.0.s8 %v112
    %v114 = vlaneseq
    %v115 = vshrl.u32 %v114, 7
    %v116 = vsub.s32 %v113, %v115
    %v117 = vrot.slane %v27, %v116
    %v119 = vunpack.c.l.s4 1983009808
    %v120 = vunpack.c.0.s8 %v119
    %v121 = vlaneseq
    %v122 = vshrl.u32 %v121, 7
    %v123 = vsub.s32 %v120, %v122
    %v124 = vrot.slane %v110, %v123
    %v125 = vcombine.high %v117, %v117
    %v126 = vcombine.high %v124, %v124
    %v128 = vunpack.c.l.s4 1983009808
    %v129 = vunpack.c.0.s8 %v128
    %v130 = vlaneseq
    %v131 = vshrl.u32 %v130, 7
    %v132 = vsub.s32 %v129, %v131
    %v133 = vrot.slane %v28, %v132
    %vm138 = vcmask 523264
    %v139 = vsel %vm138, %v133, 0
    %141 = vmatprep.subr.mxu0 0.0
    %142 = vmatpush1.msra.mxu0 %v29
    %143 = vmatprep.subr.mxu0 0.0
    %144 = vmatpush1.msra.mxu0 %v30
    %145 = vmatprep.subr.mxu0 0.0
    %146 = vmatpush1.msra.mxu0 %v31
    %147 = vmatprep.subr.mxu0 0.0
    %148 = vmatpush1.msra.mxu0 %v32
    %149 = vmatprep.subr.mxu0 0.0
    %150 = vmatpush1.msra.mxu0 %v33
    %151 = vmatprep.subr.mxu0 0.0
    %152 = vmatpush1.msra.mxu0 %v34
    %153 = vmatprep.subr.mxu0 0.0
    %154 = vmatpush1.msra.mxu0 %v35
    %155 = vmatprep.subr.mxu0 0.0
    %156 = vmatpush1.msra.mxu0 %v36
    %157 = vmatprep.subr.mxu0 0.0
    %158 = vmatpush1.msra.mxu0 %v37
    %159 = vmatprep.subr.mxu0 0.0
    %160 = vmatpush1.msra.mxu0 %v38
    %161 = vmatprep.subr.mxu0 0.0
    %162 = vmatpush1.msra.mxu0 %v39
    %163 = vmatprep.subr.mxu0 0.0
    %164 = vmatpush1.msra.mxu0 %v40
    %165 = vmatprep.subr.mxu0 0.0
    %166 = vmatpush1.msra.mxu0 %v41
    %167 = vmatprep.subr.mxu0 0.0
    %168 = vmatpush1.msra.mxu0 %v42
    %169 = vmatprep.subr.mxu0 0.0
    %170 = vmatpush1.msra.mxu0 %v43
    %171 = vmatprep.subr.mxu0 0.0
    %172 = vmatpush1.msra.mxu0 %v44
    %173 = vmatprep.subr.mxu0 0.0
    %174 = vmatpush1.msra.mxu0 %v45
    %175 = vmatprep.subr.mxu0 0.0
    %176 = vmatpush1.msra.mxu0 %v46
    %177 = vmatprep.subr.mxu0 0.0
    %178 = vmatpush1.msra.mxu0 %v47
    %179 = vmatprep.subr.mxu0 0.0
    %180 = vmatpush1.msra.mxu0 %v48
    %181 = vmatprep.subr.mxu0 0.0
    %182 = vmatpush1.msra.mxu0 %v49
    %183 = vmatprep.subr.mxu0 0.0
    %184 = vmatpush1.msra.mxu0 %v50
    %185 = vmatprep.subr.mxu0 0.0
    %186 = vmatpush1.msra.mxu0 %v51
    %187 = vmatprep.subr.mxu0 0.0
    %188 = vmatpush1.msra.mxu0 %v52
    %189 = vmatprep.subr.mxu0 0.0
    %190 = vmatpush1.msra.mxu0 %v53
    %191 = vmatprep.subr.mxu0 0.0
    %192 = vmatpush1.msra.mxu0 %v54
    %193 = vmatprep.subr.mxu0 0.0
    %194 = vmatpush1.msra.mxu0 %v55
    %195 = vmatprep.subr.mxu0 0.0
    %196 = vmatpush1.msra.mxu0 %v56
    %197 = vmatprep.subr.mxu0 0.0
    %198 = vmatpush1.msra.mxu0 %v57
    %199 = vmatprep.subr.mxu0 0.0
    %200 = vmatpush1.msra.mxu0 %v58
    %201 = vmatprep.subr.mxu0 0.0
    %202 = vmatpush1.msra.mxu0 %v59
    %203 = vmatprep.subr.mxu0 0.0
    %204 = vmatpush1.msra.mxu0 %v60
    %205 = vmatprep.mubr.f32.mxu0 %v125
    %206 = vmatmul.mubr.f32.gmra.mrb[0].mxu0 %v117
    %v207 = vpop.f32.mrb[0].mxu0
    %v208 = vadd.f32 %v106, %v207
    %v209 = vpop.f32.mrb[0].mxu0
    %210 = vdwg.mxu0
    %211 = vmatprep.subr.mxu0 0.0
    %212 = vmatpush1.msra.mxu0 %v61
    %213 = vmatprep.subr.mxu0 0.0
    %214 = vmatpush1.msra.mxu0 %v62
    %215 = vmatprep.subr.mxu0 0.0
    %216 = vmatpush1.msra.mxu0 %v63
    %217 = vmatprep.subr.mxu0 0.0
    %218 = vmatpush1.msra.mxu0 %v64
    %219 = vmatprep.subr.mxu0 0.0
    %220 = vmatpush1.msra.mxu0 %v65
    %221 = vmatprep.subr.mxu0 0.0
    %222 = vmatpush1.msra.mxu0 %v66
    %223 = vmatprep.subr.mxu0 0.0
    %224 = vmatpush1.msra.mxu0 %v67
    %225 = vmatprep.subr.mxu0 0.0
    %226 = vmatpush1.msra.mxu0 %v68
    %227 = vmatprep.subr.mxu0 0.0
    %228 = vmatpush1.msra.mxu0 %v69
    %229 = vmatprep.subr.mxu0 0.0
    %230 = vmatpush1.msra.mxu0 %v70
    %231 = vmatprep.subr.mxu0 0.0
    %232 = vmatpush1.msra.mxu0 %v71
    %233 = vmatprep.subr.mxu0 0.0
    %234 = vmatpush1.msra.mxu0 %v72
    %235 = vmatprep.subr.mxu0 0.0
    %236 = vmatpush1.msra.mxu0 %v73
    %237 = vmatprep.subr.mxu0 0.0
    %238 = vmatpush1.msra.mxu0 %v74
    %239 = vmatprep.subr.mxu0 0.0
    %240 = vmatpush1.msra.mxu0 %v75
    %241 = vmatprep.subr.mxu0 0.0
    %242 = vmatpush1.msra.mxu0 %v76
    %243 = vmatprep.subr.mxu0 0.0
    %244 = vmatpush1.msra.mxu0 %v77
    %245 = vmatprep.subr.mxu0 0.0
    %246 = vmatpush1.msra.mxu0 %v78
    %247 = vmatprep.subr.mxu0 0.0
    %248 = vmatpush1.msra.mxu0 %v79
    %249 = vmatprep.subr.mxu0 0.0
    %250 = vmatpush1.msra.mxu0 %v80
    %251 = vmatprep.subr.mxu0 0.0
    %252 = vmatpush1.msra.mxu0 %v81
    %253 = vmatprep.subr.mxu0 0.0
    %254 = vmatpush1.msra.mxu0 %v82
    %255 = vmatprep.subr.mxu0 0.0
    %256 = vmatpush1.msra.mxu0 %v83
    %257 = vmatprep.subr.mxu0 0.0
    %258 = vmatpush1.msra.mxu0 %v84
    %259 = vmatprep.subr.mxu0 0.0
    %260 = vmatpush1.msra.mxu0 %v85
    %261 = vmatprep.subr.mxu0 0.0
    %262 = vmatpush1.msra.mxu0 %v86
    %263 = vmatprep.subr.mxu0 0.0
    %264 = vmatpush1.msra.mxu0 %v87
    %265 = vmatprep.subr.mxu0 0.0
    %266 = vmatpush1.msra.mxu0 %v88
    %267 = vmatprep.subr.mxu0 0.0
    %268 = vmatpush1.msra.mxu0 %v89
    %269 = vmatprep.subr.mxu0 0.0
    %270 = vmatpush1.msra.mxu0 %v90
    %271 = vmatprep.subr.mxu0 0.0
    %272 = vmatpush1.msra.mxu0 %v91
    %273 = vmatprep.subr.mxu0 0.0
    %274 = vmatpush1.msra.mxu0 %v92
    %275 = vmatprep.mubr.f32.mxu0 %v126
    %276 = vmatmul.mubr.f32.gmra.mrb[0].mxu0 %v124
    %v277 = vpop.f32.mrb[0].mxu0
    %v278 = vadd.f32 %v208, %v277
    %v279 = vpop.f32.mrb[0].mxu0
    %280 = vdwg.mxu0
    %281 = vmatprep.subr.mxu0 0.0
    %282 = vmatpush1.msra.mxu0 %v93
    %283 = vmatprep.subr.mxu0 0.0
    %284 = vmatpush1.msra.mxu0 %v94
    %285 = vmatprep.subr.mxu0 0.0
    %286 = vmatpush1.msra.mxu0 %v95
    %287 = vmatprep.subr.mxu0 0.0
    %288 = vmatpush1.msra.mxu0 %v96
    %289 = vmatprep.subr.mxu0 0.0
    %290 = vmatpush1.msra.mxu0 %v97
    %291 = vmatprep.subr.mxu0 0.0
    %292 = vmatpush1.msra.mxu0 %v98
    %293 = vmatprep.subr.mxu0 0.0
    %294 = vmatpush1.msra.mxu0 %v99
    %295 = vmatprep.subr.mxu0 0.0
    %296 = vmatpush1.msra.mxu0 %v100
    %297 = vmatprep.subr.mxu0 0.0
    %298 = vmatpush1.msra.mxu0 0.0
    %299 = vmatprep.subr.mxu0 0.0
    %300 = vmatpush1.msra.mxu0 0.0
    %301 = vmatprep.subr.mxu0 0.0
    %302 = vmatpush1.msra.mxu0 0.0
    %303 = vmatprep.subr.mxu0 0.0
    %304 = vmatpush1.msra.mxu0 0.0
    %305 = vmatprep.subr.mxu0 0.0
    %306 = vmatpush1.msra.mxu0 0.0
    %307 = vmatprep.subr.mxu0 0.0
    %308 = vmatpush1.msra.mxu0 0.0
    %309 = vmatprep.subr.mxu0 0.0
    %310 = vmatpush1.msra.mxu0 0.0
    %311 = vmatprep.subr.mxu0 0.0
    %312 = vmatpush1.msra.mxu0 0.0
    %313 = vmatprep.subr.mxu0 0.0
    %314 = vmatpush1.msra.mxu0 0.0
    %315 = vmatprep.subr.mxu0 0.0
    %316 = vmatpush1.msra.mxu0 0.0
    %317 = vmatprep.subr.mxu0 0.0
    %318 = vmatpush1.msra.mxu0 0.0
    %319 = vmatprep.subr.mxu0 0.0
    %320 = vmatpush1.msra.mxu0 0.0
    %321 = vmatprep.subr.mxu0 0.0
    %322 = vmatpush1.msra.mxu0 0.0
    %323 = vmatprep.subr.mxu0 0.0
    %324 = vmatpush1.msra.mxu0 0.0
    %325 = vmatprep.subr.mxu0 0.0
    %326 = vmatpush1.msra.mxu0 0.0
    %327 = vmatprep.subr.mxu0 0.0
    %328 = vmatpush1.msra.mxu0 0.0
    %329 = vmatprep.subr.mxu0 0.0
    %330 = vmatpush1.msra.mxu0 0.0
    %331 = vmatprep.subr.mxu0 0.0
    %332 = vmatpush1.msra.mxu0 0.0
    %333 = vmatprep.subr.mxu0 0.0
    %334 = vmatpush1.msra.mxu0 0.0
    %335 = vmatprep.subr.mxu0 0.0
    %336 = vmatpush1.msra.mxu0 0.0
    %337 = vmatprep.subr.mxu0 0.0
    %338 = vmatpush1.msra.mxu0 0.0
    %339 = vmatprep.subr.mxu0 0.0
    %340 = vmatpush1.msra.mxu0 0.0
    %341 = vmatprep.subr.mxu0 0.0
    %342 = vmatpush1.msra.mxu0 0.0
    %343 = vmatprep.subr.mxu0 0.0
    %344 = vmatpush1.msra.mxu0 0.0
    %345 = vmatprep.mubr.f32.mxu0 0.0
    %346 = vmatmul.mubr.f32.gmra.mrb[0].mxu0 %v139
    %v347 = vpop.f32.mrb[0].mxu0
    %v348 = vadd.f32 %v278, %v347
    %v349 = vpop.f32.mrb[0].mxu0
    %350 = vdwg.mxu0
    %v351 = vmax.f32 %v348, 0.0
    %v352 = vld [vmem:[%s3] sm:$0xff]
    %v353 = vld [vmem:[%s3 + $0x8] sm:$0xff]
    %v354 = vld [vmem:[%s3 + $0x10] sm:$0xff]
    %v355 = vld [vmem:[%s3 + $0x18] sm:$0xff]
    %v356 = vld [vmem:[%s3 + $0x20] sm:$0xff]
    %v357 = vld [vmem:[%s3 + $0x28] sm:$0xff]
    %v358 = vld [vmem:[%s3 + $0x30] sm:$0xff]
    %v359 = vld [vmem:[%s3 + $0x38] sm:$0xff]
    %v360 = vld [vmem:[%s3 + $0x40] sm:$0xff]
    %v361 = vld [vmem:[%s3 + $0x48] sm:$0xff]
    %v362 = vld [vmem:[%s3 + $0x50] sm:$0xff]
    %v363 = vld [vmem:[%s3 + $0x58] sm:$0xff]
    %v364 = vld [vmem:[%s3 + $0x60] sm:$0xff]
    %v365 = vld [vmem:[%s3 + $0x68] sm:$0xff]
    %v366 = vld [vmem:[%s3 + $0x70] sm:$0xff]
    %v367 = vld [vmem:[%s3 + $0x78] sm:$0xff]
    %v368 = vld [vmem:[%s4] sm:$0x1]
    %v370 = vlaneseq
    %v371 = vshrl.u32 %v370, 7
    %v372 = vsub.s32 0, %v371
    %v373 = vrot.slane %v368, %v372
    %375 = vmatprep.subr.mxu0 0.0
    %376 = vmatpush1.msra.mxu0 %v352
    %377 = vmatprep.subr.mxu0 0.0
    %378 = vmatpush1.msra.mxu0 %v353
    %379 = vmatprep.subr.mxu0 0.0
    %380 = vmatpush1.msra.mxu0 %v354
    %381 = vmatprep.subr.mxu0 0.0
    %382 = vmatpush1.msra.mxu0 %v355
    %383 = vmatprep.subr.mxu0 0.0
    %384 = vmatpush1.msra.mxu0 %v356
    %385 = vmatprep.subr.mxu0 0.0
    %386 = vmatpush1.msra.mxu0 %v357
    %387 = vmatprep.subr.mxu0 0.0
    %388 = vmatpush1.msra.mxu0 %v358
    %389 = vmatprep.subr.mxu0 0.0
    %390 = vmatpush1.msra.mxu0 %v359
    %391 = vmatprep.subr.mxu0 0.0
    %392 = vmatpush1.msra.mxu0 %v360
    %393 = vmatprep.subr.mxu0 0.0
    %394 = vmatpush1.msra.mxu0 %v361
    %395 = vmatprep.subr.mxu0 0.0
    %396 = vmatpush1.msra.mxu0 %v362
    %397 = vmatprep.subr.mxu0 0.0
    %398 = vmatpush1.msra.mxu0 %v363
    %399 = vmatprep.subr.mxu0 0.0
    %400 = vmatpush1.msra.mxu0 %v364
    %401 = vmatprep.subr.mxu0 0.0
    %402 = vmatpush1.msra.mxu0 %v365
    %403 = vmatprep.subr.mxu0 0.0
    %404 = vmatpush1.msra.mxu0 %v366
    %405 = vmatprep.subr.mxu0 0.0
    %406 = vmatpush1.msra.mxu0 %v367
    %407 = vmatprep.subr.mxu0 0.0
    %408 = vmatpush1.msra.mxu0 0.0
    %409 = vmatprep.subr.mxu0 0.0
    %410 = vmatpush1.msra.mxu0 0.0
    %411 = vmatprep.subr.mxu0 0.0
    %412 = vmatpush1.msra.mxu0 0.0
    %413 = vmatprep.subr.mxu0 0.0
    %414 = vmatpush1.msra.mxu0 0.0
    %415 = vmatprep.subr.mxu0 0.0
    %416 = vmatpush1.msra.mxu0 0.0
    %417 = vmatprep.subr.mxu0 0.0
    %418 = vmatpush1.msra.mxu0 0.0
    %419 = vmatprep.subr.mxu0 0.0
    %420 = vmatpush1.msra.mxu0 0.0
    %421 = vmatprep.subr.mxu0 0.0
    %422 = vmatpush1.msra.mxu0 0.0
    %423 = vmatprep.subr.mxu0 0.0
    %424 = vmatpush1.msra.mxu0 0.0
    %425 = vmatprep.subr.mxu0 0.0
    %426 = vmatpush1.msra.mxu0 0.0
    %427 = vmatprep.subr.mxu0 0.0
    %428 = vmatpush1.msra.mxu0 0.0
    %429 = vmatprep.subr.mxu0 0.0
    %430 = vmatpush1.msra.mxu0 0.0
    %431 = vmatprep.subr.mxu0 0.0
    %432 = vmatpush1.msra.mxu0 0.0
    %433 = vmatprep.subr.mxu0 0.0
    %434 = vmatpush1.msra.mxu0 0.0
    %435 = vmatprep.subr.mxu0 0.0
    %436 = vmatpush1.msra.mxu0 0.0
    %437 = vmatprep.subr.mxu0 0.0
    %438 = vmatpush1.msra.mxu0 0.0
    %439 = vmatprep.mubr.f32.mxu0 0.0
    %440 = vmatmul.mubr.f32.gmra.mrb[0].mxu0 %v351
    %v441 = vpop.f32.mrb[0].mxu0
    %v442 = vadd.f32 %v373, %v441
    %v443 = vpop.f32.mrb[0].mxu0
    %444 = vdwg.mxu0
    %v445 = vmax.f32 %v442, 0.0
    %v446 = vld [vmem:[%s5] sm:$0xff]
    %v447 = vld [vmem:[%s5 + $0x8] sm:$0xff]
    %v448 = vld [vmem:[%s5 + $0x10] sm:$0xff]
    %v449 = vld [vmem:[%s5 + $0x18] sm:$0xff]
    %v450 = vld [vmem:[%s5 + $0x20] sm:$0xff]
    %v451 = vld [vmem:[%s5 + $0x28] sm:$0xff]
    %v452 = vld [vmem:[%s5 + $0x30] sm:$0xff]
    %v453 = vld [vmem:[%s5 + $0x38] sm:$0xff]
    %v454 = vld [vmem:[%s6] sm:$0x1]
    %v456 = vlaneseq
    %v457 = vshrl.u32 %v456, 7
    %v458 = vsub.s32 0, %v457
    %v459 = vrot.slane %v454, %v458
    %v462 = vsel %vm138, %v445, 0
    %464 = vmatprep.subr.mxu0 0.0
    %465 = vmatpush1.msra.mxu0 %v446
    %466 = vmatprep.subr.mxu0 0.0
    %467 = vmatpush1.msra.mxu0 %v447
    %468 = vmatprep.subr.mxu0 0.0
    %469 = vmatpush1.msra.mxu0 %v448
    %470 = vmatprep.subr.mxu0 0.0
    %471 = vmatpush1.msra.mxu0 %v449
    %472 = vmatprep.subr.mxu0 0.0
    %473 = vmatpush1.msra.mxu0 %v450
    %474 = vmatprep.subr.mxu0 0.0
    %475 = vmatpush1.msra.mxu0 %v451
    %476 = vmatprep.subr.mxu0 0.0
    %477 = vmatpush1.msra.mxu0 %v452
    %478 = vmatprep.subr.mxu0 0.0
    %479 = vmatpush1.msra.mxu0 %v453
    %480 = vmatprep.subr.mxu0 0.0
    %481 = vmatpush1.msra.mxu0 0.0
    %482 = vmatprep.subr.mxu0 0.0
    %483 = vmatpush1.msra.mxu0 0.0
    %484 = vmatprep.subr.mxu0 0.0
    %485 = vmatpush1.msra.mxu0 0.0
    %486 = vmatprep.subr.mxu0 0.0
    %487 = vmatpush1.msra.mxu0 0.0
    %488 = vmatprep.subr.mxu0 0.0
    %489 = vmatpush1.msra.mxu0 0.0
    %490 = vmatprep.subr.mxu0 0.0
    %491 = vmatpush1.msra.mxu0 0.0
    %492 = vmatprep.subr.mxu0 0.0
    %493 = vmatpush1.msra.mxu0 0.0
    %494 = vmatprep.subr.mxu0 0.0
    %495 = vmatpush1.msra.mxu0 0.0
    %496 = vmatprep.subr.mxu0 0.0
    %497 = vmatpush1.msra.mxu0 0.0
    %498 = vmatprep.subr.mxu0 0.0
    %499 = vmatpush1.msra.mxu0 0.0
    %500 = vmatprep.subr.mxu0 0.0
    %501 = vmatpush1.msra.mxu0 0.0
    %502 = vmatprep.subr.mxu0 0.0
    %503 = vmatpush1.msra.mxu0 0.0
    %504 = vmatprep.subr.mxu0 0.0
    %505 = vmatpush1.msra.mxu0 0.0
    %506 = vmatprep.subr.mxu0 0.0
    %507 = vmatpush1.msra.mxu0 0.0
    %508 = vmatprep.subr.mxu0 0.0
    %509 = vmatpush1.msra.mxu0 0.0
    %510 = vmatprep.subr.mxu0 0.0
    %511 = vmatpush1.msra.mxu0 0.0
    %512 = vmatprep.subr.mxu0 0.0
    %513 = vmatpush1.msra.mxu0 0.0
    %514 = vmatprep.subr.mxu0 0.0
    %515 = vmatpush1.msra.mxu0 0.0
    %516 = vmatprep.subr.mxu0 0.0
    %517 = vmatpush1.msra.mxu0 0.0
    %518 = vmatprep.subr.mxu0 0.0
    %519 = vmatpush1.msra.mxu0 0.0
    %520 = vmatprep.subr.mxu0 0.0
    %521 = vmatpush1.msra.mxu0 0.0
    %522 = vmatprep.subr.mxu0 0.0
    %523 = vmatpush1.msra.mxu0 0.0
    %524 = vmatprep.subr.mxu0 0.0
    %525 = vmatpush1.msra.mxu0 0.0
    %526 = vmatprep.subr.mxu0 0.0
    %527 = vmatpush1.msra.mxu0 0.0
    %528 = vmatprep.mubr.f32.mxu0 0.0
    %529 = vmatmul.mubr.f32.gmra.mrb[0].mxu0 %v462
    %v530 = vpop.f32.mrb[0].mxu0
    %v531 = vadd.f32 %v459, %v530
    %v532 = vpop.f32.mrb[0].mxu0
    %533 = vdwg.mxu0
    %vm534 = vcmask 74752
    %v535 = vsel %vm534, %v531, -inf
    %536 = vmax.xlane.f32.xlu0 %v535
    %v537 = vpop.xlane.xlu0 %536
    %v538 = vsub.f32 %v531, %v537
    %v539 = vmul.f32 %v538, 1.442695
    %v540 = vpow.pop %v539
    %v541 = vsel %vm534, %v540, 0.0
    %542 = vadd.xlane.f32.xlu0 %v541
    %v543 = vpop.xlane.xlu0 %542
    %v544 = vlog2.pop %v543
    %v545 = vmul.f32 %v544, 0.6931472
    %v546 = vsub.f32 %v538, %v545
    %547 = vst.msk [vmem:[#allocation2] sm:$0x3] %vm534, %v546
    // Predicated region
    $region30: #{forward.5} parent=1 // pred_check
      _
    $region31: #{forward.5} parent=1 // pred_check_branch
      %549 = sbr.rel (0) target = $region33
    $region32: #{forward.5} parent=1 // pred_region
      %s551 = ssub.s32 32, 32
      %552 = vsyncadd [#allocation3], %s551
      %s554 = sshll.u32 [#allocation2], 4
      %s555 = int_to_ptr.vmem [resolvable:$true] %s554
      %557 = dma.vmem_to_hbm [thread:$0]  %s555, 32, %s7, [#allocation3]
    $region33: #{forward.5} parent=1 // pred_fallthru
      _
    // Predicated region
    $region34: #{forward.5} parent=1 // pred_check
      _
    $region35: #{forward.5} parent=1 // pred_check_branch
      %559 = sbr.rel (0) target = $region37
    $region36: #{forward.5} parent=1 // pred_region
      %560 = dma.done [#allocation3], 32
    $region37: #{forward.5} parent=1 // pred_fallthru
      _
    %561 = vsyncpa [#allocation3], 1

// kernel: forward.4
$region0: #{forward.4}
  #allocation0 [shape = 'u32[]', space=smem, size = 0x4, offset = 0x4, fixed_abs, tag = 'smem constant byte address 0x4 - core index']
  #allocation1 [shape = 'u32[144,128]{1,0:T(1,128)}', space=vmem, size = 0x12000, scoped, tag = 'internal scratch']
  %s0 = inlined_call_operand.vmem [shape: bf16[18,4608], index: 0, kind: input, shape index: {}]
  %s1 = inlined_call_operand.vmem [shape: bf16[4608,64], index: 1, kind: input, shape index: {}]
  %s2 = inlined_call_operand.vmem [shape: f32[1,64], index: 2, kind: input, shape index: {}]
  %s3 = inlined_call_operand.vmem [shape: f32[18,64], index: 3, kind: output, shape index: {}]
  %s4 = sld [smem:[#allocation0]]
  $region22: #{forward.4} parent=0
    _
  %s6 = ssub.s32 1, %s4
  %s7 = scalar_select 0, %s6, %s4
  // Predicated region
  $region2: #{forward.4} parent=0 // pred_check
    _
  $region3: #{forward.4} parent=0 // pred_check_branch
    %9 = sbr.rel (0) target = $region5
  $region4: #{forward.4} parent=0 // pred_region
    _
  $region5: #{forward.4} parent=0 // pred_fallthru
    _
  // Predicated region
  $region6: #{forward.4} parent=0 // pred_check
    _
  $region7: #{forward.4} parent=0 // pred_check_branch
    %11 = sbr.rel (0) target = $region9
  $region8: #{forward.4} parent=0 // pred_region
    _
  $region9: #{forward.4} parent=0 // pred_fallthru
    _
  // Predicated region
  $region10: #{forward.4} parent=0 // pred_check
    _
  $region11: #{forward.4} parent=0 // pred_check_branch
    %13 = sbr.rel (0) target = $region13
  $region12: #{forward.4} parent=0 // pred_region
    _
  $region13: #{forward.4} parent=0 // pred_fallthru
    _
  %v15 = vld [vmem:[%s0] sm:$0xff]
  %v16 = vld [vmem:[%s0 + $0x8] sm:$0xff]
  %v17 = vld [vmem:[%s0 + $0x10] sm:$0xff]
  %v18 = vld [vmem:[%s0 + $0x18] sm:$0xff]
  %v19 = vld [vmem:[%s0 + $0x20] sm:$0xff]
  %v20 = vld [vmem:[%s0 + $0x28] sm:$0xff]
  %v21 = vld [vmem:[%s0 + $0x30] sm:$0xff]
  %v22 = vld [vmem:[%s0 + $0x38] sm:$0xff]
  %v23 = vld [vmem:[%s0 + $0x40] sm:$0xff]
  %v24 = vld [vmem:[%s0 + $0x48] sm:$0xff]
  %v25 = vld [vmem:[%s0 + $0x50] sm:$0xff]
  %v26 = vld [vmem:[%s0 + $0x58] sm:$0xff]
  %v27 = vld [vmem:[%s0 + $0x60] sm:$0xff]
  %v28 = vld [vmem:[%s0 + $0x68] sm:$0xff]
  %v29 = vld [vmem:[%s0 + $0x70] sm:$0xff]
  %v30 = vld [vmem:[%s0 + $0x78] sm:$0xff]
  %v31 = vld [vmem:[%s0 + $0x80] sm:$0xff]
  %v32 = vld [vmem:[%s0 + $0x88] sm:$0xff]
  %v33 = vld [vmem:[%s0 + $0x90] sm:$0xff]
  %v34 = vld [vmem:[%s0 + $0x98] sm:$0xff]
  %v35 = vld [vmem:[%s0 + $0xa0] sm:$0xff]
  %v36 = vld [vmem:[%s0 + $0xa8] sm:$0xff]
  %v37 = vld [vmem:[%s0 + $0xb0] sm:$0xff]
  %v38 = vld [vmem:[%s0 + $0xb8] sm:$0xff]
  %v39 = vld [vmem:[%s0 + $0xc0] sm:$0xff]
  %v40 = vld [vmem:[%s0 + $0xc8] sm:$0xff]
  %v41 = vld [vmem:[%s0 + $0xd0] sm:$0xff]
  %v42 = vld [vmem:[%s0 + $0xd8] sm:$0xff]
  %v43 = vld [vmem:[%s0 + $0xe0] sm:$0xff]
  %v44 = vld [vmem:[%s0 + $0xe8] sm:$0xff]
  %v45 = vld [vmem:[%s0 + $0xf0] sm:$0xff]
  %v46 = vld [vmem:[%s0 + $0xf8] sm:$0xff]
  %v47 = vld [vmem:[%s0 + $0x100] sm:$0xff]
  %v48 = vld [vmem:[%s0 + $0x108] sm:$0xff]
  %v49 = vld [vmem:[%s0 + $0x110] sm:$0xff]
  %v50 = vld [vmem:[%s0 + $0x118] sm:$0xff]
  %v51 = vld [vmem:[%s0 + $0x120] sm:$0x11]
  %v52 = vld [vmem:[%s0 + $0x128] sm:$0x11]
  %v53 = vld [vmem:[%s0 + $0x130] sm:$0x11]
  %v54 = vld [vmem:[%s0 + $0x138] sm:$0x11]
  %v55 = vld [vmem:[%s0 + $0x140] sm:$0x11]
  %v56 = vld [vmem:[%s0 + $0x148] sm:$0x11]
  %v57 = vld [vmem:[%s0 + $0x150] sm:$0x11]
  %v58 = vld [vmem:[%s0 + $0x158] sm:$0x11]
  %v59 = vld [vmem:[%s0 + $0x160] sm:$0x11]
  %v60 = vld [vmem:[%s0 + $0x168] sm:$0x11]
  %v61 = vld [vmem:[%s0 + $0x170] sm:$0x11]
  %v62 = vld [vmem:[%s0 + $0x178] sm:$0x11]
  %v63 = vld [vmem:[%s0 + $0x180] sm:$0x11]
  %v64 = vld [vmem:[%s0 + $0x188] sm:$0x11]
  %v65 = vld [vmem:[%s0 + $0x190] sm:$0x11]
  %v66 = vld [vmem:[%s0 + $0x198] sm:$0x11]
  %v67 = vld [vmem:[%s0 + $0x1a0] sm:$0x11]
  %v68 = vld [vmem:[%s0 + $0x1a8] sm:$0x11]
  %v69 = vld [vmem:[%s1] sm:$0xf]
  %v70 = vld [vmem:[%s1 + $0x4] sm:$0xf]
  %v71 = vld [vmem:[%s1 + $0x8] sm:$0xf]
  %v72 = vld [vmem:[%s1 + $0xc] sm:$0xf]
  %v73 = vld [vmem:[%s1 + $0x10] sm:$0xf]
  %v74 = vld [vmem:[%s1 + $0x14] sm:$0xf]
  %v75 = vld [vmem:[%s1 + $0x18] sm:$0xf]
  %v76 = vld [vmem:[%s1 + $0x1c] sm:$0xf]
  %v77 = vld [vmem:[%s1 + $0x20] sm:$0xf]
  %v78 = vld [vmem:[%s1 + $0x24] sm:$0xf]
  %v79 = vld [vmem:[%s1 + $0x28] sm:$0xf]
  %v80 = vld [vmem:[%s1 + $0x2c] sm:$0xf]
  %v81 = vld [vmem:[%s1 + $0x30] sm:$0xf]
  %v82 = vld [vmem:[%s1 + $0x34] sm:$0xf]
  %v83 = vld [vmem:[%s1 + $0x38] sm:$0xf]
  %v84 = vld [vmem:[%s1 + $0x3c] sm:$0xf]
  %v85 = vld [vmem:[%s1 + $0x40] sm:$0xf]
  %v86 = vld [vmem:[%s1 + $0x44] sm:$0xf]
  %v87 = vld [vmem:[%s1 + $0x48] sm:$0xf]
  %v88 = vld [vmem:[%s1 + $0x4c] sm:$0xf]
  %v89 = vld [vmem:[%s1 + $0x50] sm:$0xf]
  %v90 = vld [vmem:[%s1 + $0x54] sm:$0xf]
  %v91 = vld [vmem:[%s1 + $0x58] sm:$0xf]
  %v92 = vld [vmem:[%s1 + $0x5c] sm:$0xf]
  %v93 = vld [vmem:[%s1 + $0x60] sm:$0xf]
  %v94 = vld [vmem:[%s1 + $0x64] sm:$0xf]
  %v95 = vld [vmem:[%s1 + $0x68] sm:$0xf]
  %v96 = vld [vmem:[%s1 + $0x6c] sm:$0xf]
  %v97 = vld [vmem:[%s1 + $0x70] sm:$0xf]
  %v98 = vld [vmem:[%s1 + $0x74] sm:$0xf]
  %v99 = vld [vmem:[%s1 + $0x78] sm:$0xf]
  %v100 = vld [vmem:[%s1 + $0x7c] sm:$0xf]
  %v101 = vld [vmem:[%s1 + $0x80] sm:$0xf]
  %v102 = vld [vmem:[%s1 + $0x84] sm:$0xf]
  %v103 = vld [vmem:[%s1 + $0x88] sm:$0xf]
  %v104 = vld [vmem:[%s1 + $0x8c] sm:$0xf]
  %v105 = vld [vmem:[%s1 + $0x90] sm:$0xf]
  %v106 = vld [vmem:[%s1 + $0x94] sm:$0xf]
  %v107 = vld [vmem:[%s1 + $0x98] sm:$0xf]
  %v108 = vld [vmem:[%s1 + $0x9c] sm:$0xf]
  %v109 = vld [vmem:[%s1 + $0xa0] sm:$0xf]
  %v110 = vld [vmem:[%s1 + $0xa4] sm:$0xf]
  %v111 = vld [vmem:[%s1 + $0xa8] sm:$0xf]
  %v112 = vld [vmem:[%s1 + $0xac] sm:$0xf]
  %v113 = vld [vmem:[%s1 + $0xb0] sm:$0xf]
  %v114 = vld [vmem:[%s1 + $0xb4] sm:$0xf]
  %v115 = vld [vmem:[%s1 + $0xb8] sm:$0xf]
  %v116 = vld [vmem:[%s1 + $0xbc] sm:$0xf]
  %v117 = vld [vmem:[%s1 + $0xc0] sm:$0xf]
  %v118 = vld [vmem:[%s1 + $0xc4] sm:$0xf]
  %v119 = vld [vmem:[%s1 + $0xc8] sm:$0xf]
  %v120 = vld [vmem:[%s1 + $0xcc] sm:$0xf]
  %v121 = vld [vmem:[%s1 + $0xd0] sm:$0xf]
  %v122 = vld [vmem:[%s1 + $0xd4] sm:$0xf]
  %v123 = vld [vmem:[%s1 + $0xd8] sm:$0xf]
  %v124 = vld [vmem:[%s1 + $0xdc] sm:$0xf]
  %v125 = vld [vmem:[%s1 + $0xe0] sm:$0xf]
  %v126 = vld [vmem:[%s1 + $0xe4] sm:$0xf]
  %v127 = vld [vmem:[%s1 + $0xe8] sm:$0xf]
  %v128 = vld [vmem:[%s1 + $0xec] sm:$0xf]
  %v129 = vld [vmem:[%s1 + $0xf0] sm:$0xf]
  %v130 = vld [vmem:[%s1 + $0xf4] sm:$0xf]
  %v131 = vld [vmem:[%s1 + $0xf8] sm:$0xf]
  %v132 = vld [vmem:[%s1 + $0xfc] sm:$0xf]
  %v133 = vld [vmem:[%s1 + $0x100] sm:$0xf]
  %v134 = vld [vmem:[%s1 + $0x104] sm:$0xf]
  %v135 = vld [vmem:[%s1 + $0x108] sm:$0xf]
  %v136 = vld [vmem:[%s1 + $0x10c] sm:$0xf]
  %v137 = vld [vmem:[%s1 + $0x110] sm:$0xf]
  %v138 = vld [vmem:[%s1 + $0x114] sm:$0xf]
  %v139 = vld [vmem:[%s1 + $0x118] sm:$0xf]
  %v140 = vld [vmem:[%s1 + $0x11c] sm:$0xf]
  %v141 = vld [vmem:[%s1 + $0x120] sm:$0xf]
  %v142 = vld [vmem:[%s1 + $0x124] sm:$0xf]
  %v143 = vld [vmem:[%s1 + $0x128] sm:$0xf]
  %v144 = vld [vmem:[%s1 + $0x12c] sm:$0xf]
  %v145 = vld [vmem:[%s1 + $0x130] sm:$0xf]
  %v146 = vld [vmem:[%s1 + $0x134] sm:$0xf]
  %v147 = vld [vmem:[%s1 + $0x138] sm:$0xf]
  %v148 = vld [vmem:[%s1 + $0x13c] sm:$0xf]
  %v149 = vld [vmem:[%s1 + $0x140] sm:$0xf]
  %v150 = vld [vmem:[%s1 + $0x144] sm:$0xf]
  %v151 = vld [vmem:[%s1 + $0x148] sm:$0xf]
  %v152 = vld [vmem:[%s1 + $0x14c] sm:$0xf]
  %v153 = vld [vmem:[%s1 + $0x150] sm:$0xf]
  %v154 = vld [vmem:[%s1 + $0x154] sm:$0xf]
  %v155 = vld [vmem:[%s1 + $0x158] sm:$0xf]
  %v156 = vld [vmem:[%s1 + $0x15c] sm:$0xf]
  %v157 = vld [vmem:[%s1 + $0x160] sm:$0xf]
  %v158 = vld [vmem:[%s1 + $0x164] sm:$0xf]
  %v159 = vld [vmem:[%s1 + $0x168] sm:$0xf]
  %v160 = vld [vmem:[%s1 + $0x16c] sm:$0xf]
  %v161 = vld [vmem:[%s1 + $0x170] sm:$0xf]
  %v162 = vld [vmem:[%s1 + $0x174] sm:$0xf]
  %v163 = vld [vmem:[%s1 + $0x178] sm:$0xf]
  %v164 = vld [vmem:[%s1 + $0x17c] sm:$0xf]
  %v165 = vld [vmem:[%s1 + $0x180] sm:$0xf]
  %v166 = vld [vmem:[%s1 + $0x184] sm:$0xf]
  %v167 = vld [vmem:[%s1 + $0x188] sm:$0xf]
  %v168 = vld [vmem:[%s1 + $0x18c] sm:$0xf]
  %v169 = vld [vmem:[%s1 + $0x190] sm:$0xf]
  %v170 = vld [vmem:[%s1 + $0x194] sm:$0xf]
  %v171 = vld [vmem:[%s1 + $0x198] sm:$0xf]
  %v172 = vld [vmem:[%s1 + $0x19c] sm:$0xf]
  %v173 = vld [vmem:[%s1 + $0x1a0] sm:$0xf]
  %v174 = vld [vmem:[%s1 + $0x1a4] sm:$0xf]
  %v175 = vld [vmem:[%s1 + $0x1a8] sm:$0xf]
  %v176 = vld [vmem:[%s1 + $0x1ac] sm:$0xf]
  %v177 = vld [vmem:[%s1 + $0x1b0] sm:$0xf]
  %v178 = vld [vmem:[%s1 + $0x1b4] sm:$0xf]
  %v179 = vld [vmem:[%s1 + $0x1b8] sm:$0xf]
  %v180 = vld [vmem:[%s1 + $0x1bc] sm:$0xf]
  %v181 = vld [vmem:[%s1 + $0x1c0] sm:$0xf]
  %v182 = vld [vmem:[%s1 + $0x1c4] sm:$0xf]
  %v183 = vld [vmem:[%s1 + $0x1c8] sm:$0xf]
  %v184 = vld [vmem:[%s1 + $0x1cc] sm:$0xf]
  %v185 = vld [vmem:[%s1 + $0x1d0] sm:$0xf]
  %v186 = vld [vmem:[%s1 + $0x1d4] sm:$0xf]
  %v187 = vld [vmem:[%s1 + $0x1d8] sm:$0xf]
  %v188 = vld [vmem:[%s1 + $0x1dc] sm:$0xf]
  %v189 = vld [vmem:[%s1 + $0x1e0] sm:$0xf]
  %v190 = vld [vmem:[%s1 + $0x1e4] sm:$0xf]
  %v191 = vld [vmem:[%s1 + $0x1e8] sm:$0xf]
  %v192 = vld [vmem:[%s1 + $0x1ec] sm:$0xf]
  %v193 = vld [vmem:[%s1 + $0x1f0] sm:$0xf]
  %v194 = vld [vmem:[%s1 + $0x1f4] sm:$0xf]
  %v195 = vld [vmem:[%s1 + $0x1f8] sm:$0xf]
  %v196 = vld [vmem:[%s1 + $0x1fc] sm:$0xf]
  %v197 = vld [vmem:[%s1 + $0x200] sm:$0xf]
  %v198 = vld [vmem:[%s1 + $0x204] sm:$0xf]
  %v199 = vld [vmem:[%s1 + $0x208] sm:$0xf]
  %v200 = vld [vmem:[%s1 + $0x20c] sm:$0xf]
  %v201 = vld [vmem:[%s1 + $0x210] sm:$0xf]
  %v202 = vld [vmem:[%s1 + $0x214] sm:$0xf]
  %v203 = vld [vmem:[%s1 + $0x218] sm:$0xf]
  %v204 = vld [vmem:[%s1 + $0x21c] sm:$0xf]
  %v205 = vld [vmem:[%s1 + $0x220] sm:$0xf]
  %v206 = vld [vmem:[%s1 + $0x224] sm:$0xf]
  %v207 = vld [vmem:[%s1 + $0x228] sm:$0xf]
  %v208 = vld [vmem:[%s1 + $0x22c] sm:$0xf]
  %v209 = vld [vmem:[%s1 + $0x230] sm:$0xf]
  %v210 = vld [vmem:[%s1 + $0x234] sm:$0xf]
  %v211 = vld [vmem:[%s1 + $0x238] sm:$0xf]
  %v212 = vld [vmem:[%s1 + $0x23c] sm:$0xf]
  %v213 = vld [vmem:[%s1 + $0x240] sm:$0xf]
  %v214 = vld [vmem:[%s1 + $0x244] sm:$0xf]
  %v215 = vld [vmem:[%s1 + $0x248] sm:$0xf]
  %v216 = vld [vmem:[%s1 + $0x24c] sm:$0xf]
  %v217 = vld [vmem:[%s1 + $0x250] sm:$0xf]
  %v218 = vld [vmem:[%s1 + $0x254] sm:$0xf]
  %v219 = vld [vmem:[%s1 + $0x258] sm:$0xf]
  %v220 = vld [vmem:[%s1 + $0x25c] sm:$0xf]
  %v221 = vld [vmem:[%s1 + $0x260] sm:$0xf]
  %v222 = vld [vmem:[%s1 + $0x264] sm:$0xf]
  %v223 = vld [vmem:[%s1 + $0x268] sm:$0xf]
  %v224 = vld [vmem:[%s1 + $0x26c] sm:$0xf]
  %v225 = vld [vmem:[%s1 + $0x270] sm:$0xf]
  %v226 = vld [vmem:[%s1 + $0x274] sm:$0xf]
  %v227 = vld [vmem:[%s1 + $0x278] sm:$0xf]
  %v228 = vld [vmem:[%s1 + $0x27c] sm:$0xf]
  %v229 = vld [vmem:[%s1 + $0x280] sm:$0xf]
  %v230 = vld [vmem:[%s1 + $0x284] sm:$0xf]
  %v231 = vld [vmem:[%s1 + $0x288] sm:$0xf]
  %v232 = vld [vmem:[%s1 + $0x28c] sm:$0xf]
  %v233 = vld [vmem:[%s1 + $0x290] sm:$0xf]
  %v234 = vld [vmem:[%s1 + $0x294] sm:$0xf]
  %v235 = vld [vmem:[%s1 + $0x298] sm:$0xf]
  %v236 = vld [vmem:[%s1 + $0x29c] sm:$0xf]
  %v237 = vld [vmem:[%s1 + $0x2a0] sm:$0xf]
  %v238 = vld [vmem:[%s1 + $0x2a4] sm:$0xf]
  %v239 = vld [vmem:[%s1 + $0x2a8] sm:$0xf]
  %v240 = vld [vmem:[%s1 + $0x2ac] sm:$0xf]
  %v241 = vld [vmem:[%s1 + $0x2b0] sm:$0xf]
  %v242 = vld [vmem:[%s1 + $0x2b4] sm:$0xf]
  %v243 = vld [vmem:[%s1 + $0x2b8] sm:$0xf]
  %v244 = vld [vmem:[%s1 + $0x2bc] sm:$0xf]
  %v245 = vld [vmem:[%s1 + $0x2c0] sm:$0xf]
  %v246 = vld [vmem:[%s1 + $0x2c4] sm:$0xf]
  %v247 = vld [vmem:[%s1 + $0x2c8] sm:$0xf]
  %v248 = vld [vmem:[%s1 + $0x2cc] sm:$0xf]
  %v249 = vld [vmem:[%s1 + $0x2d0] sm:$0xf]
  %v250 = vld [vmem:[%s1 + $0x2d4] sm:$0xf]
  %v251 = vld [vmem:[%s1 + $0x2d8] sm:$0xf]
  %v252 = vld [vmem:[%s1 + $0x2dc] sm:$0xf]
  %v253 = vld [vmem:[%s1 + $0x2e0] sm:$0xf]
  %v254 = vld [vmem:[%s1 + $0x2e4] sm:$0xf]
  %v255 = vld [vmem:[%s1 + $0x2e8] sm:$0xf]
  %v256 = vld [vmem:[%s1 + $0x2ec] sm:$0xf]
  %v257 = vld [vmem:[%s1 + $0x2f0] sm:$0xf]
  %v258 = vld [vmem:[%s1 + $0x2f4] sm:$0xf]
  %v259 = vld [vmem:[%s1 + $0x2f8] sm:$0xf]
  %v260 = vld [vmem:[%s1 + $0x2fc] sm:$0xf]
  %v261 = vld [vmem:[%s1 + $0x300] sm:$0xf]
  %v262 = vld [vmem:[%s1 + $0x304] sm:$0xf]
  %v263 = vld [vmem:[%s1 + $0x308] sm:$0xf]
  %v264 = vld [vmem:[%s1 + $0x30c] sm:$0xf]
  %v265 = vld [vmem:[%s1 + $0x310] sm:$0xf]
  %v266 = vld [vmem:[%s1 + $0x314] sm:$0xf]
  %v267 = vld [vmem:[%s1 + $0x318] sm:$0xf]
  %v268 = vld [vmem:[%s1 + $0x31c] sm:$0xf]
  %v269 = vld [vmem:[%s1 + $0x320] sm:$0xf]
  %v270 = vld [vmem:[%s1 + $0x324] sm:$0xf]
  %v271 = vld [vmem:[%s1 + $0x328] sm:$0xf]
  %v272 = vld [vmem:[%s1 + $0x32c] sm:$0xf]
  %v273 = vld [vmem:[%s1 + $0x330] sm:$0xf]
  %v274 = vld [vmem:[%s1 + $0x334] sm:$0xf]
  %v275 = vld [vmem:[%s1 + $0x338] sm:$0xf]
  %v276 = vld [vmem:[%s1 + $0x33c] sm:$0xf]
  %v277 = vld [vmem:[%s1 + $0x340] sm:$0xf]
  %v278 = vld [vmem:[%s1 + $0x344] sm:$0xf]
  %v279 = vld [vmem:[%s1 + $0x348] sm:$0xf]
  %v280 = vld [vmem:[%s1 + $0x34c] sm:$0xf]
  %v281 = vld [vmem:[%s1 + $0x350] sm:$0xf]
  %v282 = vld [vmem:[%s1 + $0x354] sm:$0xf]
  %v283 = vld [vmem:[%s1 + $0x358] sm:$0xf]
  %v284 = vld [vmem:[%s1 + $0x35c] sm:$0xf]
  %v285 = vld [vmem:[%s1 + $0x360] sm:$0xf]
  %v286 = vld [vmem:[%s1 + $0x364] sm:$0xf]
  %v287 = vld [vmem:[%s1 + $0x368] sm:$0xf]
  %v288 = vld [vmem:[%s1 + $0x36c] sm:$0xf]
  %v289 = vld [vmem:[%s1 + $0x370] sm:$0xf]
  %v290 = vld [vmem:[%s1 + $0x374] sm:$0xf]
  %v291 = vld [vmem:[%s1 + $0x378] sm:$0xf]
  %v292 = vld [vmem:[%s1 + $0x37c] sm:$0xf]
  %v293 = vld [vmem:[%s1 + $0x380] sm:$0xf]
  %v294 = vld [vmem:[%s1 + $0x384] sm:$0xf]
  %v295 = vld [vmem:[%s1 + $0x388] sm:$0xf]
  %v296 = vld [vmem:[%s1 + $0x38c] sm:$0xf]
  %v297 = vld [vmem:[%s1 + $0x390] sm:$0xf]
  %v298 = vld [vmem:[%s1 + $0x394] sm:$0xf]
  %v299 = vld [vmem:[%s1 + $0x398] sm:$0xf]
  %v300 = vld [vmem:[%s1 + $0x39c] sm:$0xf]
  %v301 = vld [vmem:[%s1 + $0x3a0] sm:$0xf]
  %v302 = vld [vmem:[%s1 + $0x3a4] sm:$0xf]
  %v303 = vld [vmem:[%s1 + $0x3a8] sm:$0xf]
  %v304 = vld [vmem:[%s1 + $0x3ac] sm:$0xf]
  %v305 = vld [vmem:[%s1 + $0x3b0] sm:$0xf]
  %v306 = vld [vmem:[%s1 + $0x3b4] sm:$0xf]
  %v307 = vld [vmem:[%s1 + $0x3b8] sm:$0xf]
  %v308 = vld [vmem:[%s1 + $0x3bc] sm:$0xf]
  %v309 = vld [vmem:[%s1 + $0x3c0] sm:$0xf]
  %v310 = vld [vmem:[%s1 + $0x3c4] sm:$0xf]
  %v311 = vld [vmem:[%s1 + $0x3c8] sm:$0xf]
  %v312 = vld [vmem:[%s1 + $0x3cc] sm:$0xf]
  %v313 = vld [vmem:[%s1 + $0x3d0] sm:$0xf]
  %v314 = vld [vmem:[%s1 + $0x3d4] sm:$0xf]
  %v315 = vld [vmem:[%s1 + $0x3d8] sm:$0xf]
  %v316 = vld [vmem:[%s1 + $0x3dc] sm:$0xf]
  %v317 = vld [vmem:[%s1 + $0x3e0] sm:$0xf]
  %v318 = vld [vmem:[%s1 + $0x3e4] sm:$0xf]
  %v319 = vld [vmem:[%s1 + $0x3e8] sm:$0xf]
  %v320 = vld [vmem:[%s1 + $0x3ec] sm:$0xf]
  %v321 = vld [vmem:[%s1 + $0x3f0] sm:$0xf]
  %v322 = vld [vmem:[%s1 + $0x3f4] sm:$0xf]
  %v323 = vld [vmem:[%s1 + $0x3f8] sm:$0xf]
  %v324 = vld [vmem:[%s1 + $0x3fc] sm:$0xf]
  %v325 = vld [vmem:[%s1 + $0x400] sm:$0xf]
  %v326 = vld [vmem:[%s1 + $0x404] sm:$0xf]
  %v327 = vld [vmem:[%s1 + $0x408] sm:$0xf]
  %v328 = vld [vmem:[%s1 + $0x40c] sm:$0xf]
  %v329 = vld [vmem:[%s1 + $0x410] sm:$0xf]
  %v330 = vld [vmem:[%s1 + $0x414] sm:$0xf]
  %v331 = vld [vmem:[%s1 + $0x418] sm:$0xf]
  %v332 = vld [vmem:[%s1 + $0x41c] sm:$0xf]
  %v333 = vld [vmem:[%s1 + $0x420] sm:$0xf]
  %v334 = vld [vmem:[%s1 + $0x424] sm:$0xf]
  %v335 = vld [vmem:[%s1 + $0x428] sm:$0xf]
  %v336 = vld [vmem:[%s1 + $0x42c] sm:$0xf]
  %v337 = vld [vmem:[%s1 + $0x430] sm:$0xf]
  %v338 = vld [vmem:[%s1 + $0x434] sm:$0xf]
  %v339 = vld [vmem:[%s1 + $0x438] sm:$0xf]
  %v340 = vld [vmem:[%s1 + $0x43c] sm:$0xf]
  %v341 = vld [vmem:[%s1 + $0x440] sm:$0xf]
  %v342 = vld [vmem:[%s1 + $0x444] sm:$0xf]
  %v343 = vld [vmem:[%s1 + $0x448] sm:$0xf]
  %v344 = vld [vmem:[%s1 + $0x44c] sm:$0xf]
  %v345 = vld [vmem:[%s1 + $0x450] sm:$0xf]
  %v346 = vld [vmem:[%s1 + $0x454] sm:$0xf]
  %v347 = vld [vmem:[%s1 + $0x458] sm:$0xf]
  %v348 = vld [vmem:[%s1 + $0x45c] sm:$0xf]
  %v349 = vld [vmem:[%s1 + $0x460] sm:$0xf]
  %v350 = vld [vmem:[%s1 + $0x464] sm:$0xf]
  %v351 = vld [vmem:[%s1 + $0x468] sm:$0xf]
  %v352 = vld [vmem:[%s1 + $0x46c] sm:$0xf]
  %v353 = vld [vmem:[%s1 + $0x470] sm:$0xf]
  %v354 = vld [vmem:[%s1 + $0x474] sm:$0xf]
  %v355 = vld [vmem:[%s1 + $0x478] sm:$0xf]
  %v356 = vld [vmem:[%s1 + $0x47c] sm:$0xf]
  %v357 = vld [vmem:[%s1 + $0x480] sm:$0xf]
  %v358 = vld [vmem:[%s1 + $0x484] sm:$0xf]
  %v359 = vld [vmem:[%s1 + $0x488] sm:$0xf]
  %v360 = vld [vmem:[%s1 + $0x48c] sm:$0xf]
  %v361 = vld [vmem:[%s1 + $0x490] sm:$0xf]
  %v362 = vld [vmem:[%s1 + $0x494] sm:$0xf]
  %v363 = vld [vmem:[%s1 + $0x498] sm:$0xf]
  %v364 = vld [vmem:[%s1 + $0x49c] sm:$0xf]
  %v365 = vld [vmem:[%s1 + $0x4a0] sm:$0xf]
  %v366 = vld [vmem:[%s1 + $0x4a4] sm:$0xf]
  %v367 = vld [vmem:[%s1 + $0x4a8] sm:$0xf]
  %v368 = vld [vmem:[%s1 + $0x4ac] sm:$0xf]
  %v369 = vld [vmem:[%s1 + $0x4b0] sm:$0xf]
  %v370 = vld [vmem:[%s1 + $0x4b4] sm:$0xf]
  %v371 = vld [vmem:[%s1 + $0x4b8] sm:$0xf]
  %v372 = vld [vmem:[%s1 + $0x4bc] sm:$0xf]
  %v373 = vld [vmem:[%s1 + $0x4c0] sm:$0xf]
  %v374 = vld [vmem:[%s1 + $0x4c4] sm:$0xf]
  %v375 = vld [vmem:[%s1 + $0x4c8] sm:$0xf]
  %v376 = vld [vmem:[%s1 + $0x4cc] sm:$0xf]
  %v377 = vld [vmem:[%s1 + $0x4d0] sm:$0xf]
  %v378 = vld [vmem:[%s1 + $0x4d4] sm:$0xf]
  %v379 = vld [vmem:[%s1 + $0x4d8] sm:$0xf]
  %v380 = vld [vmem:[%s1 + $0x4dc] sm:$0xf]
  %v381 = vld [vmem:[%s1 + $0x4e0] sm:$0xf]
  %v382 = vld [vmem:[%s1 + $0x4e4] sm:$0xf]
  %v383 = vld [vmem:[%s1 + $0x4e8] sm:$0xf]
  %v384 = vld [vmem:[%s1 + $0x4ec] sm:$0xf]
  %v385 = vld [vmem:[%s1 + $0x4f0] sm:$0xf]
  %v386 = vld [vmem:[%s1 + $0x4f4] sm:$0xf]
  %v387 = vld [vmem:[%s1 + $0x4f8] sm:$0xf]
  %v388 = vld [vmem:[%s1 + $0x4fc] sm:$0xf]
  %v389 = vld [vmem:[%s1 + $0x500] sm:$0xf]
  %v390 = vld [vmem:[%s1 + $0x504] sm:$0xf]
  %v391 = vld [vmem:[%s1 + $0x508] sm:$0xf]
  %v392 = vld [vmem:[%s1 + $0x50c] sm:$0xf]
  %v393 = vld [vmem:[%s1 + $0x510] sm:$0xf]
  %v394 = vld [vmem:[%s1 + $0x514] sm:$0xf]
  %v395 = vld [vmem:[%s1 + $0x518] sm:$0xf]
  %v396 = vld [vmem:[%s1 + $0x51c] sm:$0xf]
  %v397 = vld [vmem:[%s1 + $0x520] sm:$0xf]
  %v398 = vld [vmem:[%s1 + $0x524] sm:$0xf]
  %v399 = vld [vmem:[%s1 + $0x528] sm:$0xf]
  %v400 = vld [vmem:[%s1 + $0x52c] sm:$0xf]
  %v401 = vld [vmem:[%s1 + $0x530] sm:$0xf]
  %v402 = vld [vmem:[%s1 + $0x534] sm:$0xf]
  %v403 = vld [vmem:[%s1 + $0x538] sm:$0xf]
  %v404 = vld [vmem:[%s1 + $0x53c] sm:$0xf]
  %v405 = vld [vmem:[%s1 + $0x540] sm:$0xf]
  %v406 = vld [vmem:[%s1 + $0x544] sm:$0xf]
  %v407 = vld [vmem:[%s1 + $0x548] sm:$0xf]
  %v408 = vld [vmem:[%s1 + $0x54c] sm:$0xf]
  %v409 = vld [vmem:[%s1 + $0x550] sm:$0xf]
  %v410 = vld [vmem:[%s1 + $0x554] sm:$0xf]
  %v411 = vld [vmem:[%s1 + $0x558] sm:$0xf]
  %v412 = vld [vmem:[%s1 + $0x55c] sm:$0xf]
  %v413 = vld [vmem:[%s1 + $0x560] sm:$0xf]
  %v414 = vld [vmem:[%s1 + $0x564] sm:$0xf]
  %v415 = vld [vmem:[%s1 + $0x568] sm:$0xf]
  %v416 = vld [vmem:[%s1 + $0x56c] sm:$0xf]
  %v417 = vld [vmem:[%s1 + $0x570] sm:$0xf]
  %v418 = vld [vmem:[%s1 + $0x574] sm:$0xf]
  %v419 = vld [vmem:[%s1 + $0x578] sm:$0xf]
  %v420 = vld [vmem:[%s1 + $0x57c] sm:$0xf]
  %v421 = vld [vmem:[%s1 + $0x580] sm:$0xf]
  %v422 = vld [vmem:[%s1 + $0x584] sm:$0xf]
  %v423 = vld [vmem:[%s1 + $0x588] sm:$0xf]
  %v424 = vld [vmem:[%s1 + $0x58c] sm:$0xf]
  %v425 = vld [vmem:[%s1 + $0x590] sm:$0xf]
  %v426 = vld [vmem:[%s1 + $0x594] sm:$0xf]
  %v427 = vld [vmem:[%s1 + $0x598] sm:$0xf]
  %v428 = vld [vmem:[%s1 + $0x59c] sm:$0xf]
  %v429 = vld [vmem:[%s1 + $0x5a0] sm:$0xf]
  %v430 = vld [vmem:[%s1 + $0x5a4] sm:$0xf]
  %v431 = vld [vmem:[%s1 + $0x5a8] sm:$0xf]
  %v432 = vld [vmem:[%s1 + $0x5ac] sm:$0xf]
  %v433 = vld [vmem:[%s1 + $0x5b0] sm:$0xf]
  %v434 = vld [vmem:[%s1 + $0x5b4] sm:$0xf]
  %v435 = vld [vmem:[%s1 + $0x5b8] sm:$0xf]
  %v436 = vld [vmem:[%s1 + $0x5bc] sm:$0xf]
  %v437 = vld [vmem:[%s1 + $0x5c0] sm:$0xf]
  %v438 = vld [vmem:[%s1 + $0x5c4] sm:$0xf]
  %v439 = vld [vmem:[%s1 + $0x5c8] sm:$0xf]
  %v440 = vld [vmem:[%s1 + $0x5cc] sm:$0xf]
  %v441 = vld [vmem:[%s1 + $0x5d0] sm:$0xf]
  %v442 = vld [vmem:[%s1 + $0x5d4] sm:$0xf]
  %v443 = vld [vmem:[%s1 + $0x5d8] sm:$0xf]
  %v444 = vld [vmem:[%s1 + $0x5dc] sm:$0xf]
  %v445 = vld [vmem:[%s1 + $0x5e0] sm:$0xf]
  %v446 = vld [vmem:[%s1 + $0x5e4] sm:$0xf]
  %v447 = vld [vmem:[%s1 + $0x5e8] sm:$0xf]
  %v448 = vld [vmem:[%s1 + $0x5ec] sm:$0xf]
  %v449 = vld [vmem:[%s1 + $0x5f0] sm:$0xf]
  %v450 = vld [vmem:[%s1 + $0x5f4] sm:$0xf]
  %v451 = vld [vmem:[%s1 + $0x5f8] sm:$0xf]
  %v452 = vld [vmem:[%s1 + $0x5fc] sm:$0xf]
  %v453 = vld [vmem:[%s1 + $0x600] sm:$0xf]
  %v454 = vld [vmem:[%s1 + $0x604] sm:$0xf]
  %v455 = vld [vmem:[%s1 + $0x608] sm:$0xf]
  %v456 = vld [vmem:[%s1 + $0x60c] sm:$0xf]
  %v457 = vld [vmem:[%s1 + $0x610] sm:$0xf]
  %v458 = vld [vmem:[%s1 + $0x614] sm:$0xf]
  %v459 = vld [vmem:[%s1 + $0x618] sm:$0xf]
  %v460 = vld [vmem:[%s1 + $0x61c] sm:$0xf]
  %v461 = vld [vmem:[%s1 + $0x620] sm:$0xf]
  %v462 = vld [vmem:[%s1 + $0x624] sm:$0xf]
  %v463 = vld [vmem:[%s1 + $0x628] sm:$0xf]
  %v464 = vld [vmem:[%s1 + $0x62c] sm:$0xf]
  %v465 = vld [vmem:[%s1 + $0x630] sm:$0xf]
  %v466 = vld [vmem:[%s1 + $0x634] sm:$0xf]
  %v467 = vld [vmem:[%s1 + $0x638] sm:$0xf]
  %v468 = vld [vmem:[%s1 + $0x63c] sm:$0xf]
  %v469 = vld [vmem:[%s1 + $0x640] sm:$0xf]
  %v470 = vld [vmem:[%s1 + $0x644] sm:$0xf]
  %v471 = vld [vmem:[%s1 + $0x648] sm:$0xf]
  %v472 = vld [vmem:[%s1 + $0x64c] sm:$0xf]
  %v473 = vld [vmem:[%s1 + $0x650] sm:$0xf]
  %v474 = vld [vmem:[%s1 + $0x654] sm:$0xf]
  %v475 = vld [vmem:[%s1 + $0x658] sm:$0xf]
  %v476 = vld [vmem:[%s1 + $0x65c] sm:$0xf]
  %v477 = vld [vmem:[%s1 + $0x660] sm:$0xf]
  %v478 = vld [vmem:[%s1 + $0x664] sm:$0xf]
  %v479 = vld [vmem:[%s1 + $0x668] sm:$0xf]
  %v480 = vld [vmem:[%s1 + $0x66c] sm:$0xf]
  %v481 = vld [vmem:[%s1 + $0x670] sm:$0xf]
  %v482 = vld [vmem:[%s1 + $0x674] sm:$0xf]
  %v483 = vld [vmem:[%s1 + $0x678] sm:$0xf]
  %v484 = vld [vmem:[%s1 + $0x67c] sm:$0xf]
  %v485 = vld [vmem:[%s1 + $0x680] sm:$0xf]
  %v486 = vld [vmem:[%s1 + $0x684] sm:$0xf]
  %v487 = vld [vmem:[%s1 + $0x688] sm:$0xf]
  %v488 = vld [vmem:[%s1 + $0x68c] sm:$0xf]
  %v489 = vld [vmem:[%s1 + $0x690] sm:$0xf]
  %v490 = vld [vmem:[%s1 + $0x694] sm:$0xf]
  %v491 = vld [vmem:[%s1 + $0x698] sm:$0xf]
  %v492 = vld [vmem:[%s1 + $0x69c] sm:$0xf]
  %v493 = vld [vmem:[%s1 + $0x6a0] sm:$0xf]
  %v494 = vld [vmem:[%s1 + $0x6a4] sm:$0xf]
  %v495 = vld [vmem:[%s1 + $0x6a8] sm:$0xf]
  %v496 = vld [vmem:[%s1 + $0x6ac] sm:$0xf]
  %v497 = vld [vmem:[%s1 + $0x6b0] sm:$0xf]
  %v498 = vld [vmem:[%s1 + $0x6b4] sm:$0xf]
  %v499 = vld [vmem:[%s1 + $0x6b8] sm:$0xf]
  %v500 = vld [vmem:[%s1 + $0x6bc] sm:$0xf]
  %v501 = vld [vmem:[%s1 + $0x6c0] sm:$0xf]
  %v502 = vld [vmem:[%s1 + $0x6c4] sm:$0xf]
  %v503 = vld [vmem:[%s1 + $0x6c8] sm:$0xf]
  %v504 = vld [vmem:[%s1 + $0x6cc] sm:$0xf]
  %v505 = vld [vmem:[%s1 + $0x6d0] sm:$0xf]
  %v506 = vld [vmem:[%s1 + $0x6d4] sm:$0xf]
  %v507 = vld [vmem:[%s1 + $0x6d8] sm:$0xf]
  %v508 = vld [vmem:[%s1 + $0x6dc] sm:$0xf]
  %v509 = vld [vmem:[%s1 + $0x6e0] sm:$0xf]
  %v510 = vld [vmem:[%s1 + $0x6e4] sm:$0xf]
  %v511 = vld [vmem:[%s1 + $0x6e8] sm:$0xf]
  %v512 = vld [vmem:[%s1 + $0x6ec] sm:$0xf]
  %v513 = vld [vmem:[%s1 + $0x6f0] sm:$0xf]
  %v514 = vld [vmem:[%s1 + $0x6f4] sm:$0xf]
  %v515 = vld [vmem:[%s1 + $0x6f8] sm:$0xf]
  %v516 = vld [vmem:[%s1 + $0x6fc] sm:$0xf]
  %v517 = vld [vmem:[%s1 + $0x700] sm:$0xf]
  %v518 = vld [vmem:[%s1 + $0x704] sm:$0xf]
  %v519 = vld [vmem:[%s1 + $0x708] sm:$0xf]
  %v520 = vld [vmem:[%s1 + $0x70c] sm:$0xf]
  %v521 = vld [vmem:[%s1 + $0x710] sm:$0xf]
  %v522 = vld [vmem:[%s1 + $0x714] sm:$0xf]
  %v523 = vld [vmem:[%s1 + $0x718] sm:$0xf]
  %v524 = vld [vmem:[%s1 + $0x71c] sm:$0xf]
  %v525 = vld [vmem:[%s1 + $0x720] sm:$0xf]
  %v526 = vld [vmem:[%s1 + $0x724] sm:$0xf]
  %v527 = vld [vmem:[%s1 + $0x728] sm:$0xf]
  %v528 = vld [vmem:[%s1 + $0x72c] sm:$0xf]
  %v529 = vld [vmem:[%s1 + $0x730] sm:$0xf]
  %v530 = vld [vmem:[%s1 + $0x734] sm:$0xf]
  %v531 = vld [vmem:[%s1 + $0x738] sm:$0xf]
  %v532 = vld [vmem:[%s1 + $0x73c] sm:$0xf]
  %v533 = vld [vmem:[%s1 + $0x740] sm:$0xf]
  %v534 = vld [vmem:[%s1 + $0x744] sm:$0xf]
  %v535 = vld [vmem:[%s1 + $0x748] sm:$0xf]
  %v536 = vld [vmem:[%s1 + $0x74c] sm:$0xf]
  %v537 = vld [vmem:[%s1 + $0x750] sm:$0xf]
  %v538 = vld [vmem:[%s1 + $0x754] sm:$0xf]
  %v539 = vld [vmem:[%s1 + $0x758] sm:$0xf]
  %v540 = vld [vmem:[%s1 + $0x75c] sm:$0xf]
  %v541 = vld [vmem:[%s1 + $0x760] sm:$0xf]
  %v542 = vld [vmem:[%s1 + $0x764] sm:$0xf]
  %v543 = vld [vmem:[%s1 + $0x768] sm:$0xf]
  %v544 = vld [vmem:[%s1 + $0x76c] sm:$0xf]
  %v545 = vld [vmem:[%s1 + $0x770] sm:$0xf]
  %v546 = vld [vmem:[%s1 + $0x774] sm:$0xf]
  %v547 = vld [vmem:[%s1 + $0x778] sm:$0xf]
  %v548 = vld [vmem:[%s1 + $0x77c] sm:$0xf]
  %v549 = vld [vmem:[%s1 + $0x780] sm:$0xf]
  %v550 = vld [vmem:[%s1 + $0x784] sm:$0xf]
  %v551 = vld [vmem:[%s1 + $0x788] sm:$0xf]
  %v552 = vld [vmem:[%s1 + $0x78c] sm:$0xf]
  %v553 = vld [vmem:[%s1 + $0x790] sm:$0xf]
  %v554 = vld [vmem:[%s1 + $0x794] sm:$0xf]
  %v555 = vld [vmem:[%s1 + $0x798] sm:$0xf]
  %v556 = vld [vmem:[%s1 + $0x79c] sm:$0xf]
  %v557 = vld [vmem:[%s1 + $0x7a0] sm:$0xf]
  %v558 = vld [vmem:[%s1 + $0x7a4] sm:$0xf]
  %v559 = vld [vmem:[%s1 + $0x7a8] sm:$0xf]
  %v560 = vld [vmem:[%s1 + $0x7ac] sm:$0xf]
  %v561 = vld [vmem:[%s1 + $0x7b0] sm:$0xf]
  %v562 = vld [vmem:[%s1 + $0x7b4] sm:$0xf]
  %v563 = vld [vmem:[%s1 + $0x7b8] sm:$0xf]
  %v564 = vld [vmem:[%s1 + $0x7bc] sm:$0xf]
  %v565 = vld [vmem:[%s1 + $0x7c0] sm:$0xf]
  %v566 = vld [vmem:[%s1 + $0x7c4] sm:$0xf]
  %v567 = vld [vmem:[%s1 + $0x7c8] sm:$0xf]
  %v568 = vld [vmem:[%s1 + $0x7cc] sm:$0xf]
  %v569 = vld [vmem:[%s1 + $0x7d0] sm:$0xf]
  %v570 = vld [vmem:[%s1 + $0x7d4] sm:$0xf]
  %v571 = vld [vmem:[%s1 + $0x7d8] sm:$0xf]
  %v572 = vld [vmem:[%s1 + $0x7dc] sm:$0xf]
  %v573 = vld [vmem:[%s1 + $0x7e0] sm:$0xf]
  %v574 = vld [vmem:[%s1 + $0x7e4] sm:$0xf]
  %v575 = vld [vmem:[%s1 + $0x7e8] sm:$0xf]
  %v576 = vld [vmem:[%s1 + $0x7ec] sm:$0xf]
  %v577 = vld [vmem:[%s1 + $0x7f0] sm:$0xf]
  %v578 = vld [vmem:[%s1 + $0x7f4] sm:$0xf]
  %v579 = vld [vmem:[%s1 + $0x7f8] sm:$0xf]
  %v580 = vld [vmem:[%s1 + $0x7fc] sm:$0xf]
  %v581 = vld [vmem:[%s1 + $0x800] sm:$0xf]
  %v582 = vld [vmem:[%s1 + $0x804] sm:$0xf]
  %v583 = vld [vmem:[%s1 + $0x808] sm:$0xf]
  %v584 = vld [vmem:[%s1 + $0x80c] sm:$0xf]
  %v585 = vld [vmem:[%s1 + $0x810] sm:$0xf]
  %v586 = vld [vmem:[%s1 + $0x814] sm:$0xf]
  %v587 = vld [vmem:[%s1 + $0x818] sm:$0xf]
  %v588 = vld [vmem:[%s1 + $0x81c] sm:$0xf]
  %v589 = vld [vmem:[%s1 + $0x820] sm:$0xf]
  %v590 = vld [vmem:[%s1 + $0x824] sm:$0xf]
  %v591 = vld [vmem:[%s1 + $0x828] sm:$0xf]
  %v592 = vld [vmem:[%s1 + $0x82c] sm:$0xf]
  %v593 = vld [vmem:[%s1 + $0x830] sm:$0xf]
  %v594 = vld [vmem:[%s1 + $0x834] sm:$0xf]
  %v595 = vld [vmem:[%s1 + $0x838] sm:$0xf]
  %v596 = vld [vmem:[%s1 + $0x83c] sm:$0xf]
  %v597 = vld [vmem:[%s1 + $0x840] sm:$0xf]
  %v598 = vld [vmem:[%s1 + $0x844] sm:$0xf]
  %v599 = vld [vmem:[%s1 + $0x848] sm:$0xf]
  %v600 = vld [vmem:[%s1 + $0x84c] sm:$0xf]
  %v601 = vld [vmem:[%s1 + $0x850] sm:$0xf]
  %v602 = vld [vmem:[%s1 + $0x854] sm:$0xf]
  %v603 = vld [vmem:[%s1 + $0x858] sm:$0xf]
  %v604 = vld [vmem:[%s1 + $0x85c] sm:$0xf]
  %v605 = vld [vmem:[%s1 + $0x860] sm:$0xf]
  %v606 = vld [vmem:[%s1 + $0x864] sm:$0xf]
  %v607 = vld [vmem:[%s1 + $0x868] sm:$0xf]
  %v608 = vld [vmem:[%s1 + $0x86c] sm:$0xf]
  %v609 = vld [vmem:[%s1 + $0x870] sm:$0xf]
  %v610 = vld [vmem:[%s1 + $0x874] sm:$0xf]
  %v611 = vld [vmem:[%s1 + $0x878] sm:$0xf]
  %v612 = vld [vmem:[%s1 + $0x87c] sm:$0xf]
  %v613 = vld [vmem:[%s1 + $0x880] sm:$0xf]
  %v614 = vld [vmem:[%s1 + $0x884] sm:$0xf]
  %v615 = vld [vmem:[%s1 + $0x888] sm:$0xf]
  %v616 = vld [vmem:[%s1 + $0x88c] sm:$0xf]
  %v617 = vld [vmem:[%s1 + $0x890] sm:$0xf]
  %v618 = vld [vmem:[%s1 + $0x894] sm:$0xf]
  %v619 = vld [vmem:[%s1 + $0x898] sm:$0xf]
  %v620 = vld [vmem:[%s1 + $0x89c] sm:$0xf]
  %v621 = vld [vmem:[%s1 + $0x8a0] sm:$0xf]
  %v622 = vld [vmem:[%s1 + $0x8a4] sm:$0xf]
  %v623 = vld [vmem:[%s1 + $0x8a8] sm:$0xf]
  %v624 = vld [vmem:[%s1 + $0x8ac] sm:$0xf]
  %v625 = vld [vmem:[%s1 + $0x8b0] sm:$0xf]
  %v626 = vld [vmem:[%s1 + $0x8b4] sm:$0xf]
  %v627 = vld [vmem:[%s1 + $0x8b8] sm:$0xf]
  %v628 = vld [vmem:[%s1 + $0x8bc] sm:$0xf]
  %v629 = vld [vmem:[%s1 + $0x8c0] sm:$0xf]
  %v630 = vld [vmem:[%s1 + $0x8c4] sm:$0xf]
  %v631 = vld [vmem:[%s1 + $0x8c8] sm:$0xf]
  %v632 = vld [vmem:[%s1 + $0x8cc] sm:$0xf]
  %v633 = vld [vmem:[%s1 + $0x8d0] sm:$0xf]
  %v634 = vld [vmem:[%s1 + $0x8d4] sm:$0xf]
  %v635 = vld [vmem:[%s1 + $0x8d8] sm:$0xf]
  %v636 = vld [vmem:[%s1 + $0x8dc] sm:$0xf]
  %v637 = vld [vmem:[%s1 + $0x8e0] sm:$0xf]
  %v638 = vld [vmem:[%s1 + $0x8e4] sm:$0xf]
  %v639 = vld [vmem:[%s1 + $0x8e8] sm:$0xf]
  %v640 = vld [vmem:[%s1 + $0x8ec] sm:$0xf]
  %v641 = vld [vmem:[%s1 + $0x8f0] sm:$0xf]
  %v642 = vld [vmem:[%s1 + $0x8f4] sm:$0xf]
  %v643 = vld [vmem:[%s1 + $0x8f8] sm:$0xf]
  %v644 = vld [vmem:[%s1 + $0x8fc] sm:$0xf]
  %v645 = vld [vmem:[%s2] sm:$0x1]
  %v647 = vlaneseq
  %v648 = vshrl.u32 %v647, 7
  %v649 = vsub.s32 0, %v648
  %v650 = vrot.slane %v645, %v649
  %v706 = vunpack.c.l.b16 %v15
  %v707 = vunpack.c.h.b16 %v15
  %v708 = vunpack.c.l.b16 %v16
  %v709 = vunpack.c.h.b16 %v16
  %v710 = vunpack.c.l.b16 %v17
  %v711 = vunpack.c.h.b16 %v17
  %v712 = vunpack.c.l.b16 %v18
  %v713 = vunpack.c.h.b16 %v18
  %v714 = vunpack.c.l.b16 %v19
  %v715 = vunpack.c.h.b16 %v19
  %v716 = vunpack.c.l.b16 %v20
  %v717 = vunpack.c.h.b16 %v20
  %v718 = vunpack.c.l.b16 %v21
  %v719 = vunpack.c.h.b16 %v21
  %v720 = vunpack.c.l.b16 %v22
  %v721 = vunpack.c.h.b16 %v22
  %v722 = vunpack.c.l.b16 %v23
  %v723 = vunpack.c.h.b16 %v23
  %v724 = vunpack.c.l.b16 %v24
  %v725 = vunpack.c.h.b16 %v24
  %v726 = vunpack.c.l.b16 %v25
  %v727 = vunpack.c.h.b16 %v25
  %v728 = vunpack.c.l.b16 %v26
  %v729 = vunpack.c.h.b16 %v26
  %v730 = vunpack.c.l.b16 %v27
  %v731 = vunpack.c.h.b16 %v27
  %v732 = vunpack.c.l.b16 %v28
  %v733 = vunpack.c.h.b16 %v28
  %v734 = vunpack.c.l.b16 %v29
  %v735 = vunpack.c.h.b16 %v29
  %v736 = vunpack.c.l.b16 %v30
  %v737 = vunpack.c.h.b16 %v30
  %v738 = vunpack.c.l.b16 %v31
  %v739 = vunpack.c.h.b16 %v31
  %v740 = vunpack.c.l.b16 %v32
  %v741 = vunpack.c.h.b16 %v32
  %v742 = vunpack.c.l.b16 %v33
  %v743 = vunpack.c.h.b16 %v33
  %v744 = vunpack.c.l.b16 %v34
  %v745 = vunpack.c.h.b16 %v34
  %v746 = vunpack.c.l.b16 %v35
  %v747 = vunpack.c.h.b16 %v35
  %v748 = vunpack.c.l.b16 %v36
  %v749 = vunpack.c.h.b16 %v36
  %v750 = vunpack.c.l.b16 %v37
  %v751 = vunpack.c.h.b16 %v37
  %v752 = vunpack.c.l.b16 %v38
  %v753 = vunpack.c.h.b16 %v38
  %v754 = vunpack.c.l.b16 %v39
  %v755 = vunpack.c.h.b16 %v39
  %v756 = vunpack.c.l.b16 %v40
  %v757 = vunpack.c.h.b16 %v40
  %v758 = vunpack.c.l.b16 %v41
  %v759 = vunpack.c.h.b16 %v41
  %v760 = vunpack.c.l.b16 %v42
  %v761 = vunpack.c.h.b16 %v42
  %v762 = vunpack.c.l.b16 %v43
  %v763 = vunpack.c.h.b16 %v43
  %v764 = vunpack.c.l.b16 %v44
  %v765 = vunpack.c.h.b16 %v44
  %v766 = vunpack.c.l.b16 %v45
  %v767 = vunpack.c.h.b16 %v45
  %v768 = vunpack.c.l.b16 %v46
  %v769 = vunpack.c.h.b16 %v46
  %v770 = vunpack.c.l.b16 %v47
  %v771 = vunpack.c.h.b16 %v47
  %v772 = vunpack.c.l.b16 %v48
  %v773 = vunpack.c.h.b16 %v48
  %v774 = vunpack.c.l.b16 %v49
  %v775 = vunpack.c.h.b16 %v49
  %v776 = vunpack.c.l.b16 %v50
  %v777 = vunpack.c.h.b16 %v50
  %v778 = vunpack.c.l.b16 %v51
  %v779 = vunpack.c.h.b16 %v51
  %v780 = vunpack.c.l.b16 %v52
  %v781 = vunpack.c.h.b16 %v52
  %v782 = vunpack.c.l.b16 %v53
  %v783 = vunpack.c.h.b16 %v53
  %v784 = vunpack.c.l.b16 %v54
  %v785 = vunpack.c.h.b16 %v54
  %v786 = vunpack.c.l.b16 %v55
  %v787 = vunpack.c.h.b16 %v55
  %v788 = vunpack.c.l.b16 %v56
  %v789 = vunpack.c.h.b16 %v56
  %v790 = vunpack.c.l.b16 %v57
  %v791 = vunpack.c.h.b16 %v57
  %v792 = vunpack.c.l.b16 %v58
  %v793 = vunpack.c.h.b16 %v58
  %v794 = vunpack.c.l.b16 %v59
  %v795 = vunpack.c.h.b16 %v59
  %v796 = vunpack.c.l.b16 %v60
  %v797 = vunpack.c.h.b16 %v60
  %v798 = vunpack.c.l.b16 %v61
  %v799 = vunpack.c.h.b16 %v61
  %v800 = vunpack.c.l.b16 %v62
  %v801 = vunpack.c.h.b16 %v62
  %v802 = vunpack.c.l.b16 %v63
  %v803 = vunpack.c.h.b16 %v63
  %v804 = vunpack.c.l.b16 %v64
  %v805 = vunpack.c.h.b16 %v64
  %v806 = vunpack.c.l.b16 %v65
  %v807 = vunpack.c.h.b16 %v65
  %v808 = vunpack.c.l.b16 %v66
  %v809 = vunpack.c.h.b16 %v66
  %v810 = vunpack.c.l.b16 %v67
  %v811 = vunpack.c.h.b16 %v67
  %v812 = vunpack.c.l.b16 %v68
  %v813 = vunpack.c.h.b16 %v68
  %v814 = vpack.c.b16 %v742, %v706
  %v815 = vpack.c.b16 %v743, %v707
  %v816 = vpack.c.b16 %v744, %v708
  %v817 = vpack.c.b16 %v745, %v709
  %v818 = vpack.c.b16 %v746, %v710
  %v819 = vpack.c.b16 %v747, %v711
  %v820 = vpack.c.b16 %v748, %v712
  %v821 = vpack.c.b16 %v749, %v713
  %v822 = vpack.c.b16 %v750, %v714
  %v823 = vpack.c.b16 %v751, %v715
  %v824 = vpack.c.b16 %v752, %v716
  %v825 = vpack.c.b16 %v753, %v717
  %v826 = vpack.c.b16 %v754, %v718
  %v827 = vpack.c.b16 %v755, %v719
  %v828 = vpack.c.b16 %v756, %v720
  %v829 = vpack.c.b16 %v757, %v721
  %v830 = vpack.c.b16 %v758, %v722
  %v831 = vpack.c.b16 %v759, %v723
  %v832 = vpack.c.b16 %v760, %v724
  %v833 = vpack.c.b16 %v761, %v725
  %v834 = vpack.c.b16 %v762, %v726
  %v835 = vpack.c.b16 %v763, %v727
  %v836 = vpack.c.b16 %v764, %v728
  %v837 = vpack.c.b16 %v765, %v729
  %v838 = vpack.c.b16 %v766, %v730
  %v839 = vpack.c.b16 %v767, %v731
  %v840 = vpack.c.b16 %v768, %v732
  %v841 = vpack.c.b16 %v769, %v733
  %v842 = vpack.c.b16 %v770, %v734
  %v843 = vpack.c.b16 %v771, %v735
  %v844 = vpack.c.b16 %v772, %v736
  %v845 = vpack.c.b16 %v773, %v737
  %v846 = vpack.c.b16 %v774, %v738
  %v847 = vpack.c.b16 %v775, %v739
  %v848 = vpack.c.b16 %v776, %v740
  %v849 = vpack.c.b16 %v777, %v741
  %v850 = vpack.c.b16 %v778, %v778
  %v851 = vpack.c.b16 %v779, %v779
  %v852 = vpack.c.b16 %v780, %v780
  %v853 = vpack.c.b16 %v781, %v781
  %v854 = vpack.c.b16 %v782, %v782
  %v855 = vpack.c.b16 %v783, %v783
  %v856 = vpack.c.b16 %v784, %v784
  %v857 = vpack.c.b16 %v785, %v785
  %v858 = vpack.c.b16 %v786, %v786
  %v859 = vpack.c.b16 %v787, %v787
  %v860 = vpack.c.b16 %v788, %v788
  %v861 = vpack.c.b16 %v789, %v789
  %v862 = vpack.c.b16 %v790, %v790
  %v863 = vpack.c.b16 %v791, %v791
  %v864 = vpack.c.b16 %v792, %v792
  %v865 = vpack.c.b16 %v793, %v793
  %v866 = vpack.c.b16 %v794, %v794
  %v867 = vpack.c.b16 %v795, %v795
  %v868 = vpack.c.b16 %v796, %v796
  %v869 = vpack.c.b16 %v797, %v797
  %v870 = vpack.c.b16 %v798, %v798
  %v871 = vpack.c.b16 %v799, %v799
  %v872 = vpack.c.b16 %v800, %v800
  %v873 = vpack.c.b16 %v801, %v801
  %v874 = vpack.c.b16 %v802, %v802
  %v875 = vpack.c.b16 %v803, %v803
  %v876 = vpack.c.b16 %v804, %v804
  %v877 = vpack.c.b16 %v805, %v805
  %v878 = vpack.c.b16 %v806, %v806
  %v879 = vpack.c.b16 %v807, %v807
  %v880 = vpack.c.b16 %v808, %v808
  %v881 = vpack.c.b16 %v809, %v809
  %v882 = vpack.c.b16 %v810, %v810
  %v883 = vpack.c.b16 %v811, %v811
  %v884 = vpack.c.b16 %v812, %v812
  %v885 = vpack.c.b16 %v813, %v813
  %v1534 = vunpack.c.l.b16 %v69
  %v1535 = vunpack.c.l.b16 %v70
  %v1536 = vunpack.c.l.b16 %v71
  %v1537 = vunpack.c.l.b16 %v72
  %v1538 = vunpack.c.l.b16 %v73
  %v1539 = vunpack.c.l.b16 %v74
  %v1540 = vunpack.c.l.b16 %v75
  %v1541 = vunpack.c.l.b16 %v76
  %v1542 = vunpack.c.l.b16 %v77
  %v1543 = vunpack.c.l.b16 %v78
  %v1544 = vunpack.c.l.b16 %v79
  %v1545 = vunpack.c.l.b16 %v80
  %v1546 = vunpack.c.l.b16 %v81
  %v1547 = vunpack.c.l.b16 %v82
  %v1548 = vunpack.c.l.b16 %v83
  %v1549 = vunpack.c.l.b16 %v84
  %v1550 = vunpack.c.l.b16 %v85
  %v1551 = vunpack.c.l.b16 %v86
  %v1552 = vunpack.c.l.b16 %v87
  %v1553 = vunpack.c.l.b16 %v88
  %v1554 = vunpack.c.l.b16 %v89
  %v1555 = vunpack.c.l.b16 %v90
  %v1556 = vunpack.c.l.b16 %v91
  %v1557 = vunpack.c.l.b16 %v92
  %v1558 = vunpack.c.l.b16 %v93
  %v1559 = vunpack.c.l.b16 %v94
  %v1560 = vunpack.c.l.b16 %v95
  %v1561 = vunpack.c.l.b16 %v96
  %v1562 = vunpack.c.l.b16 %v97
  %v1563 = vunpack.c.l.b16 %v98
  %v1564 = vunpack.c.l.b16 %v99
  %v1565 = vunpack.c.l.b16 %v100
  %v1566 = vunpack.c.l.b16 %v101
  %v1567 = vunpack.c.l.b16 %v102
  %v1568 = vunpack.c.l.b16 %v103
  %v1569 = vunpack.c.l.b16 %v104
  %v1570 = vunpack.c.l.b16 %v105
  %v1571 = vunpack.c.l.b16 %v106
  %v1572 = vunpack.c.l.b16 %v107
  %v1573 = vunpack.c.l.b16 %v108
  %v1574 = vunpack.c.l.b16 %v109
  %v1575 = vunpack.c.l.b16 %v110
  %v1576 = vunpack.c.l.b16 %v111
  %v1577 = vunpack.c.l.b16 %v112
  %v1578 = vunpack.c.l.b16 %v113
  %v1579 = vunpack.c.l.b16 %v114
  %v1580 = vunpack.c.l.b16 %v115
  %v1581 = vunpack.c.l.b16 %v116
  %v1582 = vunpack.c.l.b16 %v117
  %v1583 = vunpack.c.l.b16 %v118
  %v1584 = vunpack.c.l.b16 %v119
  %v1585 = vunpack.c.l.b16 %v120
  %v1586 = vunpack.c.l.b16 %v121
  %v1587 = vunpack.c.l.b16 %v122
  %v1588 = vunpack.c.l.b16 %v123
  %v1589 = vunpack.c.l.b16 %v124
  %v1590 = vunpack.c.l.b16 %v125
  %v1591 = vunpack.c.l.b16 %v126
  %v1592 = vunpack.c.l.b16 %v127
  %v1593 = vunpack.c.l.b16 %v128
  %v1594 = vunpack.c.l.b16 %v129
  %v1595 = vunpack.c.l.b16 %v130
  %v1596 = vunpack.c.l.b16 %v131
  %v1597 = vunpack.c.l.b16 %v132
  %v1598 = vunpack.c.l.b16 %v133
  %v1599 = vunpack.c.l.b16 %v134
  %v1600 = vunpack.c.l.b16 %v135
  %v1601 = vunpack.c.l.b16 %v136
  %v1602 = vunpack.c.l.b16 %v137
  %v1603 = vunpack.c.l.b16 %v138
  %v1604 = vunpack.c.l.b16 %v139
  %v1605 = vunpack.c.l.b16 %v140
  %v1606 = vunpack.c.l.b16 %v141
  %v1607 = vunpack.c.l.b16 %v142
  %v1608 = vunpack.c.l.b16 %v143
  %v1609 = vunpack.c.l.b16 %v144
  %v1610 = vunpack.c.l.b16 %v145
  %v1611 = vunpack.c.l.b16 %v146
  %v1612 = vunpack.c.l.b16 %v147
  %v1613 = vunpack.c.l.b16 %v148
  %v1614 = vunpack.c.l.b16 %v149
  %v1615 = vunpack.c.l.b16 %v150
  %v1616 = vunpack.c.l.b16 %v151
  %v1617 = vunpack.c.l.b16 %v152
  %v1618 = vunpack.c.l.b16 %v153
  %v1619 = vunpack.c.l.b16 %v154
  %v1620 = vunpack.c.l.b16 %v155
  %v1621 = vunpack.c.l.b16 %v156
  %v1622 = vunpack.c.l.b16 %v157
  %v1623 = vunpack.c.l.b16 %v158
  %v1624 = vunpack.c.l.b16 %v159
  %v1625 = vunpack.c.l.b16 %v160
  %v1626 = vunpack.c.l.b16 %v161
  %v1627 = vunpack.c.l.b16 %v162
  %v1628 = vunpack.c.l.b16 %v163
  %v1629 = vunpack.c.l.b16 %v164
  %v1630 = vunpack.c.l.b16 %v165
  %v1631 = vunpack.c.l.b16 %v166
  %v1632 = vunpack.c.l.b16 %v167
  %v1633 = vunpack.c.l.b16 %v168
  %v1634 = vunpack.c.l.b16 %v169
  %v1635 = vunpack.c.l.b16 %v170
  %v1636 = vunpack.c.l.b16 %v171
  %v1637 = vunpack.c.l.b16 %v172
  %v1638 = vunpack.c.l.b16 %v173
  %v1639 = vunpack.c.l.b16 %v174
  %v1640 = vunpack.c.l.b16 %v175
  %v1641 = vunpack.c.l.b16 %v176
  %v1642 = vunpack.c.l.b16 %v177
  %v1643 = vunpack.c.l.b16 %v178
  %v1644 = vunpack.c.l.b16 %v179
  %v1645 = vunpack.c.l.b16 %v180
  %v1646 = vunpack.c.l.b16 %v181
  %v1647 = vunpack.c.l.b16 %v182
  %v1648 = vunpack.c.l.b16 %v183
  %v1649 = vunpack.c.l.b16 %v184
  %v1650 = vunpack.c.l.b16 %v185
  %v1651 = vunpack.c.l.b16 %v186
  %v1652 = vunpack.c.l.b16 %v187
  %v1653 = vunpack.c.l.b16 %v188
  %v1654 = vunpack.c.l.b16 %v189
  %v1655 = vunpack.c.l.b16 %v190
  %v1656 = vunpack.c.l.b16 %v191
  %v1657 = vunpack.c.l.b16 %v192
  %v1658 = vunpack.c.l.b16 %v193
  %v1659 = vunpack.c.l.b16 %v194
  %v1660 = vunpack.c.l.b16 %v195
  %v1661 = vunpack.c.l.b16 %v196
  %v1662 = vunpack.c.l.b16 %v197
  %v1663 = vunpack.c.l.b16 %v198
  %v1664 = vunpack.c.l.b16 %v199
  %v1665 = vunpack.c.l.b16 %v200
  %v1666 = vunpack.c.l.b16 %v201
  %v1667 = vunpack.c.l.b16 %v202
  %v1668 = vunpack.c.l.b16 %v203
  %v1669 = vunpack.c.l.b16 %v204
  %v1670 = vunpack.c.l.b16 %v205
  %v1671 = vunpack.c.l.b16 %v206
  %v1672 = vunpack.c.l.b16 %v207
  %v1673 = vunpack.c.l.b16 %v208
  %v1674 = vunpack.c.l.b16 %v209
  %v1675 = vunpack.c.l.b16 %v210
  %v1676 = vunpack.c.l.b16 %v211
  %v1677 = vunpack.c.l.b16 %v212
  %v1678 = vunpack.c.l.b16 %v213
  %v1679 = vunpack.c.l.b16 %v214
  %v1680 = vunpack.c.l.b16 %v215
  %v1681 = vunpack.c.l.b16 %v216
  %v1682 = vunpack.c.l.b16 %v217
  %v1683 = vunpack.c.l.b16 %v218
  %v1684 = vunpack.c.l.b16 %v219
  %v1685 = vunpack.c.l.b16 %v220
  %v1686 = vunpack.c.l.b16 %v221
  %v1687 = vunpack.c.l.b16 %v222
  %v1688 = vunpack.c.l.b16 %v223
  %v1689 = vunpack.c.l.b16 %v224
  %v1690 = vunpack.c.l.b16 %v225
  %v1691 = vunpack.c.l.b16 %v226
  %v1692 = vunpack.c.l.b16 %v227
  %v1693 = vunpack.c.l.b16 %v228
  %v1694 = vunpack.c.l.b16 %v229
  %v1695 = vunpack.c.l.b16 %v230
  %v1696 = vunpack.c.l.b16 %v231
  %v1697 = vunpack.c.l.b16 %v232
  %v1698 = vunpack.c.l.b16 %v233
  %v1699 = vunpack.c.l.b16 %v234
  %v1700 = vunpack.c.l.b16 %v235
  %v1701 = vunpack.c.l.b16 %v236
  %v1702 = vunpack.c.l.b16 %v237
  %v1703 = vunpack.c.l.b16 %v238
  %v1704 = vunpack.c.l.b16 %v239
  %v1705 = vunpack.c.l.b16 %v240
  %v1706 = vunpack.c.l.b16 %v241
  %v1707 = vunpack.c.l.b16 %v242
  %v1708 = vunpack.c.l.b16 %v243
  %v1709 = vunpack.c.l.b16 %v244
  %v1710 = vunpack.c.l.b16 %v245
  %v1711 = vunpack.c.l.b16 %v246
  %v1712 = vunpack.c.l.b16 %v247
  %v1713 = vunpack.c.l.b16 %v248
  %v1714 = vunpack.c.l.b16 %v249
  %v1715 = vunpack.c.l.b16 %v250
  %v1716 = vunpack.c.l.b16 %v251
  %v1717 = vunpack.c.l.b16 %v252
  %v1718 = vunpack.c.l.b16 %v253
  %v1719 = vunpack.c.l.b16 %v254
  %v1720 = vunpack.c.l.b16 %v255
  %v1721 = vunpack.c.l.b16 %v256
  %v1722 = vunpack.c.l.b16 %v257
  %v1723 = vunpack.c.l.b16 %v258
  %v1724 = vunpack.c.l.b16 %v259
  %v1725 = vunpack.c.l.b16 %v260
  %v1726 = vunpack.c.l.b16 %v261
  %v1727 = vunpack.c.l.b16 %v262
  %v1728 = vunpack.c.l.b16 %v263
  %v1729 = vunpack.c.l.b16 %v264
  %v1730 = vunpack.c.l.b16 %v265
  %v1731 = vunpack.c.l.b16 %v266
  %v1732 = vunpack.c.l.b16 %v267
  %v1733 = vunpack.c.l.b16 %v268
  %v1734 = vunpack.c.l.b16 %v269
  %v1735 = vunpack.c.l.b16 %v270
  %v1736 = vunpack.c.l.b16 %v271
  %v1737 = vunpack.c.l.b16 %v272
  %v1738 = vunpack.c.l.b16 %v273
  %v1739 = vunpack.c.l.b16 %v274
  %v1740 = vunpack.c.l.b16 %v275
  %v1741 = vunpack.c.l.b16 %v276
  %v1742 = vunpack.c.l.b16 %v277
  %v1743 = vunpack.c.l.b16 %v278
  %v1744 = vunpack.c.l.b16 %v279
  %v1745 = vunpack.c.l.b16 %v280
  %v1746 = vunpack.c.l.b16 %v281
  %v1747 = vunpack.c.l.b16 %v282
  %v1748 = vunpack.c.l.b16 %v283
  %v1749 = vunpack.c.l.b16 %v284
  %v1750 = vunpack.c.l.b16 %v285
  %v1751 = vunpack.c.l.b16 %v286
  %v1752 = vunpack.c.l.b16 %v287
  %v1753 = vunpack.c.l.b16 %v288
  %v1754 = vunpack.c.l.b16 %v289
  %v1755 = vunpack.c.l.b16 %v290
  %v1756 = vunpack.c.l.b16 %v291
  %v1757 = vunpack.c.l.b16 %v292
  %v1758 = vunpack.c.l.b16 %v293
  %v1759 = vunpack.c.l.b16 %v294
  %v1760 = vunpack.c.l.b16 %v295
  %v1761 = vunpack.c.l.b16 %v296
  %v1762 = vunpack.c.l.b16 %v297
  %v1763 = vunpack.c.l.b16 %v298
  %v1764 = vunpack.c.l.b16 %v299
  %v1765 = vunpack.c.l.b16 %v300
  %v1766 = vunpack.c.l.b16 %v301
  %v1767 = vunpack.c.l.b16 %v302
  %v1768 = vunpack.c.l.b16 %v303
  %v1769 = vunpack.c.l.b16 %v304
  %v1770 = vunpack.c.l.b16 %v305
  %v1771 = vunpack.c.l.b16 %v306
  %v1772 = vunpack.c.l.b16 %v307
  %v1773 = vunpack.c.l.b16 %v308
  %v1774 = vunpack.c.l.b16 %v309
  %v1775 = vunpack.c.l.b16 %v310
  %v1776 = vunpack.c.l.b16 %v311
  %v1777 = vunpack.c.l.b16 %v312
  %v1778 = vunpack.c.l.b16 %v313
  %v1779 = vunpack.c.l.b16 %v314
  %v1780 = vunpack.c.l.b16 %v315
  %v1781 = vunpack.c.l.b16 %v316
  %v1782 = vunpack.c.l.b16 %v317
  %v1783 = vunpack.c.l.b16 %v318
  %v1784 = vunpack.c.l.b16 %v319
  %v1785 = vunpack.c.l.b16 %v320
  %v1786 = vunpack.c.l.b16 %v321
  %v1787 = vunpack.c.l.b16 %v322
  %v1788 = vunpack.c.l.b16 %v323
  %v1789 = vunpack.c.l.b16 %v324
  %v1790 = vunpack.c.l.b16 %v325
  %v1791 = vunpack.c.l.b16 %v326
  %v1792 = vunpack.c.l.b16 %v327
  %v1793 = vunpack.c.l.b16 %v328
  %v1794 = vunpack.c.l.b16 %v329
  %v1795 = vunpack.c.l.b16 %v330
  %v1796 = vunpack.c.l.b16 %v331
  %v1797 = vunpack.c.l.b16 %v332
  %v1798 = vunpack.c.l.b16 %v333
  %v1799 = vunpack.c.l.b16 %v334
  %v1800 = vunpack.c.l.b16 %v335
  %v1801 = vunpack.c.l.b16 %v336
  %v1802 = vunpack.c.l.b16 %v337
  %v1803 = vunpack.c.l.b16 %v338
  %v1804 = vunpack.c.l.b16 %v339
  %v1805 = vunpack.c.l.b16 %v340
  %v1806 = vunpack.c.l.b16 %v341
  %v1807 = vunpack.c.l.b16 %v342
  %v1808 = vunpack.c.l.b16 %v343
  %v1809 = vunpack.c.l.b16 %v344
  %v1810 = vunpack.c.l.b16 %v345
  %v1811 = vunpack.c.l.b16 %v346
  %v1812 = vunpack.c.l.b16 %v347
  %v1813 = vunpack.c.l.b16 %v348
  %v1814 = vunpack.c.l.b16 %v349
  %v1815 = vunpack.c.l.b16 %v350
  %v1816 = vunpack.c.l.b16 %v351
  %v1817 = vunpack.c.l.b16 %v352
  %v1818 = vunpack.c.l.b16 %v353
  %v1819 = vunpack.c.l.b16 %v354
  %v1820 = vunpack.c.l.b16 %v355
  %v1821 = vunpack.c.l.b16 %v356
  %v1822 = vunpack.c.l.b16 %v357
  %v1823 = vunpack.c.l.b16 %v358
  %v1824 = vunpack.c.l.b16 %v359
  %v1825 = vunpack.c.l.b16 %v360
  %v1826 = vunpack.c.l.b16 %v361
  %v1827 = vunpack.c.l.b16 %v362
  %v1828 = vunpack.c.l.b16 %v363
  %v1829 = vunpack.c.l.b16 %v364
  %v1830 = vunpack.c.l.b16 %v365
  %v1831 = vunpack.c.l.b16 %v366
  %v1832 = vunpack.c.l.b16 %v367
  %v1833 = vunpack.c.l.b16 %v368
  %v1834 = vunpack.c.l.b16 %v369
  %v1835 = vunpack.c.l.b16 %v370
  %v1836 = vunpack.c.l.b16 %v371
  %v1837 = vunpack.c.l.b16 %v372
  %v1838 = vunpack.c.l.b16 %v373
  %v1839 = vunpack.c.l.b16 %v374
  %v1840 = vunpack.c.l.b16 %v375
  %v1841 = vunpack.c.l.b16 %v376
  %v1842 = vunpack.c.l.b16 %v377
  %v1843 = vunpack.c.l.b16 %v378
  %v1844 = vunpack.c.l.b16 %v379
  %v1845 = vunpack.c.l.b16 %v380
  %v1846 = vunpack.c.l.b16 %v381
  %v1847 = vunpack.c.l.b16 %v382
  %v1848 = vunpack.c.l.b16 %v383
  %v1849 = vunpack.c.l.b16 %v384
  %v1850 = vunpack.c.l.b16 %v385
  %v1851 = vunpack.c.l.b16 %v386
  %v1852 = vunpack.c.l.b16 %v387
  %v1853 = vunpack.c.l.b16 %v388
  %v1854 = vunpack.c.l.b16 %v389
  %v1855 = vunpack.c.l.b16 %v390
  %v1856 = vunpack.c.l.b16 %v391
  %v1857 = vunpack.c.l.b16 %v392
  %v1858 = vunpack.c.l.b16 %v393
  %v1859 = vunpack.c.l.b16 %v394
  %v1860 = vunpack.c.l.b16 %v395
  %v1861 = vunpack.c.l.b16 %v396
  %v1862 = vunpack.c.l.b16 %v397
  %v1863 = vunpack.c.l.b16 %v398
  %v1864 = vunpack.c.l.b16 %v399
  %v1865 = vunpack.c.l.b16 %v400
  %v1866 = vunpack.c.l.b16 %v401
  %v1867 = vunpack.c.l.b16 %v402
  %v1868 = vunpack.c.l.b16 %v403
  %v1869 = vunpack.c.l.b16 %v404
  %v1870 = vunpack.c.l.b16 %v405
  %v1871 = vunpack.c.l.b16 %v406
  %v1872 = vunpack.c.l.b16 %v407
  %v1873 = vunpack.c.l.b16 %v408
  %v1874 = vunpack.c.l.b16 %v409
  %v1875 = vunpack.c.l.b16 %v410
  %v1876 = vunpack.c.l.b16 %v411
  %v1877 = vunpack.c.l.b16 %v412
  %v1878 = vunpack.c.l.b16 %v413
  %v1879 = vunpack.c.l.b16 %v414
  %v1880 = vunpack.c.l.b16 %v415
  %v1881 = vunpack.c.l.b16 %v416
  %v1882 = vunpack.c.l.b16 %v417
  %v1883 = vunpack.c.l.b16 %v418
  %v1884 = vunpack.c.l.b16 %v419
  %v1885 = vunpack.c.l.b16 %v420
  %v1886 = vunpack.c.l.b16 %v421
  %v1887 = vunpack.c.l.b16 %v422
  %v1888 = vunpack.c.l.b16 %v423
  %v1889 = vunpack.c.l.b16 %v424
  %v1890 = vunpack.c.l.b16 %v425
  %v1891 = vunpack.c.l.b16 %v426
  %v1892 = vunpack.c.l.b16 %v427
  %v1893 = vunpack.c.l.b16 %v428
  %v1894 = vunpack.c.l.b16 %v429
  %v1895 = vunpack.c.l.b16 %v430
  %v1896 = vunpack.c.l.b16 %v431
  %v1897 = vunpack.c.l.b16 %v432
  %v1898 = vunpack.c.l.b16 %v433
  %v1899 = vunpack.c.l.b16 %v434
  %v1900 = vunpack.c.l.b16 %v435
  %v1901 = vunpack.c.l.b16 %v436
  %v1902 = vunpack.c.l.b16 %v437
  %v1903 = vunpack.c.l.b16 %v438
  %v1904 = vunpack.c.l.b16 %v439
  %v1905 = vunpack.c.l.b16 %v440
  %v1906 = vunpack.c.l.b16 %v441
  %v1907 = vunpack.c.l.b16 %v442
  %v1908 = vunpack.c.l.b16 %v443
  %v1909 = vunpack.c.l.b16 %v444
  %v1910 = vunpack.c.l.b16 %v445
  %v1911 = vunpack.c.l.b16 %v446
  %v1912 = vunpack.c.l.b16 %v447
  %v1913 = vunpack.c.l.b16 %v448
  %v1914 = vunpack.c.l.b16 %v449
  %v1915 = vunpack.c.l.b16 %v450
  %v1916 = vunpack.c.l.b16 %v451
  %v1917 = vunpack.c.l.b16 %v452
  %v1918 = vunpack.c.l.b16 %v453
  %v1919 = vunpack.c.l.b16 %v454
  %v1920 = vunpack.c.l.b16 %v455
  %v1921 = vunpack.c.l.b16 %v456
  %v1922 = vunpack.c.l.b16 %v457
  %v1923 = vunpack.c.l.b16 %v458
  %v1924 = vunpack.c.l.b16 %v459
  %v1925 = vunpack.c.l.b16 %v460
  %v1926 = vunpack.c.l.b16 %v461
  %v1927 = vunpack.c.l.b16 %v462
  %v1928 = vunpack.c.l.b16 %v463
  %v1929 = vunpack.c.l.b16 %v464
  %v1930 = vunpack.c.l.b16 %v465
  %v1931 = vunpack.c.l.b16 %v466
  %v1932 = vunpack.c.l.b16 %v467
  %v1933 = vunpack.c.l.b16 %v468
  %v1934 = vunpack.c.l.b16 %v469
  %v1935 = vunpack.c.l.b16 %v470
  %v1936 = vunpack.c.l.b16 %v471
  %v1937 = vunpack.c.l.b16 %v472
  %v1938 = vunpack.c.l.b16 %v473
  %v1939 = vunpack.c.l.b16 %v474
  %v1940 = vunpack.c.l.b16 %v475
  %v1941 = vunpack.c.l.b16 %v476
  %v1942 = vunpack.c.l.b16 %v477
  %v1943 = vunpack.c.l.b16 %v478
  %v1944 = vunpack.c.l.b16 %v479
  %v1945 = vunpack.c.l.b16 %v480
  %v1946 = vunpack.c.l.b16 %v481
  %v1947 = vunpack.c.l.b16 %v482
  %v1948 = vunpack.c.l.b16 %v483
  %v1949 = vunpack.c.l.b16 %v484
  %v1950 = vunpack.c.l.b16 %v485
  %v1951 = vunpack.c.l.b16 %v486
  %v1952 = vunpack.c.l.b16 %v487
  %v1953 = vunpack.c.l.b16 %v488
  %v1954 = vunpack.c.l.b16 %v489
  %v1955 = vunpack.c.l.b16 %v490
  %v1956 = vunpack.c.l.b16 %v491
  %v1957 = vunpack.c.l.b16 %v492
  %v1958 = vunpack.c.l.b16 %v493
  %v1959 = vunpack.c.l.b16 %v494
  %v1960 = vunpack.c.l.b16 %v495
  %v1961 = vunpack.c.l.b16 %v496
  %v1962 = vunpack.c.l.b16 %v497
  %v1963 = vunpack.c.l.b16 %v498
  %v1964 = vunpack.c.l.b16 %v499
  %v1965 = vunpack.c.l.b16 %v500
  %v1966 = vunpack.c.l.b16 %v501
  %v1967 = vunpack.c.l.b16 %v502
  %v1968 = vunpack.c.l.b16 %v503
  %v1969 = vunpack.c.l.b16 %v504
  %v1970 = vunpack.c.l.b16 %v505
  %v1971 = vunpack.c.l.b16 %v506
  %v1972 = vunpack.c.l.b16 %v507
  %v1973 = vunpack.c.l.b16 %v508
  %v1974 = vunpack.c.l.b16 %v509
  %v1975 = vunpack.c.l.b16 %v510
  %v1976 = vunpack.c.l.b16 %v511
  %v1977 = vunpack.c.l.b16 %v512
  %v1978 = vunpack.c.l.b16 %v513
  %v1979 = vunpack.c.l.b16 %v514
  %v1980 = vunpack.c.l.b16 %v515
  %v1981 = vunpack.c.l.b16 %v516
  %v1982 = vunpack.c.l.b16 %v517
  %v1983 = vunpack.c.l.b16 %v518
  %v1984 = vunpack.c.l.b16 %v519
  %v1985 = vunpack.c.l.b16 %v520
  %v1986 = vunpack.c.l.b16 %v521
  %v1987 = vunpack.c.l.b16 %v522
  %v1988 = vunpack.c.l.b16 %v523
  %v1989 = vunpack.c.l.b16 %v524
  %v1990 = vunpack.c.l.b16 %v525
  %v1991 = vunpack.c.l.b16 %v526
  %v1992 = vunpack.c.l.b16 %v527
  %v1993 = vunpack.c.l.b16 %v528
  %v1994 = vunpack.c.l.b16 %v529
  %v1995 = vunpack.c.l.b16 %v530
  %v1996 = vunpack.c.l.b16 %v531
  %v1997 = vunpack.c.l.b16 %v532
  %v1998 = vunpack.c.l.b16 %v533
  %v1999 = vunpack.c.l.b16 %v534
  %v2000 = vunpack.c.l.b16 %v535
  %v2001 = vunpack.c.l.b16 %v536
  %v2002 = vunpack.c.l.b16 %v537
  %v2003 = vunpack.c.l.b16 %v538
  %v2004 = vunpack.c.l.b16 %v539
  %v2005 = vunpack.c.l.b16 %v540
  %v2006 = vunpack.c.l.b16 %v541
  %v2007 = vunpack.c.l.b16 %v542
  %v2008 = vunpack.c.l.b16 %v543
  %v2009 = vunpack.c.l.b16 %v544
  %v2010 = vunpack.c.l.b16 %v545
  %v2011 = vunpack.c.l.b16 %v546
  %v2012 = vunpack.c.l.b16 %v547
  %v2013 = vunpack.c.l.b16 %v548
  %v2014 = vunpack.c.l.b16 %v549
  %v2015 = vunpack.c.l.b16 %v550
  %v2016 = vunpack.c.l.b16 %v551
  %v2017 = vunpack.c.l.b16 %v552
  %v2018 = vunpack.c.l.b16 %v553
  %v2019 = vunpack.c.l.b16 %v554
  %v2020 = vunpack.c.l.b16 %v555
  %v2021 = vunpack.c.l.b16 %v556
  %v2022 = vunpack.c.l.b16 %v557
  %v2023 = vunpack.c.l.b16 %v558
  %v2024 = vunpack.c.l.b16 %v559
  %v2025 = vunpack.c.l.b16 %v560
  %v2026 = vunpack.c.l.b16 %v561
  %v2027 = vunpack.c.l.b16 %v562
  %v2028 = vunpack.c.l.b16 %v563
  %v2029 = vunpack.c.l.b16 %v564
  %v2030 = vunpack.c.l.b16 %v565
  %v2031 = vunpack.c.l.b16 %v566
  %v2032 = vunpack.c.l.b16 %v567
  %v2033 = vunpack.c.l.b16 %v568
  %v2034 = vunpack.c.l.b16 %v569
  %v2035 = vunpack.c.l.b16 %v570
  %v2036 = vunpack.c.l.b16 %v571
  %v2037 = vunpack.c.l.b16 %v572
  %v2038 = vunpack.c.l.b16 %v573
  %v2039 = vunpack.c.l.b16 %v574
  %v2040 = vunpack.c.l.b16 %v575
  %v2041 = vunpack.c.l.b16 %v576
  %v2042 = vunpack.c.l.b16 %v577
  %v2043 = vunpack.c.l.b16 %v578
  %v2044 = vunpack.c.l.b16 %v579
  %v2045 = vunpack.c.l.b16 %v580
  %v2046 = vunpack.c.l.b16 %v581
  %v2047 = vunpack.c.l.b16 %v582
  %v2048 = vunpack.c.l.b16 %v583
  %v2049 = vunpack.c.l.b16 %v584
  %v2050 = vunpack.c.l.b16 %v585
  %v2051 = vunpack.c.l.b16 %v586
  %v2052 = vunpack.c.l.b16 %v587
  %v2053 = vunpack.c.l.b16 %v588
  %v2054 = vunpack.c.l.b16 %v589
  %v2055 = vunpack.c.l.b16 %v590
  %v2056 = vunpack.c.l.b16 %v591
  %v2057 = vunpack.c.l.b16 %v592
  %v2058 = vunpack.c.l.b16 %v593
  %v2059 = vunpack.c.l.b16 %v594
  %v2060 = vunpack.c.l.b16 %v595
  %v2061 = vunpack.c.l.b16 %v596
  %v2062 = vunpack.c.l.b16 %v597
  %v2063 = vunpack.c.l.b16 %v598
  %v2064 = vunpack.c.l.b16 %v599
  %v2065 = vunpack.c.l.b16 %v600
  %v2066 = vunpack.c.l.b16 %v601
  %v2067 = vunpack.c.l.b16 %v602
  %v2068 = vunpack.c.l.b16 %v603
  %v2069 = vunpack.c.l.b16 %v604
  %v2070 = vunpack.c.l.b16 %v605
  %v2071 = vunpack.c.l.b16 %v606
  %v2072 = vunpack.c.l.b16 %v607
  %v2073 = vunpack.c.l.b16 %v608
  %v2074 = vunpack.c.l.b16 %v609
  %v2075 = vunpack.c.l.b16 %v610
  %v2076 = vunpack.c.l.b16 %v611
  %v2077 = vunpack.c.l.b16 %v612
  %v2078 = vunpack.c.l.b16 %v613
  %v2079 = vunpack.c.l.b16 %v614
  %v2080 = vunpack.c.l.b16 %v615
  %v2081 = vunpack.c.l.b16 %v616
  %v2082 = vunpack.c.l.b16 %v617
  %v2083 = vunpack.c.l.b16 %v618
  %v2084 = vunpack.c.l.b16 %v619
  %v2085 = vunpack.c.l.b16 %v620
  %v2086 = vunpack.c.l.b16 %v621
  %v2087 = vunpack.c.l.b16 %v622
  %v2088 = vunpack.c.l.b16 %v623
  %v2089 = vunpack.c.l.b16 %v624
  %v2090 = vunpack.c.l.b16 %v625
  %v2091 = vunpack.c.l.b16 %v626
  %v2092 = vunpack.c.l.b16 %v627
  %v2093 = vunpack.c.l.b16 %v628
  %v2094 = vunpack.c.l.b16 %v629
  %v2095 = vunpack.c.l.b16 %v630
  %v2096 = vunpack.c.l.b16 %v631
  %v2097 = vunpack.c.l.b16 %v632
  %v2098 = vunpack.c.l.b16 %v633
  %v2099 = vunpack.c.l.b16 %v634
  %v2100 = vunpack.c.l.b16 %v635
  %v2101 = vunpack.c.l.b16 %v636
  %v2102 = vunpack.c.l.b16 %v637
  %v2103 = vunpack.c.l.b16 %v638
  %v2104 = vunpack.c.l.b16 %v639
  %v2105 = vunpack.c.l.b16 %v640
  %v2106 = vunpack.c.l.b16 %v641
  %v2107 = vunpack.c.l.b16 %v642
  %v2108 = vunpack.c.l.b16 %v643
  %v2109 = vunpack.c.l.b16 %v644
  %v2110 = vpack.c.b16 %v1535, %v1534
  %v2111 = vpack.c.b16 %v1537, %v1536
  %v2112 = vpack.c.b16 %v1539, %v1538
  %v2113 = vpack.c.b16 %v1541, %v1540
  %v2114 = vpack.c.b16 %v1543, %v1542
  %v2115 = vpack.c.b16 %v1545, %v1544
  %v2116 = vpack.c.b16 %v1547, %v1546
  %v2117 = vpack.c.b16 %v1549, %v1548
  %v2118 = vpack.c.b16 %v1551, %v1550
  %v2119 = vpack.c.b16 %v1553, %v1552
  %v2120 = vpack.c.b16 %v1555, %v1554
  %v2121 = vpack.c.b16 %v1557, %v1556
  %v2122 = vpack.c.b16 %v1559, %v1558
  %v2123 = vpack.c.b16 %v1561, %v1560
  %v2124 = vpack.c.b16 %v1563, %v1562
  %v2125 = vpack.c.b16 %v1565, %v1564
  %v2126 = vpack.c.b16 %v1567, %v1566
  %v2127 = vpack.c.b16 %v1569, %v1568
  %v2128 = vpack.c.b16 %v1571, %v1570
  %v2129 = vpack.c.b16 %v1573, %v1572
  %v2130 = vpack.c.b16 %v1575, %v1574
  %v2131 = vpack.c.b16 %v1577, %v1576
  %v2132 = vpack.c.b16 %v1579, %v1578
  %v2133 = vpack.c.b16 %v1581, %v1580
  %v2134 = vpack.c.b16 %v1583, %v1582
  %v2135 = vpack.c.b16 %v1585, %v1584
  %v2136 = vpack.c.b16 %v1587, %v1586
  %v2137 = vpack.c.b16 %v1589, %v1588
  %v2138 = vpack.c.b16 %v1591, %v1590
  %v2139 = vpack.c.b16 %v1593, %v1592
  %v2140 = vpack.c.b16 %v1595, %v1594
  %v2141 = vpack.c.b16 %v1597, %v1596
  %v2142 = vpack.c.b16 %v1599, %v1598
  %v2143 = vpack.c.b16 %v1601, %v1600
  %v2144 = vpack.c.b16 %v1603, %v1602
  %v2145 = vpack.c.b16 %v1605, %v1604
  %v2146 = vpack.c.b16 %v1607, %v1606
  %v2147 = vpack.c.b16 %v1609, %v1608
  %v2148 = vpack.c.b16 %v1611, %v1610
  %v2149 = vpack.c.b16 %v1613, %v1612
  %v2150 = vpack.c.b16 %v1615, %v1614
  %v2151 = vpack.c.b16 %v1617, %v1616
  %v2152 = vpack.c.b16 %v1619, %v1618
  %v2153 = vpack.c.b16 %v1621, %v1620
  %v2154 = vpack.c.b16 %v1623, %v1622
  %v2155 = vpack.c.b16 %v1625, %v1624
  %v2156 = vpack.c.b16 %v1627, %v1626
  %v2157 = vpack.c.b16 %v1629, %v1628
  %v2158 = vpack.c.b16 %v1631, %v1630
  %v2159 = vpack.c.b16 %v1633, %v1632
  %v2160 = vpack.c.b16 %v1635, %v1634
  %v2161 = vpack.c.b16 %v1637, %v1636
  %v2162 = vpack.c.b16 %v1639, %v1638
  %v2163 = vpack.c.b16 %v1641, %v1640
  %v2164 = vpack.c.b16 %v1643, %v1642
  %v2165 = vpack.c.b16 %v1645, %v1644
  %v2166 = vpack.c.b16 %v1647, %v1646
  %v2167 = vpack.c.b16 %v1649, %v1648
  %v2168 = vpack.c.b16 %v1651, %v1650
  %v2169 = vpack.c.b16 %v1653, %v1652
  %v2170 = vpack.c.b16 %v1655, %v1654
  %v2171 = vpack.c.b16 %v1657, %v1656
  %v2172 = vpack.c.b16 %v1659, %v1658
  %v2173 = vpack.c.b16 %v1661, %v1660
  %v2174 = vpack.c.b16 %v1663, %v1662
  %v2175 = vpack.c.b16 %v1665, %v1664
  %v2176 = vpack.c.b16 %v1667, %v1666
  %v2177 = vpack.c.b16 %v1669, %v1668
  %v2178 = vpack.c.b16 %v1671, %v1670
  %v2179 = vpack.c.b16 %v1673, %v1672
  %v2180 = vpack.c.b16 %v1675, %v1674
  %v2181 = vpack.c.b16 %v1677, %v1676
  %v2182 = vpack.c.b16 %v1679, %v1678
  %v2183 = vpack.c.b16 %v1681, %v1680
  %v2184 = vpack.c.b16 %v1683, %v1682
  %v2185 = vpack.c.b16 %v1685, %v1684
  %v2186 = vpack.c.b16 %v1687, %v1686
  %v2187 = vpack.c.b16 %v1689, %v1688
  %v2188 = vpack.c.b16 %v1691, %v1690
  %v2189 = vpack.c.b16 %v1693, %v1692
  %v2190 = vpack.c.b16 %v1695, %v1694
  %v2191 = vpack.c.b16 %v1697, %v1696
  %v2192 = vpack.c.b16 %v1699, %v1698
  %v2193 = vpack.c.b16 %v1701, %v1700
  %v2194 = vpack.c.b16 %v1703, %v1702
  %v2195 = vpack.c.b16 %v1705, %v1704
  %v2196 = vpack.c.b16 %v1707, %v1706
  %v2197 = vpack.c.b16 %v1709, %v1708
  %v2198 = vpack.c.b16 %v1711, %v1710
  %v2199 = vpack.c.b16 %v1713, %v1712
  %v2200 = vpack.c.b16 %v1715, %v1714
  %v2201 = vpack.c.b16 %v1717, %v1716
  %v2202 = vpack.c.b16 %v1719, %v1718
  %v2203 = vpack.c.b16 %v1721, %v1720
  %v2204 = vpack.c.b16 %v1723, %v1722
  %v2205 = vpack.c.b16 %v1725, %v1724
  %v2206 = vpack.c.b16 %v1727, %v1726
  %v2207 = vpack.c.b16 %v1729, %v1728
  %v2208 = vpack.c.b16 %v1731, %v1730
  %v2209 = vpack.c.b16 %v1733, %v1732
  %v2210 = vpack.c.b16 %v1735, %v1734
  %v2211 = vpack.c.b16 %v1737, %v1736
  %v2212 = vpack.c.b16 %v1739, %v1738
  %v2213 = vpack.c.b16 %v1741, %v1740
  %v2214 = vpack.c.b16 %v1743, %v1742
  %v2215 = vpack.c.b16 %v1745, %v1744
  %v2216 = vpack.c.b16 %v1747, %v1746
  %v2217 = vpack.c.b16 %v1749, %v1748
  %v2218 = vpack.c.b16 %v1751, %v1750
  %v2219 = vpack.c.b16 %v1753, %v1752
  %v2220 = vpack.c.b16 %v1755, %v1754
  %v2221 = vpack.c.b16 %v1757, %v1756
  %v2222 = vpack.c.b16 %v1759, %v1758
  %v2223 = vpack.c.b16 %v1761, %v1760
  %v2224 = vpack.c.b16 %v1763, %v1762
  %v2225 = vpack.c.b16 %v1765, %v1764
  %v2226 = vpack.c.b16 %v1767, %v1766
  %v2227 = vpack.c.b16 %v1769, %v1768
  %v2228 = vpack.c.b16 %v1771, %v1770
  %v2229 = vpack.c.b16 %v1773, %v1772
  %v2230 = vpack.c.b16 %v1775, %v1774
  %v2231 = vpack.c.b16 %v1777, %v1776
  %v2232 = vpack.c.b16 %v1779, %v1778
  %v2233 = vpack.c.b16 %v1781, %v1780
  %v2234 = vpack.c.b16 %v1783, %v1782
  %v2235 = vpack.c.b16 %v1785, %v1784
  %v2236 = vpack.c.b16 %v1787, %v1786
  %v2237 = vpack.c.b16 %v1789, %v1788
  %v2238 = vpack.c.b16 %v1791, %v1790
  %v2239 = vpack.c.b16 %v1793, %v1792
  %v2240 = vpack.c.b16 %v1795, %v1794
  %v2241 = vpack.c.b16 %v1797, %v1796
  %v2242 = vpack.c.b16 %v1799, %v1798
  %v2243 = vpack.c.b16 %v1801, %v1800
  %v2244 = vpack.c.b16 %v1803, %v1802
  %v2245 = vpack.c.b16 %v1805, %v1804
  %v2246 = vpack.c.b16 %v1807, %v1806
  %v2247 = vpack.c.b16 %v1809, %v1808
  %v2248 = vpack.c.b16 %v1811, %v1810
  %v2249 = vpack.c.b16 %v1813, %v1812
  %v2250 = vpack.c.b16 %v1815, %v1814
  %v2251 = vpack.c.b16 %v1817, %v1816
  %v2252 = vpack.c.b16 %v1819, %v1818
  %v2253 = vpack.c.b16 %v1821, %v1820
  %v2254 = vpack.c.b16 %v1823, %v1822
  %v2255 = vpack.c.b16 %v1825, %v1824
  %v2256 = vpack.c.b16 %v1827, %v1826
  %v2257 = vpack.c.b16 %v1829, %v1828
  %v2258 = vpack.c.b16 %v1831, %v1830
  %v2259 = vpack.c.b16 %v1833, %v1832
  %v2260 = vpack.c.b16 %v1835, %v1834
  %v2261 = vpack.c.b16 %v1837, %v1836
  %v2262 = vpack.c.b16 %v1839, %v1838
  %v2263 = vpack.c.b16 %v1841, %v1840
  %v2264 = vpack.c.b16 %v1843, %v1842
  %v2265 = vpack.c.b16 %v1845, %v1844
  %v2266 = vpack.c.b16 %v1847, %v1846
  %v2267 = vpack.c.b16 %v1849, %v1848
  %v2268 = vpack.c.b16 %v1851, %v1850
  %v2269 = vpack.c.b16 %v1853, %v1852
  %v2270 = vpack.c.b16 %v1855, %v1854
  %v2271 = vpack.c.b16 %v1857, %v1856
  %v2272 = vpack.c.b16 %v1859, %v1858
  %v2273 = vpack.c.b16 %v1861, %v1860
  %v2274 = vpack.c.b16 %v1863, %v1862
  %v2275 = vpack.c.b16 %v1865, %v1864
  %v2276 = vpack.c.b16 %v1867, %v1866
  %v2277 = vpack.c.b16 %v1869, %v1868
  %v2278 = vpack.c.b16 %v1871, %v1870
  %v2279 = vpack.c.b16 %v1873, %v1872
  %v2280 = vpack.c.b16 %v1875, %v1874
  %v2281 = vpack.c.b16 %v1877, %v1876
  %v2282 = vpack.c.b16 %v1879, %v1878
  %v2283 = vpack.c.b16 %v1881, %v1880
  %v2284 = vpack.c.b16 %v1883, %v1882
  %v2285 = vpack.c.b16 %v1885, %v1884
  %v2286 = vpack.c.b16 %v1887, %v1886
  %v2287 = vpack.c.b16 %v1889, %v1888
  %v2288 = vpack.c.b16 %v1891, %v1890
  %v2289 = vpack.c.b16 %v1893, %v1892
  %v2290 = vpack.c.b16 %v1895, %v1894
  %v2291 = vpack.c.b16 %v1897, %v1896
  %v2292 = vpack.c.b16 %v1899, %v1898
  %v2293 = vpack.c.b16 %v1901, %v1900
  %v2294 = vpack.c.b16 %v1903, %v1902
  %v2295 = vpack.c.b16 %v1905, %v1904
  %v2296 = vpack.c.b16 %v1907, %v1906
  %v2297 = vpack.c.b16 %v1909, %v1908
  %v2298 = vpack.c.b16 %v1911, %v1910
  %v2299 = vpack.c.b16 %v1913, %v1912
  %v2300 = vpack.c.b16 %v1915, %v1914
  %v2301 = vpack.c.b16 %v1917, %v1916
  %v2302 = vpack.c.b16 %v1919, %v1918
  %v2303 = vpack.c.b16 %v1921, %v1920
  %v2304 = vpack.c.b16 %v1923, %v1922
  %v2305 = vpack.c.b16 %v1925, %v1924
  %v2306 = vpack.c.b16 %v1927, %v1926
  %v2307 = vpack.c.b16 %v1929, %v1928
  %v2308 = vpack.c.b16 %v1931, %v1930
  %v2309 = vpack.c.b16 %v1933, %v1932
  %v2310 = vpack.c.b16 %v1935, %v1934
  %v2311 = vpack.c.b16 %v1937, %v1936
  %v2312 = vpack.c.b16 %v1939, %v1938
  %v2313 = vpack.c.b16 %v1941, %v1940
  %v2314 = vpack.c.b16 %v1943, %v1942
  %v2315 = vpack.c.b16 %v1945, %v1944
  %v2316 = vpack.c.b16 %v1947, %v1946
  %v2317 = vpack.c.b16 %v1949, %v1948
  %v2318 = vpack.c.b16 %v1951, %v1950
  %v2319 = vpack.c.b16 %v1953, %v1952
  %v2320 = vpack.c.b16 %v1955, %v1954
  %v2321 = vpack.c.b16 %v1957, %v1956
  %v2322 = vpack.c.b16 %v1959, %v1958
  %v2323 = vpack.c.b16 %v1961, %v1960
  %v2324 = vpack.c.b16 %v1963, %v1962
  %v2325 = vpack.c.b16 %v1965, %v1964
  %v2326 = vpack.c.b16 %v1967, %v1966
  %v2327 = vpack.c.b16 %v1969, %v1968
  %v2328 = vpack.c.b16 %v1971, %v1970
  %v2329 = vpack.c.b16 %v1973, %v1972
  %v2330 = vpack.c.b16 %v1975, %v1974
  %v2331 = vpack.c.b16 %v1977, %v1976
  %v2332 = vpack.c.b16 %v1979, %v1978
  %v2333 = vpack.c.b16 %v1981, %v1980
  %v2334 = vpack.c.b16 %v1983, %v1982
  %v2335 = vpack.c.b16 %v1985, %v1984
  %v2336 = vpack.c.b16 %v1987, %v1986
  %v2337 = vpack.c.b16 %v1989, %v1988
  %v2338 = vpack.c.b16 %v1991, %v1990
  %v2339 = vpack.c.b16 %v1993, %v1992
  %v2340 = vpack.c.b16 %v1995, %v1994
  %v2341 = vpack.c.b16 %v1997, %v1996
  %v2342 = vpack.c.b16 %v1999, %v1998
  %v2343 = vpack.c.b16 %v2001, %v2000
  %v2344 = vpack.c.b16 %v2003, %v2002
  %v2345 = vpack.c.b16 %v2005, %v2004
  %v2346 = vpack.c.b16 %v2007, %v2006
  %v2347 = vpack.c.b16 %v2009, %v2008
  %v2348 = vpack.c.b16 %v2011, %v2010
  %v2349 = vpack.c.b16 %v2013, %v2012
  %v2350 = vpack.c.b16 %v2015, %v2014
  %v2351 = vpack.c.b16 %v2017, %v2016
  %v2352 = vpack.c.b16 %v2019, %v2018
  %v2353 = vpack.c.b16 %v2021, %v2020
  %v2354 = vpack.c.b16 %v2023, %v2022
  %v2355 = vpack.c.b16 %v2025, %v2024
  %v2356 = vpack.c.b16 %v2027, %v2026
  %v2357 = vpack.c.b16 %v2029, %v2028
  %v2358 = vpack.c.b16 %v2031, %v2030
  %v2359 = vpack.c.b16 %v2033, %v2032
  %v2360 = vpack.c.b16 %v2035, %v2034
  %v2361 = vpack.c.b16 %v2037, %v2036
  %v2362 = vpack.c.b16 %v2039, %v2038
  %v2363 = vpack.c.b16 %v2041, %v2040
  %v2364 = vpack.c.b16 %v2043, %v2042
  %v2365 = vpack.c.b16 %v2045, %v2044
  %v2366 = vpack.c.b16 %v2047, %v2046
  %v2367 = vpack.c.b16 %v2049, %v2048
  %v2368 = vpack.c.b16 %v2051, %v2050
  %v2369 = vpack.c.b16 %v2053, %v2052
  %v2370 = vpack.c.b16 %v2055, %v2054
  %v2371 = vpack.c.b16 %v2057, %v2056
  %v2372 = vpack.c.b16 %v2059, %v2058
  %v2373 = vpack.c.b16 %v2061, %v2060
  %v2374 = vpack.c.b16 %v2063, %v2062
  %v2375 = vpack.c.b16 %v2065, %v2064
  %v2376 = vpack.c.b16 %v2067, %v2066
  %v2377 = vpack.c.b16 %v2069, %v2068
  %v2378 = vpack.c.b16 %v2071, %v2070
  %v2379 = vpack.c.b16 %v2073, %v2072
  %v2380 = vpack.c.b16 %v2075, %v2074
  %v2381 = vpack.c.b16 %v2077, %v2076
  %v2382 = vpack.c.b16 %v2079, %v2078
  %v2383 = vpack.c.b16 %v2081, %v2080
  %v2384 = vpack.c.b16 %v2083, %v2082
  %v2385 = vpack.c.b16 %v2085, %v2084
  %v2386 = vpack.c.b16 %v2087, %v2086
  %v2387 = vpack.c.b16 %v2089, %v2088
  %v2388 = vpack.c.b16 %v2091, %v2090
  %v2389 = vpack.c.b16 %v2093, %v2092
  %v2390 = vpack.c.b16 %v2095, %v2094
  %v2391 = vpack.c.b16 %v2097, %v2096
  %v2392 = vpack.c.b16 %v2099, %v2098
  %v2393 = vpack.c.b16 %v2101, %v2100
  %v2394 = vpack.c.b16 %v2103, %v2102
  %v2395 = vpack.c.b16 %v2105, %v2104
  %v2396 = vpack.c.b16 %v2107, %v2106
  %v2397 = vpack.c.b16 %v2109, %v2108
  %2686 = vmatprep.subr.bf16.mxu0 0
  %2687 = vmatpush1.bf16.msra.mxu0 %v2110
  %2688 = vmatprep.subr.bf16.mxu0 0
  %2689 = vmatpush1.bf16.msra.mxu0 %v2111
  %2690 = vmatprep.subr.bf16.mxu0 0
  %2691 = vmatpush1.bf16.msra.mxu0 %v2112
  %2692 = vmatprep.subr.bf16.mxu0 0
  %2693 = vmatpush1.bf16.msra.mxu0 %v2113
  %2694 = vmatprep.subr.bf16.mxu0 0
  %2695 = vmatpush1.bf16.msra.mxu0 %v2114
  %2696 = vmatprep.subr.bf16.mxu0 0
  %2697 = vmatpush1.bf16.msra.mxu0 %v2115
  %2698 = vmatprep.subr.bf16.mxu0 0
  %2699 = vmatpush1.bf16.msra.mxu0 %v2116
  %2700 = vmatprep.subr.bf16.mxu0 0
  %2701 = vmatpush1.bf16.msra.mxu0 %v2117
  %2702 = vmatprep.subr.bf16.mxu0 0
  %2703 = vmatpush1.bf16.msra.mxu0 %v2118
  %2704 = vmatprep.subr.bf16.mxu0 0
  %2705 = vmatpush1.bf16.msra.mxu0 %v2119
  %2706 = vmatprep.subr.bf16.mxu0 0
  %2707 = vmatpush1.bf16.msra.mxu0 %v2120
  %2708 = vmatprep.subr.bf16.mxu0 0
  %2709 = vmatpush1.bf16.msra.mxu0 %v2121
  %2710 = vmatprep.subr.bf16.mxu0 0
  %2711 = vmatpush1.bf16.msra.mxu0 %v2122
  %2712 = vmatprep.subr.bf16.mxu0 0
  %2713 = vmatpush1.bf16.msra.mxu0 %v2123
  %2714 = vmatprep.subr.bf16.mxu0 0
  %2715 = vmatpush1.bf16.msra.mxu0 %v2124
  %2716 = vmatprep.subr.bf16.mxu0 0
  %2717 = vmatpush1.bf16.msra.mxu0 %v2125
  %2718 = vmatprep.mubr.bf16.mxu0 %v815
  %2719 = vmatmul.mubr.bf16.gmra.mrb[0].mxu0 %v814
  %v2720 = vpop.f32.mrb[0].mxu0
  %v2721 = vadd.f32 %v650, %v2720
  %v2722 = vpop.f32.mrb[0].mxu0
  %v2723 = vpop.f32.mrb[0].mxu0
  %v2724 = vadd.f32 %v650, %v2723
  %v2725 = vpop.f32.mrb[0].mxu0
  %2726 = vmatprep.mubr.bf16.mxu0 %v851
  %2727 = vmatmul.mubr.bf16.gmra.mrb[0].mxu0 %v850
  %v2728 = vpop.f32.mrb[0].mxu0
  %v2729 = vadd.f32 %v650, %v2728
  %v2730 = vpop.f32.mrb[0].mxu0
  %v2731 = vpop.f32.mrb[0].mxu0
  %v2732 = vpop.f32.mrb[0].mxu0
  %2733 = vdwg.mxu0
  %2734 = vmatprep.subr.bf16.mxu0 0
  %2735 = vmatpush1.bf16.msra.mxu0 %v2126
  %2736 = vmatprep.subr.bf16.mxu0 0
  %2737 = vmatpush1.bf16.msra.mxu0 %v2127
  %2738 = vmatprep.subr.bf16.mxu0 0
  %2739 = vmatpush1.bf16.msra.mxu0 %v2128
  %2740 = vmatprep.subr.bf16.mxu0 0
  %2741 = vmatpush1.bf16.msra.mxu0 %v2129
  %2742 = vmatprep.subr.bf16.mxu0 0
  %2743 = vmatpush1.bf16.msra.mxu0 %v2130
  %2744 = vmatprep.subr.bf16.mxu0 0
  %2745 = vmatpush1.bf16.msra.mxu0 %v2131
  %2746 = vmatprep.subr.bf16.mxu0 0
  %2747 = vmatpush1.bf16.msra.mxu0 %v2132
  %2748 = vmatprep.subr.bf16.mxu0 0
  %2749 = vmatpush1.bf16.msra.mxu0 %v2133
  %2750 = vmatprep.subr.bf16.mxu0 0
  %2751 = vmatpush1.bf16.msra.mxu0 %v2134
  %2752 = vmatprep.subr.bf16.mxu0 0
  %2753 = vmatpush1.bf16.msra.mxu0 %v2135
  %2754 = vmatprep.subr.bf16.mxu0 0
  %2755 = vmatpush1.bf16.msra.mxu0 %v2136
  %2756 = vmatprep.subr.bf16.mxu0 0
  %2757 = vmatpush1.bf16.msra.mxu0 %v2137
  %2758 = vmatprep.subr.bf16.mxu0 0
  %2759 = vmatpush1.bf16.msra.mxu0 %v2138
  %2760 = vmatprep.subr.bf16.mxu0 0
  %2761 = vmatpush1.bf16.msra.mxu0 %v2139
  %2762 = vmatprep.subr.bf16.mxu0 0
  %2763 = vmatpush1.bf16.msra.mxu0 %v2140
  %2764 = vmatprep.subr.bf16.mxu0 0
  %2765 = vmatpush1.bf16.msra.mxu0 %v2141
  %2766 = vmatprep.mubr.bf16.mxu0 %v817
  %2767 = vmatmul.mubr.bf16.gmra.mrb[0].mxu0 %v816
  %v2768 = vpop.f32.mrb[0].mxu0
  %v2769 = vadd.f32 %v2721, %v2768
  %v2770 = vpop.f32.mrb[0].mxu0
  %v2771 = vpop.f32.mrb[0].mxu0
  %v2772 = vadd.f32 %v2724, %v2771
  %v2773 = vpop.f32.mrb[0].mxu0
  %2774 = vmatprep.mubr.bf16.mxu0 %v853
  %2775 = vmatmul.mubr.bf16.gmra.mrb[0].mxu0 %v852
  %v2776 = vpop.f32.mrb[0].mxu0
  %v2777 = vadd.f32 %v2729, %v2776
  %v2778 = vpop.f32.mrb[0].mxu0
  %v2779 = vpop.f32.mrb[0].mxu0
  %v2780 = vpop.f32.mrb[0].mxu0
  %2781 = vdwg.mxu0
  %2782 = vmatprep.subr.bf16.mxu0 0
  %2783 = vmatpush1.bf16.msra.mxu0 %v2142
  %2784 = vmatprep.subr.bf16.mxu0 0
  %2785 = vmatpush1.bf16.msra.mxu0 %v2143
  %2786 = vmatprep.subr.bf16.mxu0 0
  %2787 = vmatpush1.bf16.msra.mxu0 %v2144
  %2788 = vmatprep.subr.bf16.mxu0 0
  %2789 = vmatpush1.bf16.msra.mxu0 %v2145
  %2790 = vmatprep.subr.bf16.mxu0 0
  %2791 = vmatpush1.bf16.msra.mxu0 %v2146
  %2792 = vmatprep.subr.bf16.mxu0 0
  %2793 = vmatpush1.bf16.msra.mxu0 %v2147
  %2794 = vmatprep.subr.bf16.mxu0 0
  %2795 = vmatpush1.bf16.msra.mxu0 %v2148
  %2796 = vmatprep.subr.bf16.mxu0 0
  %2797 = vmatpush1.bf16.msra.mxu0 %v2149
  %2798 = vmatprep.subr.bf16.mxu0 0
  %2799 = vmatpush1.bf16.msra.mxu0 %v2150
  %2800 = vmatprep.subr.bf16.mxu0 0
  %2801 = vmatpush1.bf16.msra.mxu0 %v2151
  %2802 = vmatprep.subr.bf16.mxu0 0
  %2803 = vmatpush1.bf16.msra.mxu0 %v2152
  %2804 = vmatprep.subr.bf16.mxu0 0
  %2805 = vmatpush1.bf16.msra.mxu0 %v2153
  %2806 = vmatprep.subr.bf16.mxu0 0
  %2807 = vmatpush1.bf16.msra.mxu0 %v2154
  %2808 = vmatprep.subr.bf16.mxu0 0
  %2809 = vmatpush1.bf16.msra.mxu0 %v2155
  %2810 = vmatprep.subr.bf16.mxu0 0
  %2811 = vmatpush1.bf16.msra.mxu0 %v2156
  %2812 = vmatprep.subr.bf16.mxu0 0
  %2813 = vmatpush1.bf16.msra.mxu0 %v2157
  %2814 = vmatprep.mubr.bf16.mxu0 %v819
  %2815 = vmatmul.mubr.bf16.gmra.mrb[0].mxu0 %v818
  %v2816 = vpop.f32.mrb[0].mxu0
  %v2817 = vadd.f32 %v2769, %v2816
  %v2818 = vpop.f32.mrb[0].mxu0
  %v2819 = vpop.f32.mrb[0].mxu0
  %v2820 = vadd.f32 %v2772, %v2819
  %v2821 = vpop.f32.mrb[0].mxu0
  %2822 = vmatprep.mubr.bf16.mxu0 %v855
  %2823 = vmatmul.mubr.bf16.gmra.mrb[0].mxu0 %v854
  %v2824 = vpop.f32.mrb[0].mxu0
  %v2825 = vadd.f32 %v2777, %v2824
  %v2826 = vpop.f32.mrb[0].mxu0
  %v2827 = vpop.f32.mrb[0].mxu0
  %v2828 = vpop.f32.mrb[0].mxu0
  %2829 = vdwg.mxu0
  %2830 = vmatprep.subr.bf16.mxu0 0
  %2831 = vmatpush1.bf16.msra.mxu0 %v2158
  %2832 = vmatprep.subr.bf16.mxu0 0
  %2833 = vmatpush1.bf16.msra.mxu0 %v2159
  %2834 = vmatprep.subr.bf16.mxu0 0
  %2835 = vmatpush1.bf16.msra.mxu0 %v2160
  %2836 = vmatprep.subr.bf16.mxu0 0
  %2837 = vmatpush1.bf16.msra.mxu0 %v2161
  %2838 = vmatprep.subr.bf16.mxu0 0
  %2839 = vmatpush1.bf16.msra.mxu0 %v2162
  %2840 = vmatprep.subr.bf16.mxu0 0
  %2841 = vmatpush1.bf16.msra.mxu0 %v2163
  %2842 = vmatprep.subr.bf16.mxu0 0
  %2843 = vmatpush1.bf16.msra.mxu0 %v2164
  %2844 = vmatprep.subr.bf16.mxu0 0
  %2845 = vmatpush1.bf16.msra.mxu0 %v2165
  %2846 = vmatprep.subr.bf16.mxu0 0
  %2847 = vmatpush1.bf16.msra.mxu0 %v2166
  %2848 = vmatprep.subr.bf16.mxu0 0
  %2849 = vmatpush1.bf16.msra.mxu0 %v2167
  %2850 = vmatprep.subr.bf16.mxu0 0
  %2851 = vmatpush1.bf16.msra.mxu0 %v2168
  %2852 = vmatprep.subr.bf16.mxu0 0
  %2853 = vmatpush1.bf16.msra.mxu0 %v2169
  %2854 = vmatprep.subr.bf16.mxu0 0
  %2855 = vmatpush1.bf16.msra.mxu0 %v2170
  %2856 = vmatprep.subr.bf16.mxu0 0
  %2857 = vmatpush1.bf16.msra.mxu0 %v2171
  %2858 = vmatprep.subr.bf16.mxu0 0
  %2859 = vmatpush1.bf16.msra.mxu0 %v2172
  %2860 = vmatprep.subr.bf16.mxu0 0
  %2861 = vmatpush1.bf16.msra.mxu0 %v2173
  %2862 = vmatprep.mubr.bf16.mxu0 %v821
  %2863 = vmatmul.mubr.bf16.gmra.mrb[0].mxu0 %v820
  %v2864 = vpop.f32.mrb[0].mxu0
  %v2865 = vadd.f32 %v2817, %v2864
  %v2866 = vpop.f32.mrb[0].mxu0
  %v2867 = vpop.f32.mrb[0].mxu0
  %v2868 = vadd.f32 %v2820, %v2867
  %v2869 = vpop.f32.mrb[0].mxu0
  %2870 = vmatprep.mubr.bf16.mxu0 %v857
  %2871 = vmatmul.mubr.bf16.gmra.mrb[0].mxu0 %v856
  %v2872 = vpop.f32.mrb[0].mxu0
  %v2873 = vadd.f32 %v2825, %v2872
  %v2874 = vpop.f32.mrb[0].mxu0
  %v2875 = vpop.f32.mrb[0].mxu0
  %v2876 = vpop.f32.mrb[0].mxu0
  %2877 = vdwg.mxu0
  %2878 = vmatprep.subr.bf16.mxu0 0
  %2879 = vmatpush1.bf16.msra.mxu0 %v2174
  %2880 = vmatprep.subr.bf16.mxu0 0
  %2881 = vmatpush1.bf16.msra.mxu0 %v2175
  %2882 = vmatprep.subr.bf16.mxu0 0
  %2883 = vmatpush1.bf16.msra.mxu0 %v2176
  %2884 = vmatprep.subr.bf16.mxu0 0
  %2885 = vmatpush1.bf16.msra.mxu0 %v2177
  %2886 = vmatprep.subr.bf16.mxu0 0
  %2887 = vmatpush1.bf16.msra.mxu0 %v2178
  %2888 = vmatprep.subr.bf16.mxu0 0
  %2889 = vmatpush1.bf16.msra.mxu0 %v2179
  %2890 = vmatprep.subr.bf16.mxu0 0
  %2891 = vmatpush1.bf16.msra.mxu0 %v2180
  %2892 = vmatprep.subr.bf16.mxu0 0
  %2893 = vmatpush1.bf16.msra.mxu0 %v2181
  %2894 = vmatprep.subr.bf16.mxu0 0
  %2895 = vmatpush1.bf16.msra.mxu0 %v2182
  %2896 = vmatprep.subr.bf16.mxu0 0
  %2897 = vmatpush1.bf16.msra.mxu0 %v2183
  %2898 = vmatprep.subr.bf16.mxu0 0
  %2899 = vmatpush1.bf16.msra.mxu0 %v2184
  %2900 = vmatprep.subr.bf16.mxu0 0
  %2901 = vmatpush1.bf16.msra.mxu0 %v2185
  %2902 = vmatprep.subr.bf16.mxu0 0
  %2903 = vmatpush1.bf16.msra.mxu0 %v2186
  %2904 = vmatprep.subr.bf16.mxu0 0
  %2905 = vmatpush1.bf16.msra.mxu0 %v2187
  %2906 = vmatprep.subr.bf16.mxu0 0
  %2907 = vmatpush1.bf16.msra.mxu0 %v2188
  %2908 = vmatprep.subr.bf16.mxu0 0
  %2909 = vmatpush1.bf16.msra.mxu0 %v2189
  %2910 = vmatprep.mubr.bf16.mxu0 %v823
  %2911 = vmatmul.mubr.bf16.gmra.mrb[0].mxu0 %v822
  %v2912 = vpop.f32.mrb[0].mxu0
  %v2913 = vadd.f32 %v2865, %v2912
  %v2914 = vpop.f32.mrb[0].mxu0
  %v2915 = vpop.f32.mrb[0].mxu0
  %v2916 = vadd.f32 %v2868, %v2915
  %v2917 = vpop.f32.mrb[0].mxu0
  %2918 = vmatprep.mubr.bf16.mxu0 %v859
  %2919 = vmatmul.mubr.bf16.gmra.mrb[0].mxu0 %v858
  %v2920 = vpop.f32.mrb[0].mxu0
  %v2921 = vadd.f32 %v2873, %v2920
  %v2922 = vpop.f32.mrb[0].mxu0
  %v2923 = vpop.f32.mrb[0].mxu0
  %v2924 = vpop.f32.mrb[0].mxu0
  %2925 = vdwg.mxu0
  %2926 = vmatprep.subr.bf16.mxu0 0
  %2927 = vmatpush1.bf16.msra.mxu0 %v2190
  %2928 = vmatprep.subr.bf16.mxu0 0
  %2929 = vmatpush1.bf16.msra.mxu0 %v2191
  %2930 = vmatprep.subr.bf16.mxu0 0
  %2931 = vmatpush1.bf16.msra.mxu0 %v2192
  %2932 = vmatprep.subr.bf16.mxu0 0
  %2933 = vmatpush1.bf16.msra.mxu0 %v2193
  %2934 = vmatprep.subr.bf16.mxu0 0
  %2935 = vmatpush1.bf16.msra.mxu0 %v2194
  %2936 = vmatprep.subr.bf16.mxu0 0
  %2937 = vmatpush1.bf16.msra.mxu0 %v2195
  %2938 = vmatprep.subr.bf16.mxu0 0
  %2939 = vmatpush1.bf16.msra.mxu0 %v2196
  %2940 = vmatprep.subr.bf16.mxu0 0
  %2941 = vmatpush1.bf16.msra.mxu0 %v2197
  %2942 = vmatprep.subr.bf16.mxu0 0
  %2943 = vmatpush1.bf16.msra.mxu0 %v2198
  %2944 = vmatprep.subr.bf16.mxu0 0
  %2945 = vmatpush1.bf16.msra.mxu0 %v2199
  %2946 = vmatprep.subr.bf16.mxu0 0
  %2947 = vmatpush1.bf16.msra.mxu0 %v2200
  %2948 = vmatprep.subr.bf16.mxu0 0
  %2949 = vmatpush1.bf16.msra.mxu0 %v2201
  %2950 = vmatprep.subr.bf16.mxu0 0
  %2951 = vmatpush1.bf16.msra.mxu0 %v2202
  %2952 = vmatprep.subr.bf16.mxu0 0
  %2953 = vmatpush1.bf16.msra.mxu0 %v2203
  %2954 = vmatprep.subr.bf16.mxu0 0
  %2955 = vmatpush1.bf16.msra.mxu0 %v2204
  %2956 = vmatprep.subr.bf16.mxu0 0
  %2957 = vmatpush1.bf16.msra.mxu0 %v2205
  %2958 = vmatprep.mubr.bf16.mxu0 %v825
  %2959 = vmatmul.mubr.bf16.gmra.mrb[0].mxu0 %v824
  %v2960 = vpop.f32.mrb[0].mxu0
  %v2961 = vadd.f32 %v2913, %v2960
  %v2962 = vpop.f32.mrb[0].mxu0
  %v2963 = vpop.f32.mrb[0].mxu0
  %v2964 = vadd.f32 %v2916, %v2963
  %v2965 = vpop.f32.mrb[0].mxu0
  %2966 = vmatprep.mubr.bf16.mxu0 %v861
  %2967 = vmatmul.mubr.bf16.gmra.mrb[0].mxu0 %v860
  %v2968 = vpop.f32.mrb[0].mxu0
  %v2969 = vadd.f32 %v2921, %v2968
  %v2970 = vpop.f32.mrb[0].mxu0
  %v2971 = vpop.f32.mrb[0].mxu0
  %v2972 = vpop.f32.mrb[0].mxu0
  %2973 = vdwg.mxu0
  %2974 = vmatprep.subr.bf16.mxu0 0
  %2975 = vmatpush1.bf16.msra.mxu0 %v2206
  %2976 = vmatprep.subr.bf16.mxu0 0
  %2977 = vmatpush1.bf16.msra.mxu0 %v2207
  %2978 = vmatprep.subr.bf16.mxu0 0
  %2979 = vmatpush1.bf16.msra.mxu0 %v2208
  %2980 = vmatprep.subr.bf16.mxu0 0
  %2981 = vmatpush1.bf16.msra.mxu0 %v2209
  %2982 = vmatprep.subr.bf16.mxu0 0
  %2983 = vmatpush1.bf16.msra.mxu0 %v2210
  %2984 = vmatprep.subr.bf16.mxu0 0
  %2985 = vmatpush1.bf16.msra.mxu0 %v2211
  %2986 = vmatprep.subr.bf16.mxu0 0
  %2987 = vmatpush1.bf16.msra.mxu0 %v2212
  %2988 = vmatprep.subr.bf16.mxu0 0
  %2989 = vmatpush1.bf16.msra.mxu0 %v2213
  %2990 = vmatprep.subr.bf16.mxu0 0
  %2991 = vmatpush1.bf16.msra.mxu0 %v2214
  %2992 = vmatprep.subr.bf16.mxu0 0
  %2993 = vmatpush1.bf16.msra.mxu0 %v2215
  %2994 = vmatprep.subr.bf16.mxu0 0
  %2995 = vmatpush1.bf16.msra.mxu0 %v2216
  %2996 = vmatprep.subr.bf16.mxu0 0
  %2997 = vmatpush1.bf16.msra.mxu0 %v2217
  %2998 = vmatprep.subr.bf16.mxu0 0
  %2999 = vmatpush1.bf16.msra.mxu0 %v2218
  %3000 = vmatprep.subr.bf16.mxu0 0
  %3001 = vmatpush1.bf16.msra.mxu0 %v2219
  %3002 = vmatprep.subr.bf16.mxu0 0
  %3003 = vmatpush1.bf16.msra.mxu0 %v2220
  %3004 = vmatprep.subr.bf16.mxu0 0
  %3005 = vmatpush1.bf16.msra.mxu0 %v2221
  %3006 = vmatprep.mubr.bf16.mxu0 %v827
  %3007 = vmatmul.mubr.bf16.gmra.mrb[0].mxu0 %v826
  %v3008 = vpop.f32.mrb[0].mxu0
  %v3009 = vadd.f32 %v2961, %v3008
  %v3010 = vpop.f32.mrb[0].mxu0
  %v3011 = vpop.f32.mrb[0].mxu0
  %v3012 = vadd.f32 %v2964, %v3011
  %v3013 = vpop.f32.mrb[0].mxu0
  %3014 = vmatprep.mubr.bf16.mxu0 %v863
  %3015 = vmatmul.mubr.bf16.gmra.mrb[0].mxu0 %v862
  %v3016 = vpop.f32.mrb[0].mxu0
  %v3017 = vadd.f32 %v2969, %v3016
  %v3018 = vpop.f32.mrb[0].mxu0
  %v3019 = vpop.f32.mrb[0].mxu0
  %v3020 = vpop.f32.mrb[0].mxu0
  %3021 = vdwg.mxu0
  %3022 = vmatprep.subr.bf16.mxu0 0
  %3023 = vmatpush1.bf16.msra.mxu0 %v2222
  %3024 = vmatprep.subr.bf16.mxu0 0
  %3025 = vmatpush1.bf16.msra.mxu0 %v2223
  %3026 = vmatprep.subr.bf16.mxu0 0
  %3027 = vmatpush1.bf16.msra.mxu0 %v2224
  %3028 = vmatprep.subr.bf16.mxu0 0
  %3029 = vmatpush1.bf16.msra.mxu0 %v2225
  %3030 = vmatprep.subr.bf16.mxu0 0
  %3031 = vmatpush1.bf16.msra.mxu0 %v2226
  %3032 = vmatprep.subr.bf16.mxu0 0
  %3033 = vmatpush1.bf16.msra.mxu0 %v2227
  %3034 = vmatprep.subr.bf16.mxu0 0
  %3035 = vmatpush1.bf16.msra.mxu0 %v2228
  %3036 = vmatprep.subr.bf16.mxu0 0
  %3037 = vmatpush1.bf16.msra.mxu0 %v2229
  %3038 = vmatprep.subr.bf16.mxu0 0
  %3039 = vmatpush1.bf16.msra.mxu0 %v2230
  %3040 = vmatprep.subr.bf16.mxu0 0
  %3041 = vmatpush1.bf16.msra.mxu0 %v2231
  %3042 = vmatprep.subr.bf16.mxu0 0
  %3043 = vmatpush1.bf16.msra.mxu0 %v2232
  %3044 = vmatprep.subr.bf16.mxu0 0
  %3045 = vmatpush1.bf16.msra.mxu0 %v2233
  %3046 = vmatprep.subr.bf16.mxu0 0
  %3047 = vmatpush1.bf16.msra.mxu0 %v2234
  %3048 = vmatprep.subr.bf16.mxu0 0
  %3049 = vmatpush1.bf16.msra.mxu0 %v2235
  %3050 = vmatprep.subr.bf16.mxu0 0
  %3051 = vmatpush1.bf16.msra.mxu0 %v2236
  %3052 = vmatprep.subr.bf16.mxu0 0
  %3053 = vmatpush1.bf16.msra.mxu0 %v2237
  %3054 = vmatprep.mubr.bf16.mxu0 %v829
  %3055 = vmatmul.mubr.bf16.gmra.mrb[0].mxu0 %v828
  %v3056 = vpop.f32.mrb[0].mxu0
  %v3057 = vadd.f32 %v3009, %v3056
  %v3058 = vpop.f32.mrb[0].mxu0
  %v3059 = vpop.f32.mrb[0].mxu0
  %v3060 = vadd.f32 %v3012, %v3059
  %v3061 = vpop.f32.mrb[0].mxu0
  %3062 = vmatprep.mubr.bf16.mxu0 %v865
  %3063 = vmatmul.mubr.bf16.gmra.mrb[0].mxu0 %v864
  %v3064 = vpop.f32.mrb[0].mxu0
  %v3065 = vadd.f32 %v3017, %v3064
  %v3066 = vpop.f32.mrb[0].mxu0
  %v3067 = vpop.f32.mrb[0].mxu0
  %v3068 = vpop.f32.mrb[0].mxu0
  %3069 = vdwg.mxu0
  %3070 = vmatprep.subr.bf16.mxu0 0
  %3071 = vmatpush1.bf16.msra.mxu0 %v2238
  %3072 = vmatprep.subr.bf16.mxu0 0
  %3073 = vmatpush1.bf16.msra.mxu0 %v2239
  %3074 = vmatprep.subr.bf16.mxu0 0
  %3075 = vmatpush1.bf16.msra.mxu0 %v2240
  %3076 = vmatprep.subr.bf16.mxu0 0
  %3077 = vmatpush1.bf16.msra.mxu0 %v2241
  %3078 = vmatprep.subr.bf16.mxu0 0
  %3079 = vmatpush1.bf16.msra.mxu0 %v2242
  %3080 = vmatprep.subr.bf16.mxu0 0
  %3081 = vmatpush1.bf16.msra.mxu0 %v2243
  %3082 = vmatprep.subr.bf16.mxu0 0
  %3083 = vmatpush1.bf16.msra.mxu0 %v2244
  %3084 = vmatprep.subr.bf16.mxu0 0
  %3085 = vmatpush1.bf16.msra.mxu0 %v2245
  %3086 = vmatprep.subr.bf16.mxu0 0
  %3087 = vmatpush1.bf16.msra.mxu0 %v2246
  %3088 = vmatprep.subr.bf16.mxu0 0
  %3089 = vmatpush1.bf16.msra.mxu0 %v2247
  %3090 = vmatprep.subr.bf16.mxu0 0
  %3091 = vmatpush1.bf16.msra.mxu0 %v2248
  %3092 = vmatprep.subr.bf16.mxu0 0
  %3093 = vmatpush1.bf16.msra.mxu0 %v2249
  %3094 = vmatprep.subr.bf16.mxu0 0
  %3095 = vmatpush1.bf16.msra.mxu0 %v2250
  %3096 = vmatprep.subr.bf16.mxu0 0
  %3097 = vmatpush1.bf16.msra.mxu0 %v2251
  %3098 = vmatprep.subr.bf16.mxu0 0
  %3099 = vmatpush1.bf16.msra.mxu0 %v2252
  %3100 = vmatprep.subr.bf16.mxu0 0
  %3101 = vmatpush1.bf16.msra.mxu0 %v2253
  %3102 = vmatprep.mubr.bf16.mxu0 %v831
  %3103 = vmatmul.mubr.bf16.gmra.mrb[0].mxu0 %v830
  %v3104 = vpop.f32.mrb[0].mxu0
  %v3105 = vadd.f32 %v3057, %v3104
  %v3106 = vpop.f32.mrb[0].mxu0
  %v3107 = vpop.f32.mrb[0].mxu0
  %v3108 = vadd.f32 %v3060, %v3107
  %v3109 = vpop.f32.mrb[0].mxu0
  %3110 = vmatprep.mubr.bf16.mxu0 %v867
  %3111 = vmatmul.mubr.bf16.gmra.mrb[0].mxu0 %v866
  %v3112 = vpop.f32.mrb[0].mxu0
  %v3113 = vadd.f32 %v3065, %v3112
  %v3114 = vpop.f32.mrb[0].mxu0
  %v3115 = vpop.f32.mrb[0].mxu0
  %v3116 = vpop.f32.mrb[0].mxu0
  %3117 = vdwg.mxu0
  %3118 = vmatprep.subr.bf16.mxu0 0
  %3119 = vmatpush1.bf16.msra.mxu0 %v2254
  %3120 = vmatprep.subr.bf16.mxu0 0
  %3121 = vmatpush1.bf16.msra.mxu0 %v2255
  %3122 = vmatprep.subr.bf16.mxu0 0
  %3123 = vmatpush1.bf16.msra.mxu0 %v2256
  %3124 = vmatprep.subr.bf16.mxu0 0
  %3125 = vmatpush1.bf16.msra.mxu0 %v2257
  %3126 = vmatprep.subr.bf16.mxu0 0
  %3127 = vmatpush1.bf16.msra.mxu0 %v2258
  %3128 = vmatprep.subr.bf16.mxu0 0
  %3129 = vmatpush1.bf16.msra.mxu0 %v2259
  %3130 = vmatprep.subr.bf16.mxu0 0
  %3131 = vmatpush1.bf16.msra.mxu0 %v2260
  %3132 = vmatprep.subr.bf16.mxu0 0
  %3133 = vmatpush1.bf16.msra.mxu0 %v2261
  %3134 = vmatprep.subr.bf16.mxu0 0
  %3135 = vmatpush1.bf16.msra.mxu0 %v2262
  %3136 = vmatprep.subr.bf16.mxu0 0
  %3137 = vmatpush1.bf16.msra.mxu0 %v2263
  %3138 = vmatprep.subr.bf16.mxu0 0
  %3139 = vmatpush1.bf16.msra.mxu0 %v2264
  %3140 = vmatprep.subr.bf16.mxu0 0
  %3141 = vmatpush1.bf16.msra.mxu0 %v2265
  %3142 = vmatprep.subr.bf16.mxu0 0
  %3143 = vmatpush1.bf16.msra.mxu0 %v2266
  %3144 = vmatprep.subr.bf16.mxu0 0
  %3145 = vmatpush1.bf16.msra.mxu0 %v2267
  %3146 = vmatprep.subr.bf16.mxu0 0
  %3147 = vmatpush1.bf16.msra.mxu0 %v2268
  %3148 = vmatprep.subr.bf16.mxu0 0
  %3149 = vmatpush1.bf16.msra.mxu0 %v2269
  %3150 = vmatprep.mubr.bf16.mxu0 %v833
  %3151 = vmatmul.mubr.bf16.gmra.mrb[0].mxu0 %v832
  %v3152 = vpop.f32.mrb[0].mxu0
  %v3153 = vadd.f32 %v3105, %v3152
  %v3154 = vpop.f32.mrb[0].mxu0
  %v3155 = vpop.f32.mrb[0].mxu0
  %v3156 = vadd.f32 %v3108, %v3155
  %v3157 = vpop.f32.mrb[0].mxu0
  %3158 = vmatprep.mubr.bf16.mxu0 %v869
  %3159 = vmatmul.mubr.bf16.gmra.mrb[0].mxu0 %v868
  %v3160 = vpop.f32.mrb[0].mxu0
  %v3161 = vadd.f32 %v3113, %v3160
  %v3162 = vpop.f32.mrb[0].mxu0
  %v3163 = vpop.f32.mrb[0].mxu0
  %v3164 = vpop.f32.mrb[0].mxu0
  %3165 = vdwg.mxu0
  %3166 = vmatprep.subr.bf16.mxu0 0
  %3167 = vmatpush1.bf16.msra.mxu0 %v2270
  %3168 = vmatprep.subr.bf16.mxu0 0
  %3169 = vmatpush1.bf16.msra.mxu0 %v2271
  %3170 = vmatprep.subr.bf16.mxu0 0
  %3171 = vmatpush1.bf16.msra.mxu0 %v2272
  %3172 = vmatprep.subr.bf16.mxu0 0
  %3173 = vmatpush1.bf16.msra.mxu0 %v2273
  %3174 = vmatprep.subr.bf16.mxu0 0
  %3175 = vmatpush1.bf16.msra.mxu0 %v2274
  %3176 = vmatprep.subr.bf16.mxu0 0
  %3177 = vmatpush1.bf16.msra.mxu0 %v2275
  %3178 = vmatprep.subr.bf16.mxu0 0
  %3179 = vmatpush1.bf16.msra.mxu0 %v2276
  %3180 = vmatprep.subr.bf16.mxu0 0
  %3181 = vmatpush1.bf16.msra.mxu0 %v2277
  %3182 = vmatprep.subr.bf16.mxu0 0
  %3183 = vmatpush1.bf16.msra.mxu0 %v2278
  %3184 = vmatprep.subr.bf16.mxu0 0
  %3185 = vmatpush1.bf16.msra.mxu0 %v2279
  %3186 = vmatprep.subr.bf16.mxu0 0
  %3187 = vmatpush1.bf16.msra.mxu0 %v2280
  %3188 = vmatprep.subr.bf16.mxu0 0
  %3189 = vmatpush1.bf16.msra.mxu0 %v2281
  %3190 = vmatprep.subr.bf16.mxu0 0
  %3191 = vmatpush1.bf16.msra.mxu0 %v2282
  %3192 = vmatprep.subr.bf16.mxu0 0
  %3193 = vmatpush1.bf16.msra.mxu0 %v2283
  %3194 = vmatprep.subr.bf16.mxu0 0
  %3195 = vmatpush1.bf16.msra.mxu0 %v2284
  %3196 = vmatprep.subr.bf16.mxu0 0
  %3197 = vmatpush1.bf16.msra.mxu0 %v2285
  %3198 = vmatprep.mubr.bf16.mxu0 %v835
  %3199 = vmatmul.mubr.bf16.gmra.mrb[0].mxu0 %v834
  %v3200 = vpop.f32.mrb[0].mxu0
  %v3201 = vadd.f32 %v3153, %v3200
  %v3202 = vpop.f32.mrb[0].mxu0
  %v3203 = vpop.f32.mrb[0].mxu0
  %v3204 = vadd.f32 %v3156, %v3203
  %v3205 = vpop.f32.mrb[0].mxu0
  %3206 = vmatprep.mubr.bf16.mxu0 %v871
  %3207 = vmatmul.mubr.bf16.gmra.mrb[0].mxu0 %v870
  %v3208 = vpop.f32.mrb[0].mxu0
  %v3209 = vadd.f32 %v3161, %v3208
  %v3210 = vpop.f32.mrb[0].mxu0
  %v3211 = vpop.f32.mrb[0].mxu0
  %v3212 = vpop.f32.mrb[0].mxu0
  %3213 = vdwg.mxu0
  %3214 = vmatprep.subr.bf16.mxu0 0
  %3215 = vmatpush1.bf16.msra.mxu0 %v2286
  %3216 = vmatprep.subr.bf16.mxu0 0
  %3217 = vmatpush1.bf16.msra.mxu0 %v2287
  %3218 = vmatprep.subr.bf16.mxu0 0
  %3219 = vmatpush1.bf16.msra.mxu0 %v2288
  %3220 = vmatprep.subr.bf16.mxu0 0
  %3221 = vmatpush1.bf16.msra.mxu0 %v2289
  %3222 = vmatprep.subr.bf16.mxu0 0
  %3223 = vmatpush1.bf16.msra.mxu0 %v2290
  %3224 = vmatprep.subr.bf16.mxu0 0
  %3225 = vmatpush1.bf16.msra.mxu0 %v2291
  %3226 = vmatprep.subr.bf16.mxu0 0
  %3227 = vmatpush1.bf16.msra.mxu0 %v2292
  %3228 = vmatprep.subr.bf16.mxu0 0
  %3229 = vmatpush1.bf16.msra.mxu0 %v2293
  %3230 = vmatprep.subr.bf16.mxu0 0
  %3231 = vmatpush1.bf16.msra.mxu0 %v2294
  %3232 = vmatprep.subr.bf16.mxu0 0
  %3233 = vmatpush1.bf16.msra.mxu0 %v2295
  %3234 = vmatprep.subr.bf16.mxu0 0
  %3235 = vmatpush1.bf16.msra.mxu0 %v2296
  %3236 = vmatprep.subr.bf16.mxu0 0
  %3237 = vmatpush1.bf16.msra.mxu0 %v2297
  %3238 = vmatprep.subr.bf16.mxu0 0
  %3239 = vmatpush1.bf16.msra.mxu0 %v2298
  %3240 = vmatprep.subr.bf16.mxu0 0
  %3241 = vmatpush1.bf16.msra.mxu0 %v2299
  %3242 = vmatprep.subr.bf16.mxu0 0
  %3243 = vmatpush1.bf16.msra.mxu0 %v2300
  %3244 = vmatprep.subr.bf16.mxu0 0
  %3245 = vmatpush1.bf16.msra.mxu0 %v2301
  %3246 = vmatprep.mubr.bf16.mxu0 %v837
  %3247 = vmatmul.mubr.bf16.gmra.mrb[0].mxu0 %v836
  %v3248 = vpop.f32.mrb[0].mxu0
  %v3249 = vadd.f32 %v3201, %v3248
  %v3250 = vpop.f32.mrb[0].mxu0
  %v3251 = vpop.f32.mrb[0].mxu0
  %v3252 = vadd.f32 %v3204, %v3251
  %v3253 = vpop.f32.mrb[0].mxu0
  %3254 = vmatprep.mubr.bf16.mxu0 %v873
  %3255 = vmatmul.mubr.bf16.gmra.mrb[0].mxu0 %v872
  %v3256 = vpop.f32.mrb[0].mxu0
  %v3257 = vadd.f32 %v3209, %v3256
  %v3258 = vpop.f32.mrb[0].mxu0
  %v3259 = vpop.f32.mrb[0].mxu0
  %v3260 = vpop.f32.mrb[0].mxu0
  %3261 = vdwg.mxu0
  %3262 = vmatprep.subr.bf16.mxu0 0
  %3263 = vmatpush1.bf16.msra.mxu0 %v2302
  %3264 = vmatprep.subr.bf16.mxu0 0
  %3265 = vmatpush1.bf16.msra.mxu0 %v2303
  %3266 = vmatprep.subr.bf16.mxu0 0
  %3267 = vmatpush1.bf16.msra.mxu0 %v2304
  %3268 = vmatprep.subr.bf16.mxu0 0
  %3269 = vmatpush1.bf16.msra.mxu0 %v2305
  %3270 = vmatprep.subr.bf16.mxu0 0
  %3271 = vmatpush1.bf16.msra.mxu0 %v2306
  %3272 = vmatprep.subr.bf16.mxu0 0
  %3273 = vmatpush1.bf16.msra.mxu0 %v2307
  %3274 = vmatprep.subr.bf16.mxu0 0
  %3275 = vmatpush1.bf16.msra.mxu0 %v2308
  %3276 = vmatprep.subr.bf16.mxu0 0
  %3277 = vmatpush1.bf16.msra.mxu0 %v2309
  %3278 = vmatprep.subr.bf16.mxu0 0
  %3279 = vmatpush1.bf16.msra.mxu0 %v2310
  %3280 = vmatprep.subr.bf16.mxu0 0
  %3281 = vmatpush1.bf16.msra.mxu0 %v2311
  %3282 = vmatprep.subr.bf16.mxu0 0
  %3283 = vmatpush1.bf16.msra.mxu0 %v2312
  %3284 = vmatprep.subr.bf16.mxu0 0
  %3285 = vmatpush1.bf16.msra.mxu0 %v2313
  %3286 = vmatprep.subr.bf16.mxu0 0
  %3287 = vmatpush1.bf16.msra.mxu0 %v2314
  %3288 = vmatprep.subr.bf16.mxu0 0
  %3289 = vmatpush1.bf16.msra.mxu0 %v2315
  %3290 = vmatprep.subr.bf16.mxu0 0
  %3291 = vmatpush1.bf16.msra.mxu0 %v2316
  %3292 = vmatprep.subr.bf16.mxu0 0
  %3293 = vmatpush1.bf16.msra.mxu0 %v2317
  %3294 = vmatprep.mubr.bf16.mxu0 %v839
  %3295 = vmatmul.mubr.bf16.gmra.mrb[0].mxu0 %v838
  %v3296 = vpop.f32.mrb[0].mxu0
  %v3297 = vadd.f32 %v3249, %v3296
  %v3298 = vpop.f32.mrb[0].mxu0
  %v3299 = vpop.f32.mrb[0].mxu0
  %v3300 = vadd.f32 %v3252, %v3299
  %v3301 = vpop.f32.mrb[0].mxu0
  %3302 = vmatprep.mubr.bf16.mxu0 %v875
  %3303 = vmatmul.mubr.bf16.gmra.mrb[0].mxu0 %v874
  %v3304 = vpop.f32.mrb[0].mxu0
  %v3305 = vadd.f32 %v3257, %v3304
  %v3306 = vpop.f32.mrb[0].mxu0
  %v3307 = vpop.f32.mrb[0].mxu0
  %v3308 = vpop.f32.mrb[0].mxu0
  %3309 = vdwg.mxu0
  %3310 = vmatprep.subr.bf16.mxu0 0
  %3311 = vmatpush1.bf16.msra.mxu0 %v2318
  %3312 = vmatprep.subr.bf16.mxu0 0
  %3313 = vmatpush1.bf16.msra.mxu0 %v2319
  %3314 = vmatprep.subr.bf16.mxu0 0
  %3315 = vmatpush1.bf16.msra.mxu0 %v2320
  %3316 = vmatprep.subr.bf16.mxu0 0
  %3317 = vmatpush1.bf16.msra.mxu0 %v2321
  %3318 = vmatprep.subr.bf16.mxu0 0
  %3319 = vmatpush1.bf16.msra.mxu0 %v2322
  %3320 = vmatprep.subr.bf16.mxu0 0
  %3321 = vmatpush1.bf16.msra.mxu0 %v2323
  %3322 = vmatprep.subr.bf16.mxu0 0
  %3323 = vmatpush1.bf16.msra.mxu0 %v2324
  %3324 = vmatprep.subr.bf16.mxu0 0
  %3325 = vmatpush1.bf16.msra.mxu0 %v2325
  %3326 = vmatprep.subr.bf16.mxu0 0
  %3327 = vmatpush1.bf16.msra.mxu0 %v2326
  %3328 = vmatprep.subr.bf16.mxu0 0
  %3329 = vmatpush1.bf16.msra.mxu0 %v2327
  %3330 = vmatprep.subr.bf16.mxu0 0
  %3331 = vmatpush1.bf16.msra.mxu0 %v2328
  %3332 = vmatprep.subr.bf16.mxu0 0
  %3333 = vmatpush1.bf16.msra.mxu0 %v2329
  %3334 = vmatprep.subr.bf16.mxu0 0
  %3335 = vmatpush1.bf16.msra.mxu0 %v2330
  %3336 = vmatprep.subr.bf16.mxu0 0
  %3337 = vmatpush1.bf16.msra.mxu0 %v2331
  %3338 = vmatprep.subr.bf16.mxu0 0
  %3339 = vmatpush1.bf16.msra.mxu0 %v2332
  %3340 = vmatprep.subr.bf16.mxu0 0
  %3341 = vmatpush1.bf16.msra.mxu0 %v2333
  %3342 = vmatprep.mubr.bf16.mxu0 %v841
  %3343 = vmatmul.mubr.bf16.gmra.mrb[0].mxu0 %v840
  %v3344 = vpop.f32.mrb[0].mxu0
  %v3345 = vadd.f32 %v3297, %v3344
  %v3346 = vpop.f32.mrb[0].mxu0
  %v3347 = vpop.f32.mrb[0].mxu0
  %v3348 = vadd.f32 %v3300, %v3347
  %v3349 = vpop.f32.mrb[0].mxu0
  %3350 = vmatprep.mubr.bf16.mxu0 %v877
  %3351 = vmatmul.mubr.bf16.gmra.mrb[0].mxu0 %v876
  %v3352 = vpop.f32.mrb[0].mxu0
  %v3353 = vadd.f32 %v3305, %v3352
  %v3354 = vpop.f32.mrb[0].mxu0
  %v3355 = vpop.f32.mrb[0].mxu0
  %v3356 = vpop.f32.mrb[0].mxu0
  %3357 = vdwg.mxu0
  %3358 = vmatprep.subr.bf16.mxu0 0
  %3359 = vmatpush1.bf16.msra.mxu0 %v2334
  %3360 = vmatprep.subr.bf16.mxu0 0
  %3361 = vmatpush1.bf16.msra.mxu0 %v2335
  %3362 = vmatprep.subr.bf16.mxu0 0
  %3363 = vmatpush1.bf16.msra.mxu0 %v2336
  %3364 = vmatprep.subr.bf16.mxu0 0
  %3365 = vmatpush1.bf16.msra.mxu0 %v2337
  %3366 = vmatprep.subr.bf16.mxu0 0
  %3367 = vmatpush1.bf16.msra.mxu0 %v2338
  %3368 = vmatprep.subr.bf16.mxu0 0
  %3369 = vmatpush1.bf16.msra.mxu0 %v2339
  %3370 = vmatprep.subr.bf16.mxu0 0
  %3371 = vmatpush1.bf16.msra.mxu0 %v2340
  %3372 = vmatprep.subr.bf16.mxu0 0
  %3373 = vmatpush1.bf16.msra.mxu0 %v2341
  %3374 = vmatprep.subr.bf16.mxu0 0
  %3375 = vmatpush1.bf16.msra.mxu0 %v2342
  %3376 = vmatprep.subr.bf16.mxu0 0
  %3377 = vmatpush1.bf16.msra.mxu0 %v2343
  %3378 = vmatprep.subr.bf16.mxu0 0
  %3379 = vmatpush1.bf16.msra.mxu0 %v2344
  %3380 = vmatprep.subr.bf16.mxu0 0
  %3381 = vmatpush1.bf16.msra.mxu0 %v2345
  %3382 = vmatprep.subr.bf16.mxu0 0
  %3383 = vmatpush1.bf16.msra.mxu0 %v2346
  %3384 = vmatprep.subr.bf16.mxu0 0
  %3385 = vmatpush1.bf16.msra.mxu0 %v2347
  %3386 = vmatprep.subr.bf16.mxu0 0
  %3387 = vmatpush1.bf16.msra.mxu0 %v2348
  %3388 = vmatprep.subr.bf16.mxu0 0
  %3389 = vmatpush1.bf16.msra.mxu0 %v2349
  %3390 = vmatprep.mubr.bf16.mxu0 %v843
  %3391 = vmatmul.mubr.bf16.gmra.mrb[0].mxu0 %v842
  %v3392 = vpop.f32.mrb[0].mxu0
  %v3393 = vadd.f32 %v3345, %v3392
  %v3394 = vpop.f32.mrb[0].mxu0
  %v3395 = vpop.f32.mrb[0].mxu0
  %v3396 = vadd.f32 %v3348, %v3395
  %v3397 = vpop.f32.mrb[0].mxu0
  %3398 = vmatprep.mubr.bf16.mxu0 %v879
  %3399 = vmatmul.mubr.bf16.gmra.mrb[0].mxu0 %v878
  %v3400 = vpop.f32.mrb[0].mxu0
  %v3401 = vadd.f32 %v3353, %v3400
  %v3402 = vpop.f32.mrb[0].mxu0
  %v3403 = vpop.f32.mrb[0].mxu0
  %v3404 = vpop.f32.mrb[0].mxu0
  %3405 = vdwg.mxu0
  %3406 = vmatprep.subr.bf16.mxu0 0
  %3407 = vmatpush1.bf16.msra.mxu0 %v2350
  %3408 = vmatprep.subr.bf16.mxu0 0
  %3409 = vmatpush1.bf16.msra.mxu0 %v2351
  %3410 = vmatprep.subr.bf16.mxu0 0
  %3411 = vmatpush1.bf16.msra.mxu0 %v2352
  %3412 = vmatprep.subr.bf16.mxu0 0
  %3413 = vmatpush1.bf16.msra.mxu0 %v2353
  %3414 = vmatprep.subr.bf16.mxu0 0
  %3415 = vmatpush1.bf16.msra.mxu0 %v2354
  %3416 = vmatprep.subr.bf16.mxu0 0
  %3417 = vmatpush1.bf16.msra.mxu0 %v2355
  %3418 = vmatprep.subr.bf16.mxu0 0
  %3419 = vmatpush1.bf16.msra.mxu0 %v2356
  %3420 = vmatprep.subr.bf16.mxu0 0
  %3421 = vmatpush1.bf16.msra.mxu0 %v2357
  %3422 = vmatprep.subr.bf16.mxu0 0
  %3423 = vmatpush1.bf16.msra.mxu0 %v2358
  %3424 = vmatprep.subr.bf16.mxu0 0
  %3425 = vmatpush1.bf16.msra.mxu0 %v2359
  %3426 = vmatprep.subr.bf16.mxu0 0
  %3427 = vmatpush1.bf16.msra.mxu0 %v2360
  %3428 = vmatprep.subr.bf16.mxu0 0
  %3429 = vmatpush1.bf16.msra.mxu0 %v2361
  %3430 = vmatprep.subr.bf16.mxu0 0
  %3431 = vmatpush1.bf16.msra.mxu0 %v2362
  %3432 = vmatprep.subr.bf16.mxu0 0
  %3433 = vmatpush1.bf16.msra.mxu0 %v2363
  %3434 = vmatprep.subr.bf16.mxu0 0
  %3435 = vmatpush1.bf16.msra.mxu0 %v2364
  %3436 = vmatprep.subr.bf16.mxu0 0
  %3437 = vmatpush1.bf16.msra.mxu0 %v2365
  %3438 = vmatprep.mubr.bf16.mxu0 %v845
  %3439 = vmatmul.mubr.bf16.gmra.mrb[0].mxu0 %v844
  %v3440 = vpop.f32.mrb[0].mxu0
  %v3441 = vadd.f32 %v3393, %v3440
  %v3442 = vpop.f32.mrb[0].mxu0
  %v3443 = vpop.f32.mrb[0].mxu0
  %v3444 = vadd.f32 %v3396, %v3443
  %v3445 = vpop.f32.mrb[0].mxu0
  %3446 = vmatprep.mubr.bf16.mxu0 %v881
  %3447 = vmatmul.mubr.bf16.gmra.mrb[0].mxu0 %v880
  %v3448 = vpop.f32.mrb[0].mxu0
  %v3449 = vadd.f32 %v3401, %v3448
  %v3450 = vpop.f32.mrb[0].mxu0
  %v3451 = vpop.f32.mrb[0].mxu0
  %v3452 = vpop.f32.mrb[0].mxu0
  %3453 = vdwg.mxu0
  %3454 = vmatprep.subr.bf16.mxu0 0
  %3455 = vmatpush1.bf16.msra.mxu0 %v2366
  %3456 = vmatprep.subr.bf16.mxu0 0
  %3457 = vmatpush1.bf16.msra.mxu0 %v2367
  %3458 = vmatprep.subr.bf16.mxu0 0
  %3459 = vmatpush1.bf16.msra.mxu0 %v2368
  %3460 = vmatprep.subr.bf16.mxu0 0
  %3461 = vmatpush1.bf16.msra.mxu0 %v2369
  %3462 = vmatprep.subr.bf16.mxu0 0
  %3463 = vmatpush1.bf16.msra.mxu0 %v2370
  %3464 = vmatprep.subr.bf16.mxu0 0
  %3465 = vmatpush1.bf16.msra.mxu0 %v2371
  %3466 = vmatprep.subr.bf16.mxu0 0
  %3467 = vmatpush1.bf16.msra.mxu0 %v2372
  %3468 = vmatprep.subr.bf16.mxu0 0
  %3469 = vmatpush1.bf16.msra.mxu0 %v2373
  %3470 = vmatprep.subr.bf16.mxu0 0
  %3471 = vmatpush1.bf16.msra.mxu0 %v2374
  %3472 = vmatprep.subr.bf16.mxu0 0
  %3473 = vmatpush1.bf16.msra.mxu0 %v2375
  %3474 = vmatprep.subr.bf16.mxu0 0
  %3475 = vmatpush1.bf16.msra.mxu0 %v2376
  %3476 = vmatprep.subr.bf16.mxu0 0
  %3477 = vmatpush1.bf16.msra.mxu0 %v2377
  %3478 = vmatprep.subr.bf16.mxu0 0
  %3479 = vmatpush1.bf16.msra.mxu0 %v2378
  %3480 = vmatprep.subr.bf16.mxu0 0
  %3481 = vmatpush1.bf16.msra.mxu0 %v2379
  %3482 = vmatprep.subr.bf16.mxu0 0
  %3483 = vmatpush1.bf16.msra.mxu0 %v2380
  %3484 = vmatprep.subr.bf16.mxu0 0
  %3485 = vmatpush1.bf16.msra.mxu0 %v2381
  %3486 = vmatprep.mubr.bf16.mxu0 %v847
  %3487 = vmatmul.mubr.bf16.gmra.mrb[0].mxu0 %v846
  %v3488 = vpop.f32.mrb[0].mxu0
  %v3489 = vadd.f32 %v3441, %v3488
  %v3490 = vpop.f32.mrb[0].mxu0
  %v3491 = vpop.f32.mrb[0].mxu0
  %v3492 = vadd.f32 %v3444, %v3491
  %v3493 = vpop.f32.mrb[0].mxu0
  %3494 = vmatprep.mubr.bf16.mxu0 %v883
  %3495 = vmatmul.mubr.bf16.gmra.mrb[0].mxu0 %v882
  %v3496 = vpop.f32.mrb[0].mxu0
  %v3497 = vadd.f32 %v3449, %v3496
  %v3498 = vpop.f32.mrb[0].mxu0
  %v3499 = vpop.f32.mrb[0].mxu0
  %v3500 = vpop.f32.mrb[0].mxu0
  %3501 = vdwg.mxu0
  %3502 = vmatprep.subr.bf16.mxu0 0
  %3503 = vmatpush1.bf16.msra.mxu0 %v2382
  %3504 = vmatprep.subr.bf16.mxu0 0
  %3505 = vmatpush1.bf16.msra.mxu0 %v2383
  %3506 = vmatprep.subr.bf16.mxu0 0
  %3507 = vmatpush1.bf16.msra.mxu0 %v2384
  %3508 = vmatprep.subr.bf16.mxu0 0
  %3509 = vmatpush1.bf16.msra.mxu0 %v2385
  %3510 = vmatprep.subr.bf16.mxu0 0
  %3511 = vmatpush1.bf16.msra.mxu0 %v2386
  %3512 = vmatprep.subr.bf16.mxu0 0
  %3513 = vmatpush1.bf16.msra.mxu0 %v2387
  %3514 = vmatprep.subr.bf16.mxu0 0
  %3515 = vmatpush1.bf16.msra.mxu0 %v2388
  %3516 = vmatprep.subr.bf16.mxu0 0
  %3517 = vmatpush1.bf16.msra.mxu0 %v2389
  %3518 = vmatprep.subr.bf16.mxu0 0
  %3519 = vmatpush1.bf16.msra.mxu0 %v2390
  %3520 = vmatprep.subr.bf16.mxu0 0
  %3521 = vmatpush1.bf16.msra.mxu0 %v2391
  %3522 = vmatprep.subr.bf16.mxu0 0
  %3523 = vmatpush1.bf16.msra.mxu0 %v2392
  %3524 = vmatprep.subr.bf16.mxu0 0
  %3525 = vmatpush1.bf16.msra.mxu0 %v2393
  %3526 = vmatprep.subr.bf16.mxu0 0
  %3527 = vmatpush1.bf16.msra.mxu0 %v2394
  %3528 = vmatprep.subr.bf16.mxu0 0
  %3529 = vmatpush1.bf16.msra.mxu0 %v2395
  %3530 = vmatprep.subr.bf16.mxu0 0
  %3531 = vmatpush1.bf16.msra.mxu0 %v2396
  %3532 = vmatprep.subr.bf16.mxu0 0
  %3533 = vmatpush1.bf16.msra.mxu0 %v2397
  %3534 = vmatprep.mubr.bf16.mxu0 %v849
  %3535 = vmatmul.mubr.bf16.gmra.mrb[0].mxu0 %v848
  %v3536 = vpop.f32.mrb[0].mxu0
  %v3537 = vadd.f32 %v3489, %v3536
  %v3538 = vpop.f32.mrb[0].mxu0
  %v3539 = vpop.f32.mrb[0].mxu0
  %v3540 = vadd.f32 %v3492, %v3539
  %v3541 = vpop.f32.mrb[0].mxu0
  %3542 = vmatprep.mubr.bf16.mxu0 %v885
  %3543 = vmatmul.mubr.bf16.gmra.mrb[0].mxu0 %v884
  %v3544 = vpop.f32.mrb[0].mxu0
  %v3545 = vadd.f32 %v3497, %v3544
  %v3546 = vpop.f32.mrb[0].mxu0
  %v3547 = vpop.f32.mrb[0].mxu0
  %v3548 = vpop.f32.mrb[0].mxu0
  %3549 = vdwg.mxu0
  %v3550 = vmax.f32 %v3537, 0.0
  %v3551 = vmax.f32 %v3540, 0.0
  %v3552 = vmax.f32 %v3545, 0.0
  %vm3553 = vcmask 523264
  %3554 = vst.msk [vmem:[%s3] sm:$0xff] %vm3553, %v3550
  %3555 = vst.msk [vmem:[%s3 + $0x8] sm:$0xff] %vm3553, %v3551
  %vm3556 = vcmask 517120
  %3557 = vst.msk [vmem:[%s3 + $0x10] sm:$0x3] %vm3556, %v3552
  // Predicated region
  $region14: #{forward.4} parent=0 // pred_check
    _
  $region15: #{forward.4} parent=0 // pred_check_branch
    %3559 = sbr.rel (0) target = $region17
  $region16: #{forward.4} parent=0 // pred_region
    _
  $region17: #{forward.4} parent=0 // pred_fallthru
    _
  // Predicated region
  $region18: #{forward.4} parent=0 // pred_check
    _
  $region19: #{forward.4} parent=0 // pred_check_branch
    %3561 = sbr.rel (0) target = $region21
  $region20: #{forward.4} parent=0 // pred_region
    _
  $region21: #{forward.4} parent=0 // pred_fallthru
    _

</llo_original>
